<compile_context>
chip_gen: v7x
topology: tpu7x:2x2x1
jax: 0.10.0
libtpu: 0.0.40
codegen_flags: <defaults>
</compile_context>

<pallas_src>
import functools

import numpy as np
import jax
import jax.numpy as jnp
from jax.experimental import pallas as pl
from jax.experimental.pallas import tpu as pltpu


# --------------------------------------------------------------------------
# Single fused kernel: whole M5 forward for one batch sample
# --------------------------------------------------------------------------
def m5_fused_kernel(x_ref, w1_ref, sh1_ref, w2_ref, sh2_ref, w3_ref, sh3_ref,
                    w4_ref, sh4_ref, wfc_ref, bfc_ref, o_ref,
                    buf1, buf2, buf3, buf4, *,
                    l1, p1, l2, p2, l3, p3, l4, p4):
    def pool4(buf, n):
        # MaxPool1d(4) (floor / tail-drop) as max of 4 stride-4 sublane reads.
        a = jnp.maximum(buf[pl.ds(0, n, stride=4), :],
                        buf[pl.ds(1, n, stride=4), :])
        b = jnp.maximum(buf[pl.ds(2, n, stride=4), :],
                        buf[pl.ds(3, n, stride=4), :])
        return jnp.maximum(a, b)

    # ---- layer 1: Conv1d(1,32,k=80,s=16) as ONE im2col matmul (K=80) ----
    # x_ref holds the raw signal reshaped to (L//16, 16); output window i
    # covers rows i..i+4, so im2col = lane-concat of 5 shifted row-slices.
    x_win = jnp.concatenate([x_ref[0, j:j + l1, :] for j in range(5)], axis=1)
    y = jnp.dot(x_win, w1_ref[...], preferred_element_type=jnp.float32)
    buf1[...] = jnp.maximum(y + sh1_ref[...], 0.0)        # folded BN+bias, ReLU
    h = pool4(buf1, p1)                                   # (p1, 32)

    # ---- layers 2-4: Conv1d(k=3) as ONE im2col matmul each ----
    def conv3(h_in, w_ref, sh_ref, l_out, buf):
        xw = jnp.concatenate([h_in[j:j + l_out, :] for j in range(3)], axis=1)
        y = jnp.dot(xw, w_ref[...], preferred_element_type=jnp.float32)
        buf[...] = jnp.maximum(y + sh_ref[...], 0.0)

    conv3(h, w2_ref, sh2_ref, l2, buf2)
    h = pool4(buf2, p2)                                   # (p2, 32)
    conv3(h, w3_ref, sh3_ref, l3, buf3)
    h = pool4(buf3, p3)                                   # (p3, 64)
    conv3(h, w4_ref, sh4_ref, l4, buf4)
    h = pool4(buf4, p4)                                   # (p4, 64)

    # ---- head: avg_pool1d(full length) + Linear + log_softmax ----
    feat = jnp.mean(h, axis=0, keepdims=True)             # (1, 64)
    logits = jnp.dot(feat, wfc_ref[...],
                     preferred_element_type=jnp.float32) + bfc_ref[...]
    m = jnp.max(logits, axis=-1, keepdims=True)
    s = logits - m
    lse = jnp.log(jnp.sum(jnp.exp(s), axis=-1, keepdims=True))
    o_ref[0] = s - lse


def m5_forward_pallas(x, q):
    # x: (B, 1, L)  (PyTorch NCL)
    B, cin, L = x.shape
    assert cin == 1 and L % 16 == 0 and L >= 80
    l1 = (L - 80) // 16 + 1; p1 = l1 // 4
    l2 = p1 - 2;             p2 = l2 // 4
    l3 = p2 - 2;             p3 = l3 // 4
    l4 = p3 - 2;             p4 = l4 // 4
    assert p4 >= 1, "input too short for the 4 pooling stages"

    xr = x.reshape(B, L // 16, 16)
    n_out = q['wfc'].shape[-1]
    kernel = functools.partial(m5_fused_kernel, l1=l1, p1=p1, l2=l2, p2=p2,
                               l3=l3, p3=p3, l4=l4, p4=p4)

    def const_spec(arr):
        nd = arr.ndim
        return pl.BlockSpec(tuple(arr.shape), lambda b, _nd=nd: (0,) * _nd)

    weights = (q['w1'], q['sh1'], q['w2'], q['sh2'], q['w3'], q['sh3'],
               q['w4'], q['sh4'], q['wfc'], q['bfc'])

    return pl.pallas_call(
        kernel,
        out_shape=jax.ShapeDtypeStruct((B, 1, n_out), jnp.float32),
        grid=(B,),
        in_specs=[pl.BlockSpec((1, L // 16, 16), lambda b: (b, 0, 0))]
                 + [const_spec(w) for w in weights],
        out_specs=pl.BlockSpec((1, 1, n_out), lambda b: (b, 0, 0)),
        scratch_shapes=[
            pltpu.VMEM((l1, q['w1'].shape[-1]), jnp.float32),
            pltpu.VMEM((l2, q['w2'].shape[-1]), jnp.float32),
            pltpu.VMEM((l3, q['w3'].shape[-1]), jnp.float32),
            pltpu.VMEM((l4, q['w4'].shape[-1]), jnp.float32),
        ],
        compiler_params=pltpu.CompilerParams(
            dimension_semantics=("parallel",)),
    )(xr, *weights)


# --------------------------------------------------------------------------
# One-time parameter prep (hoisted out of the forward): im2col weight layout,
# BN folded into the weights (scale) + a per-channel shift, fc transposed.
# --------------------------------------------------------------------------
def prepare_params(p, eps=1e-5):
    def fold(w_mat, b, g, beta, mu, var):
        scale = g / jnp.sqrt(var + eps)
        shift = (b - mu) * scale + beta
        return w_mat * scale[None, :], shift.reshape(1, -1)

    def conv3_mat(w):                 # (Cout, Cin, 3) -> (3*Cin, Cout)
        cout, cin, k = w.shape
        return jnp.transpose(w, (2, 1, 0)).reshape(k * cin, cout)

    q = {}
    w1 = jnp.transpose(p['w1'][:, 0, :], (1, 0))          # (80, 32)
    q['w1'], q['sh1'] = fold(w1, p['b1'], p['bn1_gamma'], p['bn1_beta'],
                             p['bn1_mean'], p['bn1_var'])
    q['w2'], q['sh2'] = fold(conv3_mat(p['w2']), p['b2'], p['bn2_gamma'],
                             p['bn2_beta'], p['bn2_mean'], p['bn2_var'])
    q['w3'], q['sh3'] = fold(conv3_mat(p['w3']), p['b3'], p['bn3_gamma'],
                             p['bn3_beta'], p['bn3_mean'], p['bn3_var'])
    q['w4'], q['sh4'] = fold(conv3_mat(p['w4']), p['b4'], p['bn4_gamma'],
                             p['bn4_beta'], p['bn4_mean'], p['bn4_var'])
    q['wfc'] = p['wfc'].T                                  # (64, 35)
    q['bfc'] = p['bfc'].reshape(1, -1)
    return q


# --------------------------------------------------------------------------
# Parameter init (deterministic, PyTorch-like uniform init)
# --------------------------------------------------------------------------
def init_params(key, n_input=1, n_output=35, n_channel=32):
    ks = jax.random.split(key, 10)

    def u(k, shape, fan_in):
        b = 1.0 / np.sqrt(fan_in)
        return jax.random.uniform(k, shape, jnp.float32, -b, b)

    p = {}
    p['w1'] = u(ks[0], (n_channel, n_input, 80), n_input * 80)
    p['b1'] = u(ks[1], (n_channel,), n_input * 80)
    p['w2'] = u(ks[2], (n_channel, n_channel, 3), n_channel * 3)
    p['b2'] = u(ks[3], (n_channel,), n_channel * 3)
    p['w3'] = u(ks[4], (2 * n_channel, n_channel, 3), n_channel * 3)
    p['b3'] = u(ks[5], (2 * n_channel,), n_channel * 3)
    p['w4'] = u(ks[6], (2 * n_channel, 2 * n_channel, 3), 2 * n_channel * 3)
    p['b4'] = u(ks[7], (2 * n_channel,), 2 * n_channel * 3)
    p['wfc'] = u(ks[8], (n_output, 2 * n_channel), 2 * n_channel)
    p['bfc'] = u(ks[9], (n_output,), 2 * n_channel)
    for i, c in zip(range(1, 5), (n_channel, n_channel, 2 * n_channel, 2 * n_channel)):
        p[f'bn{i}_gamma'] = jnp.ones((c,), jnp.float32)
        p[f'bn{i}_beta'] = jnp.zeros((c,), jnp.float32)
        p[f'bn{i}_mean'] = jnp.zeros((c,), jnp.float32)
        p[f'bn{i}_var'] = jnp.ones((c,), jnp.float32)
    return p


# --------------------------------------------------------------------------
# Pure-JAX reference (eval-mode BN), for correctness check only
# --------------------------------------------------------------------------
def m5_forward_ref(x, p, eps=1e-5):
    def conv(z, w, b, stride=1):
        y = jax.lax.conv_general_dilated(z, w, (stride,), 'VALID',
                                         dimension_numbers=('NCH', 'OIH', 'NCH'))
        return y + b[None, :, None]

    def bn_relu_pool(z, g, bt, mu, var):
        z = ((z - mu[None, :, None]) / jnp.sqrt(var + eps)[None, :, None]
             * g[None, :, None] + bt[None, :, None])
        z = jnp.maximum(z, 0.0)
        return jax.lax.reduce_window(z, -jnp.inf, jax.lax.max,
                                     (1, 1, 4), (1, 1, 4), 'VALID')

    z = conv(x, p['w1'], p['b1'], 16)
    z = bn_relu_pool(z, p['bn1_gamma'], p['bn1_beta'], p['bn1_mean'], p['bn1_var'])
    z = conv(z, p['w2'], p['b2'])
    z = bn_relu_pool(z, p['bn2_gamma'], p['bn2_beta'], p['bn2_mean'], p['bn2_var'])
    z = conv(z, p['w3'], p['b3'])
    z = bn_relu_pool(z, p['bn3_gamma'], p['bn3_beta'], p['bn3_mean'], p['bn3_var'])
    z = conv(z, p['w4'], p['b4'])
    z = bn_relu_pool(z, p['bn4_gamma'], p['bn4_beta'], p['bn4_mean'], p['bn4_var'])
    z = jnp.mean(z, axis=-1, keepdims=True)            # avg_pool1d(full)
    z = jnp.transpose(z, (0, 2, 1))                    # (B, 1, 64)
    logits = z @ p['wfc'].T + p['bfc']
    return jax.nn.log_softmax(logits, axis=2)


if __name__ == "__main__":
    key = jax.random.PRNGKey(0)
    kx, kp = jax.random.split(key)
    B, L = 2, 8000                                     # smallest clean length for 4 pool stages
    x = jax.random.normal(kx, (B, 1, L), jnp.float32)  # PyTorch NCL input
    params = init_params(kp)

    # weight prep hoisted out of the forward (done once)
    prepped = jax.block_until_ready(prepare_params(params))

    fwd = jax.jit(m5_forward_pallas)
    out = jax.block_until_ready(fwd(x, prepped))
    assert out.shape == (B, 1, 35), out.shape

    ref = m5_forward_ref(x, params)
    np.testing.assert_allclose(np.asarray(out), np.asarray(ref),
                               atol=1e-4, rtol=1e-4)
    print("KERNEL_OK")
</pallas_src>

<mosaic_0001>
module attributes {stable_mosaic.version = 11 : i64} {
  func.func @m5_fused_kernel(%arg0: i32, %arg1: memref<1x500x16xf32, #tpu.memory_space<vmem>>, %arg2: memref<80x32xf32, #tpu.memory_space<vmem>>, %arg3: memref<1x32xf32, #tpu.memory_space<vmem>>, %arg4: memref<96x32xf32, #tpu.memory_space<vmem>>, %arg5: memref<1x32xf32, #tpu.memory_space<vmem>>, %arg6: memref<96x64xf32, #tpu.memory_space<vmem>>, %arg7: memref<1x64xf32, #tpu.memory_space<vmem>>, %arg8: memref<192x64xf32, #tpu.memory_space<vmem>>, %arg9: memref<1x64xf32, #tpu.memory_space<vmem>>, %arg10: memref<64x35xf32, #tpu.memory_space<vmem>>, %arg11: memref<1x35xf32, #tpu.memory_space<vmem>>, %arg12: memref<1x1x35xf32, #tpu.memory_space<vmem>>, %arg13: memref<496x32xf32, #tpu.memory_space<vmem>>, %arg14: memref<122x32xf32, #tpu.memory_space<vmem>>, %arg15: memref<28x64xf32, #tpu.memory_space<vmem>>, %arg16: memref<5x64xf32, #tpu.memory_space<vmem>>) attributes {dimension_semantics = [#tpu.dimension_semantics<parallel>], iteration_bounds = array<i64: 2>, scalar_prefetch = 0 : i64, scratch_operands = 4 : i64, tpu.core_type = #tpu.core_type<tc>, window_params = [{transform_indices = @transform_0, window_bounds = array<i64: 1, 500, 16>}, {pipeline_mode = #tpu.pipeline_mode<synchronous>, transform_indices = @transform_1, window_bounds = array<i64: 80, 32>}, {pipeline_mode = #tpu.pipeline_mode<synchronous>, transform_indices = @transform_2, window_bounds = array<i64: 1, 32>}, {pipeline_mode = #tpu.pipeline_mode<synchronous>, transform_indices = @transform_3, window_bounds = array<i64: 96, 32>}, {pipeline_mode = #tpu.pipeline_mode<synchronous>, transform_indices = @transform_4, window_bounds = array<i64: 1, 32>}, {pipeline_mode = #tpu.pipeline_mode<synchronous>, transform_indices = @transform_5, window_bounds = array<i64: 96, 64>}, {pipeline_mode = #tpu.pipeline_mode<synchronous>, transform_indices = @transform_6, window_bounds = array<i64: 1, 64>}, {pipeline_mode = #tpu.pipeline_mode<synchronous>, transform_indices = @transform_7, window_bounds = array<i64: 192, 64>}, {pipeline_mode = #tpu.pipeline_mode<synchronous>, transform_indices = @transform_8, window_bounds = array<i64: 1, 64>}, {pipeline_mode = #tpu.pipeline_mode<synchronous>, transform_indices = @transform_9, window_bounds = array<i64: 64, 35>}, {pipeline_mode = #tpu.pipeline_mode<synchronous>, transform_indices = @transform_10, window_bounds = array<i64: 1, 35>}, {transform_indices = @transform_11, window_bounds = array<i64: 1, 1, 35>}]} {
    %c0 = arith.constant 0 : index
    %c0_0 = arith.constant 0 : index
    %c0_1 = arith.constant 0 : index
    %0 = vector.load %arg1[%c0, %c0_0, %c0_1] : memref<1x500x16xf32, #tpu.memory_space<vmem>>, vector<1x496x16xf32>
    %1 = vector.shape_cast %0 : vector<1x496x16xf32> to vector<496x16xf32>
    %c0_2 = arith.constant 0 : index
    %c1 = arith.constant 1 : index
    %c0_3 = arith.constant 0 : index
    %2 = vector.load %arg1[%c0_2, %c1, %c0_3] : memref<1x500x16xf32, #tpu.memory_space<vmem>>, vector<1x496x16xf32>
    %3 = vector.shape_cast %2 : vector<1x496x16xf32> to vector<496x16xf32>
    %c0_4 = arith.constant 0 : index
    %c2 = arith.constant 2 : index
    %c0_5 = arith.constant 0 : index
    %4 = vector.load %arg1[%c0_4, %c2, %c0_5] : memref<1x500x16xf32, #tpu.memory_space<vmem>>, vector<1x496x16xf32>
    %5 = vector.shape_cast %4 : vector<1x496x16xf32> to vector<496x16xf32>
    %c0_6 = arith.constant 0 : index
    %c3 = arith.constant 3 : index
    %c0_7 = arith.constant 0 : index
    %6 = vector.load %arg1[%c0_6, %c3, %c0_7] : memref<1x500x16xf32, #tpu.memory_space<vmem>>, vector<1x496x16xf32>
    %7 = vector.shape_cast %6 : vector<1x496x16xf32> to vector<496x16xf32>
    %c0_8 = arith.constant 0 : index
    %c4 = arith.constant 4 : index
    %c0_9 = arith.constant 0 : index
    %8 = vector.load %arg1[%c0_8, %c4, %c0_9] : memref<1x500x16xf32, #tpu.memory_space<vmem>>, vector<1x496x16xf32>
    %9 = vector.shape_cast %8 : vector<1x496x16xf32> to vector<496x16xf32>
    %10 = tpu.concatenate %1, %3, %5, %7, %9 in 1 : vector<496x16xf32>, vector<496x16xf32>, vector<496x16xf32>, vector<496x16xf32>, vector<496x16xf32> -> vector<496x80xf32>
    %c0_10 = arith.constant 0 : index
    %c0_11 = arith.constant 0 : index
    %11 = vector.load %arg2[%c0_10, %c0_11] : memref<80x32xf32, #tpu.memory_space<vmem>>, vector<80x32xf32>
    %cst = arith.constant dense<0.000000e+00> : vector<496x32xf32>
    %12 = tpu.matmul %10, %11, %cst {dimension_numbers = #tpu.dot_dimension_numbers<[1], [0], [0], [1], [0, 0, 1, 1], [], []>} : vector<496x80xf32>, vector<80x32xf32>, vector<496x32xf32> -> vector<496x32xf32>
    %c0_12 = arith.constant 0 : index
    %c0_13 = arith.constant 0 : index
    %13 = vector.load %arg3[%c0_12, %c0_13] : memref<1x32xf32, #tpu.memory_space<vmem>>, vector<1x32xf32>
    %14 = vector.broadcast %13 : vector<1x32xf32> to vector<496x32xf32>
    %15 = arith.addf %12, %14 : vector<496x32xf32>
    %cst_14 = arith.constant 0.000000e+00 : f32
    %16 = vector.broadcast %cst_14 : f32 to vector<496x32xf32>
    %17 = arith.maximumf %15, %16 : vector<496x32xf32>
    %c0_15 = arith.constant 0 : index
    %c0_16 = arith.constant 0 : index
    %18 = vector.load %arg13[%c0_15, %c0_16] : memref<496x32xf32, #tpu.memory_space<vmem>>, vector<496x32xf32>
    tpu.vector_store %arg13[%c0_15, %c0_16], %17 {strides = array<i32>} : memref<496x32xf32, #tpu.memory_space<vmem>>, vector<496x32xf32>,
    %c0_17 = arith.constant 0 : index
    %c0_18 = arith.constant 0 : index
    %19 = tpu.strided_load %arg13[%c0_17, %c0_18] {strides = array<i32: 4, 1>} : memref<496x32xf32, #tpu.memory_space<vmem>>, vector<124x32xf32>
    %c1_19 = arith.constant 1 : index
    %c0_20 = arith.constant 0 : index
    %20 = tpu.strided_load %arg13[%c1_19, %c0_20] {strides = array<i32: 4, 1>} : memref<496x32xf32, #tpu.memory_space<vmem>>, vector<124x32xf32>
    %21 = arith.maximumf %19, %20 : vector<124x32xf32>
    %c2_21 = arith.constant 2 : index
    %c0_22 = arith.constant 0 : index
    %22 = tpu.strided_load %arg13[%c2_21, %c0_22] {strides = array<i32: 4, 1>} : memref<496x32xf32, #tpu.memory_space<vmem>>, vector<124x32xf32>
    %c3_23 = arith.constant 3 : index
    %c0_24 = arith.constant 0 : index
    %23 = tpu.strided_load %arg13[%c3_23, %c0_24] {strides = array<i32: 4, 1>} : memref<496x32xf32, #tpu.memory_space<vmem>>, vector<124x32xf32>
    %24 = arith.maximumf %22, %23 : vector<124x32xf32>
    %25 = arith.maximumf %21, %24 : vector<124x32xf32>
    %26 = vector.extract_strided_slice %25 {offsets = [0, 0], sizes = [122, 32], strides = [1, 1]} : vector<124x32xf32> to vector<122x32xf32>
    %27 = vector.extract_strided_slice %25 {offsets = [1, 0], sizes = [122, 32], strides = [1, 1]} : vector<124x32xf32> to vector<122x32xf32>
    %28 = vector.extract_strided_slice %25 {offsets = [2, 0], sizes = [122, 32], strides = [1, 1]} : vector<124x32xf32> to vector<122x32xf32>
    %29 = tpu.concatenate %26, %27, %28 in 1 : vector<122x32xf32>, vector<122x32xf32>, vector<122x32xf32> -> vector<122x96xf32>
    %c0_25 = arith.constant 0 : index
    %c0_26 = arith.constant 0 : index
    %30 = vector.load %arg4[%c0_25, %c0_26] : memref<96x32xf32, #tpu.memory_space<vmem>>, vector<96x32xf32>
    %cst_27 = arith.constant dense<0.000000e+00> : vector<122x32xf32>
    %31 = tpu.matmul %29, %30, %cst_27 {dimension_numbers = #tpu.dot_dimension_numbers<[1], [0], [0], [1], [0, 0, 1, 1], [], []>} : vector<122x96xf32>, vector<96x32xf32>, vector<122x32xf32> -> vector<122x32xf32>
    %c0_28 = arith.constant 0 : index
    %c0_29 = arith.constant 0 : index
    %32 = vector.load %arg5[%c0_28, %c0_29] : memref<1x32xf32, #tpu.memory_space<vmem>>, vector<1x32xf32>
    %33 = vector.broadcast %32 : vector<1x32xf32> to vector<122x32xf32>
    %34 = arith.addf %31, %33 : vector<122x32xf32>
    %cst_30 = arith.constant 0.000000e+00 : f32
    %35 = vector.broadcast %cst_30 : f32 to vector<122x32xf32>
    %36 = arith.maximumf %34, %35 : vector<122x32xf32>
    %c0_31 = arith.constant 0 : index
    %c0_32 = arith.constant 0 : index
    %37 = vector.load %arg14[%c0_31, %c0_32] : memref<122x32xf32, #tpu.memory_space<vmem>>, vector<122x32xf32>
    tpu.vector_store %arg14[%c0_31, %c0_32], %36 {strides = array<i32>} : memref<122x32xf32, #tpu.memory_space<vmem>>, vector<122x32xf32>,
    %c0_33 = arith.constant 0 : index
    %c0_34 = arith.constant 0 : index
    %38 = tpu.strided_load %arg14[%c0_33, %c0_34] {strides = array<i32: 4, 1>} : memref<122x32xf32, #tpu.memory_space<vmem>>, vector<30x32xf32>
    %c1_35 = arith.constant 1 : index
    %c0_36 = arith.constant 0 : index
    %39 = tpu.strided_load %arg14[%c1_35, %c0_36] {strides = array<i32: 4, 1>} : memref<122x32xf32, #tpu.memory_space<vmem>>, vector<30x32xf32>
    %40 = arith.maximumf %38, %39 : vector<30x32xf32>
    %c2_37 = arith.constant 2 : index
    %c0_38 = arith.constant 0 : index
    %41 = tpu.strided_load %arg14[%c2_37, %c0_38] {strides = array<i32: 4, 1>} : memref<122x32xf32, #tpu.memory_space<vmem>>, vector<30x32xf32>
    %c3_39 = arith.constant 3 : index
    %c0_40 = arith.constant 0 : index
    %42 = tpu.strided_load %arg14[%c3_39, %c0_40] {strides = array<i32: 4, 1>} : memref<122x32xf32, #tpu.memory_space<vmem>>, vector<30x32xf32>
    %43 = arith.maximumf %41, %42 : vector<30x32xf32>
    %44 = arith.maximumf %40, %43 : vector<30x32xf32>
    %45 = vector.extract_strided_slice %44 {offsets = [0, 0], sizes = [28, 32], strides = [1, 1]} : vector<30x32xf32> to vector<28x32xf32>
    %46 = vector.extract_strided_slice %44 {offsets = [1, 0], sizes = [28, 32], strides = [1, 1]} : vector<30x32xf32> to vector<28x32xf32>
    %47 = vector.extract_strided_slice %44 {offsets = [2, 0], sizes = [28, 32], strides = [1, 1]} : vector<30x32xf32> to vector<28x32xf32>
    %48 = tpu.concatenate %45, %46, %47 in 1 : vector<28x32xf32>, vector<28x32xf32>, vector<28x32xf32> -> vector<28x96xf32>
    %c0_41 = arith.constant 0 : index
    %c0_42 = arith.constant 0 : index
    %49 = vector.load %arg6[%c0_41, %c0_42] : memref<96x64xf32, #tpu.memory_space<vmem>>, vector<96x64xf32>
    %cst_43 = arith.constant dense<0.000000e+00> : vector<28x64xf32>
    %50 = tpu.matmul %48, %49, %cst_43 {dimension_numbers = #tpu.dot_dimension_numbers<[1], [0], [0], [1], [0, 0, 1, 1], [], []>} : vector<28x96xf32>, vector<96x64xf32>, vector<28x64xf32> -> vector<28x64xf32>
    %c0_44 = arith.constant 0 : index
    %c0_45 = arith.constant 0 : index
    %51 = vector.load %arg7[%c0_44, %c0_45] : memref<1x64xf32, #tpu.memory_space<vmem>>, vector<1x64xf32>
    %52 = vector.broadcast %51 : vector<1x64xf32> to vector<28x64xf32>
    %53 = arith.addf %50, %52 : vector<28x64xf32>
    %cst_46 = arith.constant 0.000000e+00 : f32
    %54 = vector.broadcast %cst_46 : f32 to vector<28x64xf32>
    %55 = arith.maximumf %53, %54 : vector<28x64xf32>
    %c0_47 = arith.constant 0 : index
    %c0_48 = arith.constant 0 : index
    %56 = vector.load %arg15[%c0_47, %c0_48] : memref<28x64xf32, #tpu.memory_space<vmem>>, vector<28x64xf32>
    tpu.vector_store %arg15[%c0_47, %c0_48], %55 {strides = array<i32>} : memref<28x64xf32, #tpu.memory_space<vmem>>, vector<28x64xf32>,
    %c0_49 = arith.constant 0 : index
    %c0_50 = arith.constant 0 : index
    %57 = tpu.strided_load %arg15[%c0_49, %c0_50] {strides = array<i32: 4, 1>} : memref<28x64xf32, #tpu.memory_space<vmem>>, vector<7x64xf32>
    %c1_51 = arith.constant 1 : index
    %c0_52 = arith.constant 0 : index
    %58 = tpu.strided_load %arg15[%c1_51, %c0_52] {strides = array<i32: 4, 1>} : memref<28x64xf32, #tpu.memory_space<vmem>>, vector<7x64xf32>
    %59 = arith.maximumf %57, %58 : vector<7x64xf32>
    %c2_53 = arith.constant 2 : index
    %c0_54 = arith.constant 0 : index
    %60 = tpu.strided_load %arg15[%c2_53, %c0_54] {strides = array<i32: 4, 1>} : memref<28x64xf32, #tpu.memory_space<vmem>>, vector<7x64xf32>
    %c3_55 = arith.constant 3 : index
    %c0_56 = arith.constant 0 : index
    %61 = tpu.strided_load %arg15[%c3_55, %c0_56] {strides = array<i32: 4, 1>} : memref<28x64xf32, #tpu.memory_space<vmem>>, vector<7x64xf32>
    %62 = arith.maximumf %60, %61 : vector<7x64xf32>
    %63 = arith.maximumf %59, %62 : vector<7x64xf32>
    %64 = vector.extract_strided_slice %63 {offsets = [0, 0], sizes = [5, 64], strides = [1, 1]} : vector<7x64xf32> to vector<5x64xf32>
    %65 = vector.extract_strided_slice %63 {offsets = [1, 0], sizes = [5, 64], strides = [1, 1]} : vector<7x64xf32> to vector<5x64xf32>
    %66 = vector.extract_strided_slice %63 {offsets = [2, 0], sizes = [5, 64], strides = [1, 1]} : vector<7x64xf32> to vector<5x64xf32>
    %67 = tpu.concatenate %64, %65, %66 in 1 : vector<5x64xf32>, vector<5x64xf32>, vector<5x64xf32> -> vector<5x192xf32>
    %c0_57 = arith.constant 0 : index
    %c0_58 = arith.constant 0 : index
    %68 = vector.load %arg8[%c0_57, %c0_58] : memref<192x64xf32, #tpu.memory_space<vmem>>, vector<192x64xf32>
    %cst_59 = arith.constant dense<0.000000e+00> : vector<5x64xf32>
    %69 = tpu.matmul %67, %68, %cst_59 {dimension_numbers = #tpu.dot_dimension_numbers<[1], [0], [0], [1], [0, 0, 1, 1], [], []>} : vector<5x192xf32>, vector<192x64xf32>, vector<5x64xf32> -> vector<5x64xf32>
    %c0_60 = arith.constant 0 : index
    %c0_61 = arith.constant 0 : index
    %70 = vector.load %arg9[%c0_60, %c0_61] : memref<1x64xf32, #tpu.memory_space<vmem>>, vector<1x64xf32>
    %71 = vector.broadcast %70 : vector<1x64xf32> to vector<5x64xf32>
    %72 = arith.addf %69, %71 : vector<5x64xf32>
    %cst_62 = arith.constant 0.000000e+00 : f32
    %73 = vector.broadcast %cst_62 : f32 to vector<5x64xf32>
    %74 = arith.maximumf %72, %73 : vector<5x64xf32>
    %c0_63 = arith.constant 0 : index
    %c0_64 = arith.constant 0 : index
    %75 = vector.load %arg16[%c0_63, %c0_64] : memref<5x64xf32, #tpu.memory_space<vmem>>, vector<5x64xf32>
    tpu.vector_store %arg16[%c0_63, %c0_64], %74 {strides = array<i32>} : memref<5x64xf32, #tpu.memory_space<vmem>>, vector<5x64xf32>,
    %c0_65 = arith.constant 0 : index
    %c0_66 = arith.constant 0 : index
    %76 = tpu.strided_load %arg16[%c0_65, %c0_66] {strides = array<i32: 4, 1>} : memref<5x64xf32, #tpu.memory_space<vmem>>, vector<1x64xf32>
    %c1_67 = arith.constant 1 : index
    %c0_68 = arith.constant 0 : index
    %77 = tpu.strided_load %arg16[%c1_67, %c0_68] {strides = array<i32: 4, 1>} : memref<5x64xf32, #tpu.memory_space<vmem>>, vector<1x64xf32>
    %78 = arith.maximumf %76, %77 : vector<1x64xf32>
    %c2_69 = arith.constant 2 : index
    %c0_70 = arith.constant 0 : index
    %79 = tpu.strided_load %arg16[%c2_69, %c0_70] {strides = array<i32: 4, 1>} : memref<5x64xf32, #tpu.memory_space<vmem>>, vector<1x64xf32>
    %c3_71 = arith.constant 3 : index
    %c0_72 = arith.constant 0 : index
    %80 = tpu.strided_load %arg16[%c3_71, %c0_72] {strides = array<i32: 4, 1>} : memref<5x64xf32, #tpu.memory_space<vmem>>, vector<1x64xf32>
    %81 = arith.maximumf %79, %80 : vector<1x64xf32>
    %82 = arith.maximumf %78, %81 : vector<1x64xf32>
    %cst_73 = arith.constant dense<0.000000e+00> : vector<64xf32>
    %83 = vector.multi_reduction <add>, %82, %cst_73 [0] : vector<1x64xf32> to vector<64xf32>
    %84 = vector.shape_cast %83 : vector<64xf32> to vector<1x64xf32>
    %cst_74 = arith.constant 1.000000e+00 : f32
    %85 = vector.broadcast %cst_74 : f32 to vector<1x64xf32>
    %86 = arith.divf %84, %85 : vector<1x64xf32>
    %c0_75 = arith.constant 0 : index
    %c0_76 = arith.constant 0 : index
    %87 = vector.load %arg10[%c0_75, %c0_76] : memref<64x35xf32, #tpu.memory_space<vmem>>, vector<64x35xf32>
    %cst_77 = arith.constant dense<0.000000e+00> : vector<1x35xf32>
    %88 = tpu.matmul %86, %87, %cst_77 {dimension_numbers = #tpu.dot_dimension_numbers<[1], [0], [0], [1], [0, 0, 1, 1], [], []>} : vector<1x64xf32>, vector<64x35xf32>, vector<1x35xf32> -> vector<1x35xf32>
    %c0_78 = arith.constant 0 : index
    %c0_79 = arith.constant 0 : index
    %89 = vector.load %arg11[%c0_78, %c0_79] : memref<1x35xf32, #tpu.memory_space<vmem>>, vector<1x35xf32>
    %90 = arith.addf %88, %89 : vector<1x35xf32>
    %cst_80 = arith.constant dense<0xFF800000> : vector<1xf32>
    %91 = vector.multi_reduction <maximumf>, %90, %cst_80 [1] : vector<1x35xf32> to vector<1xf32>
    %92 = vector.shape_cast %91 : vector<1xf32> to vector<1x1xf32>
    %93 = vector.broadcast %92 : vector<1x1xf32> to vector<1x35xf32>
    %94 = arith.subf %90, %93 : vector<1x35xf32>
    %95 = math.exp %94 : vector<1x35xf32>
    %cst_81 = arith.constant dense<0.000000e+00> : vector<1xf32>
    %96 = vector.multi_reduction <add>, %95, %cst_81 [1] : vector<1x35xf32> to vector<1xf32>
    %97 = vector.shape_cast %96 : vector<1xf32> to vector<1x1xf32>
    %98 = math.log %97 : vector<1x1xf32>
    %99 = vector.broadcast %98 : vector<1x1xf32> to vector<1x35xf32>
    %100 = arith.subf %94, %99 : vector<1x35xf32>
    %c0_82 = arith.constant 0 : index
    %c0_83 = arith.constant 0 : index
    %c0_84 = arith.constant 0 : index
    %101 = vector.load %arg12[%c0_82, %c0_83, %c0_84] : memref<1x1x35xf32, #tpu.memory_space<vmem>>, vector<1x1x35xf32>
    %102 = vector.shape_cast %101 : vector<1x1x35xf32> to vector<1x35xf32>
    %103 = vector.shape_cast %100 : vector<1x35xf32> to vector<1x1x35xf32>
    tpu.vector_store %arg12[%c0_82, %c0_83, %c0_84], %103 {strides = array<i32>} : memref<1x1x35xf32, #tpu.memory_space<vmem>>, vector<1x1x35xf32>,
    return
  }
  func.func @transform_0(%arg0: i32) -> (i32, i32, i32) {
    %c0_i32 = arith.constant 0 : i32
    %c0_i32_0 = arith.constant 0 : i32
    %c0_i32_1 = arith.constant 0 : i32
    return %arg0, %c0_i32, %c0_i32_0 : i32, i32, i32
  }
  func.func @transform_1(%arg0: i32) -> (i32, i32) {
    %c0_i32 = arith.constant 0 : i32
    %c0_i32_0 = arith.constant 0 : i32
    %c0_i32_1 = arith.constant 0 : i32
    return %c0_i32, %c0_i32_0 : i32, i32
  }
  func.func @transform_2(%arg0: i32) -> (i32, i32) {
    %c0_i32 = arith.constant 0 : i32
    %c0_i32_0 = arith.constant 0 : i32
    %c0_i32_1 = arith.constant 0 : i32
    return %c0_i32, %c0_i32_0 : i32, i32
  }
  func.func @transform_3(%arg0: i32) -> (i32, i32) {
    %c0_i32 = arith.constant 0 : i32
    %c0_i32_0 = arith.constant 0 : i32
    %c0_i32_1 = arith.constant 0 : i32
    return %c0_i32, %c0_i32_0 : i32, i32
  }
  func.func @transform_4(%arg0: i32) -> (i32, i32) {
    %c0_i32 = arith.constant 0 : i32
    %c0_i32_0 = arith.constant 0 : i32
    %c0_i32_1 = arith.constant 0 : i32
    return %c0_i32, %c0_i32_0 : i32, i32
  }
  func.func @transform_5(%arg0: i32) -> (i32, i32) {
    %c0_i32 = arith.constant 0 : i32
    %c0_i32_0 = arith.constant 0 : i32
    %c0_i32_1 = arith.constant 0 : i32
    return %c0_i32, %c0_i32_0 : i32, i32
  }
  func.func @transform_6(%arg0: i32) -> (i32, i32) {
    %c0_i32 = arith.constant 0 : i32
    %c0_i32_0 = arith.constant 0 : i32
    %c0_i32_1 = arith.constant 0 : i32
    return %c0_i32, %c0_i32_0 : i32, i32
  }
  func.func @transform_7(%arg0: i32) -> (i32, i32) {
    %c0_i32 = arith.constant 0 : i32
    %c0_i32_0 = arith.constant 0 : i32
    %c0_i32_1 = arith.constant 0 : i32
    return %c0_i32, %c0_i32_0 : i32, i32
  }
  func.func @transform_8(%arg0: i32) -> (i32, i32) {
    %c0_i32 = arith.constant 0 : i32
    %c0_i32_0 = arith.constant 0 : i32
    %c0_i32_1 = arith.constant 0 : i32
    return %c0_i32, %c0_i32_0 : i32, i32
  }
  func.func @transform_9(%arg0: i32) -> (i32, i32) {
    %c0_i32 = arith.constant 0 : i32
    %c0_i32_0 = arith.constant 0 : i32
    %c0_i32_1 = arith.constant 0 : i32
    return %c0_i32, %c0_i32_0 : i32, i32
  }
  func.func @transform_10(%arg0: i32) -> (i32, i32) {
    %c0_i32 = arith.constant 0 : i32
    %c0_i32_0 = arith.constant 0 : i32
    %c0_i32_1 = arith.constant 0 : i32
    return %c0_i32, %c0_i32_0 : i32, i32
  }
  func.func @transform_11(%arg0: i32) -> (i32, i32, i32) {
    %c0_i32 = arith.constant 0 : i32
    %c0_i32_0 = arith.constant 0 : i32
    %c0_i32_1 = arith.constant 0 : i32
    return %arg0, %c0_i32, %c0_i32_0 : i32, i32, i32
  }
}

</mosaic_0001>

<llo_original>
// kernel: m5_forward_pallas.1
$region0: #{m5_forward_pallas.1}
  #allocation0 [shape = 'u32[]', space=smem, size = 0x4, offset = 0x4, fixed_abs, tag = 'smem constant byte address 0x4 - core index']
  #allocation1 [shape = 'u32[144,128]{1,0:T(1,128)}', space=vmem, size = 0x12000, scoped, tag = 'internal scratch']
  #allocation2 [shape = 'f32[496,32]{1,0:T(8,128)}', space=vmem, size = 0x3e000, scoped, tag = 'scratch operand']
  #allocation3 [shape = 'f32[122,32]{1,0:T(8,128)}', space=vmem, size = 0x10000, scoped, tag = 'scratch operand']
  #allocation4 [shape = 'f32[28,64]{1,0:T(8,128)}', space=vmem, size = 0x4000, scoped, tag = 'scratch operand']
  #allocation5 [shape = 'f32[5,64]{1,0:T(8,128)}', space=vmem, size = 0x1000, scoped, tag = 'scratch operand']
  %s0 = inlined_call_operand.vmem [shape: f32[2,500,16], index: 0, kind: input, shape index: {}]
  %s1 = inlined_call_operand.vmem [shape: f32[80,32], index: 1, kind: input, shape index: {}]
  %s2 = inlined_call_operand.vmem [shape: f32[1,32], index: 2, kind: input, shape index: {}]
  %s3 = inlined_call_operand.vmem [shape: f32[96,32], index: 3, kind: input, shape index: {}]
  %s4 = inlined_call_operand.vmem [shape: f32[1,32], index: 4, kind: input, shape index: {}]
  %s5 = inlined_call_operand.vmem [shape: f32[96,64], index: 5, kind: input, shape index: {}]
  %s6 = inlined_call_operand.vmem [shape: f32[1,64], index: 6, kind: input, shape index: {}]
  %s7 = inlined_call_operand.vmem [shape: f32[192,64], index: 7, kind: input, shape index: {}]
  %s8 = inlined_call_operand.vmem [shape: f32[1,64], index: 8, kind: input, shape index: {}]
  %s9 = inlined_call_operand.vmem [shape: f32[64,35], index: 9, kind: input, shape index: {}]
  %s10 = inlined_call_operand.vmem [shape: f32[1,35], index: 10, kind: input, shape index: {}]
  %s11 = inlined_call_operand.hbm [shape: f32[2,1,35], index: 11, kind: output, shape index: {}]
  %s12 = sld [smem:[#allocation0]]
  $region77: #{m5_forward_pallas.1} parent=0
    _
  %s14 = ssub.s32 1, %s12
  %s15 = scalar_select 0, %s14, %s12
  $region1: #{m5_forward_pallas.1} parent=0
    #allocation6 [shape = 'u8[1024]{0}', space=vmem, size = 0x400, scoped, tag = 'output window, operand 0']
    #allocation7 [shape = 's32[2]{0}', space=sflag, size = 0x8, scoped, tag = 'scoped memory for m5_forward_pallas.1']
    %16 = vsyncpa [#allocation7], 0
    %s17 = scalar_lea.sflag [#allocation7], 1
    %18 = vsyncpa %s17, 0
    loop: start=0, step=1, limit=4
    $region2: #{m5_forward_pallas.1} parent=1 // loop_pre_header
      _
    $region3: #{m5_forward_pallas.1} parent=1 // loop_header
      %s20 = sphi 0, %s24
      %p21 = scmp.ge.s32.totalorder %s20, 4
      %s30 = sphi 0, %s32
      %s33 = sphi 0, %s30
      %s34 = sphi 0, %s33
      %s50 = sphi 0, %s34
      %s54 = sphi 0, %s54
      %s56 = sphi 0, %s54
      %s57 = sphi 0, %s56
      %s71 = sphi 0, %s57
      %s75 = sphi 0, %s75
      %s77 = sphi 0, %s75
      %s78 = sphi 0, %s77
      %s92 = sphi 0, %s78
      %s96 = sphi 0, %s96
      %s98 = sphi 0, %s96
      %s99 = sphi 0, %s98
      %s113 = sphi 0, %s99
      %s117 = sphi 0, %s117
      %s119 = sphi 0, %s117
      %s120 = sphi 0, %s119
      %s134 = sphi 0, %s120
      %s138 = sphi 0, %s138
      %s140 = sphi 0, %s138
      %s141 = sphi 0, %s140
      %s155 = sphi 0, %s141
      %s159 = sphi 0, %s159
      %s161 = sphi 0, %s159
      %s162 = sphi 0, %s161
      %s176 = sphi 0, %s162
      %s180 = sphi 0, %s180
      %s182 = sphi 0, %s180
      %s183 = sphi 0, %s182
      %s197 = sphi 0, %s183
      %s201 = sphi 0, %s201
      %s203 = sphi 0, %s201
      %s204 = sphi 0, %s203
      %s218 = sphi 0, %s204
      %s222 = sphi 0, %s222
      %s224 = sphi 0, %s222
      %s225 = sphi 0, %s224
      %s239 = sphi 0, %s225
      %s243 = sphi 0, %s243
      %s245 = sphi 0, %s243
      %s246 = sphi 0, %s245
      %s260 = sphi 0, %s246
      %s266 = sphi 0, %s268
      %s269 = sphi 0, %s266
      %s270 = sphi 0, %s269
      %s286 = sphi 0, %s270
    $region4: #{m5_forward_pallas.1} parent=1 // loop_header_branch
      %23 = sbr.rel (%p21) target = $region8
    $region5: #{m5_forward_pallas.1} parent=1 // loop_body
      %s25 = ssub.s32 %s20, 1
      %s26 = ssub.s32 %s20, 2
      %s27 = sadd.s32 %s20, 1
      %s28 = ssub.s32 %s20, %s27
      %p29 = scmp.eq.s32.totalorder %s28, 0
      %s31 = sadd.s32 %s30, 1
      %s32 = scalar_select %p29, %s30, %s31
      %p35 = pneg %p29
      %p36 = scmp.eq.s32.totalorder %s20, 1
      %p37 = por %p35, %p36
      %p38 = scmp.ne.s32.totalorder %s30, %s33
      %p39 = scmp.eq.s32.totalorder %s20, 0
      %p40 = por %p38, %p39
      %p41 = scmp.ne.s32.totalorder %s30, %s33
      %p42 = scmp.eq.s32.totalorder %s25, 1
      %p43 = por %p41, %p42
      %p44 = scmp.ne.s32.totalorder %s33, %s34
      %p45 = scmp.eq.s32.totalorder %s25, 0
      %p46 = por %p44, %p45
      %p47 = scmp.ne.s32.totalorder %s33, %s34
      %p48 = scmp.eq.s32.totalorder %s26, 1
      %p49 = por %p47, %p48
      %p51 = scmp.ne.s32.totalorder %s34, %s50
      %p52 = scmp.eq.s32.totalorder %s26, 0
      %p53 = por %p51, %p52
      %s55 = sadd.s32 %s54, 1
      %p58 = scmp.eq.s32.totalorder %s20, 1
      %p59 = scmp.ne.s32.totalorder %s54, %s56
      %p60 = scmp.eq.s32.totalorder %s20, 0
      %p61 = por %p59, %p60
      %p62 = scmp.ne.s32.totalorder %s54, %s56
      %p63 = scmp.eq.s32.totalorder %s25, 1
      %p64 = por %p62, %p63
      %p65 = scmp.ne.s32.totalorder %s56, %s57
      %p66 = scmp.eq.s32.totalorder %s25, 0
      %p67 = por %p65, %p66
      %p68 = scmp.ne.s32.totalorder %s56, %s57
      %p69 = scmp.eq.s32.totalorder %s26, 1
      %p70 = por %p68, %p69
      %p72 = scmp.ne.s32.totalorder %s57, %s71
      %p73 = scmp.eq.s32.totalorder %s26, 0
      %p74 = por %p72, %p73
      %s76 = sadd.s32 %s75, 1
      %p79 = scmp.eq.s32.totalorder %s20, 1
      %p80 = scmp.ne.s32.totalorder %s75, %s77
      %p81 = scmp.eq.s32.totalorder %s20, 0
      %p82 = por %p80, %p81
      %p83 = scmp.ne.s32.totalorder %s75, %s77
      %p84 = scmp.eq.s32.totalorder %s25, 1
      %p85 = por %p83, %p84
      %p86 = scmp.ne.s32.totalorder %s77, %s78
      %p87 = scmp.eq.s32.totalorder %s25, 0
      %p88 = por %p86, %p87
      %p89 = scmp.ne.s32.totalorder %s77, %s78
      %p90 = scmp.eq.s32.totalorder %s26, 1
      %p91 = por %p89, %p90
      %p93 = scmp.ne.s32.totalorder %s78, %s92
      %p94 = scmp.eq.s32.totalorder %s26, 0
      %p95 = por %p93, %p94
      %s97 = sadd.s32 %s96, 1
      %p100 = scmp.eq.s32.totalorder %s20, 1
      %p101 = scmp.ne.s32.totalorder %s96, %s98
      %p102 = scmp.eq.s32.totalorder %s20, 0
      %p103 = por %p101, %p102
      %p104 = scmp.ne.s32.totalorder %s96, %s98
      %p105 = scmp.eq.s32.totalorder %s25, 1
      %p106 = por %p104, %p105
      %p107 = scmp.ne.s32.totalorder %s98, %s99
      %p108 = scmp.eq.s32.totalorder %s25, 0
      %p109 = por %p107, %p108
      %p110 = scmp.ne.s32.totalorder %s98, %s99
      %p111 = scmp.eq.s32.totalorder %s26, 1
      %p112 = por %p110, %p111
      %p114 = scmp.ne.s32.totalorder %s99, %s113
      %p115 = scmp.eq.s32.totalorder %s26, 0
      %p116 = por %p114, %p115
      %s118 = sadd.s32 %s117, 1
      %p121 = scmp.eq.s32.totalorder %s20, 1
      %p122 = scmp.ne.s32.totalorder %s117, %s119
      %p123 = scmp.eq.s32.totalorder %s20, 0
      %p124 = por %p122, %p123
      %p125 = scmp.ne.s32.totalorder %s117, %s119
      %p126 = scmp.eq.s32.totalorder %s25, 1
      %p127 = por %p125, %p126
      %p128 = scmp.ne.s32.totalorder %s119, %s120
      %p129 = scmp.eq.s32.totalorder %s25, 0
      %p130 = por %p128, %p129
      %p131 = scmp.ne.s32.totalorder %s119, %s120
      %p132 = scmp.eq.s32.totalorder %s26, 1
      %p133 = por %p131, %p132
      %p135 = scmp.ne.s32.totalorder %s120, %s134
      %p136 = scmp.eq.s32.totalorder %s26, 0
      %p137 = por %p135, %p136
      %s139 = sadd.s32 %s138, 1
      %p142 = scmp.eq.s32.totalorder %s20, 1
      %p143 = scmp.ne.s32.totalorder %s138, %s140
      %p144 = scmp.eq.s32.totalorder %s20, 0
      %p145 = por %p143, %p144
      %p146 = scmp.ne.s32.totalorder %s138, %s140
      %p147 = scmp.eq.s32.totalorder %s25, 1
      %p148 = por %p146, %p147
      %p149 = scmp.ne.s32.totalorder %s140, %s141
      %p150 = scmp.eq.s32.totalorder %s25, 0
      %p151 = por %p149, %p150
      %p152 = scmp.ne.s32.totalorder %s140, %s141
      %p153 = scmp.eq.s32.totalorder %s26, 1
      %p154 = por %p152, %p153
      %p156 = scmp.ne.s32.totalorder %s141, %s155
      %p157 = scmp.eq.s32.totalorder %s26, 0
      %p158 = por %p156, %p157
      %s160 = sadd.s32 %s159, 1
      %p163 = scmp.eq.s32.totalorder %s20, 1
      %p164 = scmp.ne.s32.totalorder %s159, %s161
      %p165 = scmp.eq.s32.totalorder %s20, 0
      %p166 = por %p164, %p165
      %p167 = scmp.ne.s32.totalorder %s159, %s161
      %p168 = scmp.eq.s32.totalorder %s25, 1
      %p169 = por %p167, %p168
      %p170 = scmp.ne.s32.totalorder %s161, %s162
      %p171 = scmp.eq.s32.totalorder %s25, 0
      %p172 = por %p170, %p171
      %p173 = scmp.ne.s32.totalorder %s161, %s162
      %p174 = scmp.eq.s32.totalorder %s26, 1
      %p175 = por %p173, %p174
      %p177 = scmp.ne.s32.totalorder %s162, %s176
      %p178 = scmp.eq.s32.totalorder %s26, 0
      %p179 = por %p177, %p178
      %s181 = sadd.s32 %s180, 1
      %p184 = scmp.eq.s32.totalorder %s20, 1
      %p185 = scmp.ne.s32.totalorder %s180, %s182
      %p186 = scmp.eq.s32.totalorder %s20, 0
      %p187 = por %p185, %p186
      %p188 = scmp.ne.s32.totalorder %s180, %s182
      %p189 = scmp.eq.s32.totalorder %s25, 1
      %p190 = por %p188, %p189
      %p191 = scmp.ne.s32.totalorder %s182, %s183
      %p192 = scmp.eq.s32.totalorder %s25, 0
      %p193 = por %p191, %p192
      %p194 = scmp.ne.s32.totalorder %s182, %s183
      %p195 = scmp.eq.s32.totalorder %s26, 1
      %p196 = por %p194, %p195
      %p198 = scmp.ne.s32.totalorder %s183, %s197
      %p199 = scmp.eq.s32.totalorder %s26, 0
      %p200 = por %p198, %p199
      %s202 = sadd.s32 %s201, 1
      %p205 = scmp.eq.s32.totalorder %s20, 1
      %p206 = scmp.ne.s32.totalorder %s201, %s203
      %p207 = scmp.eq.s32.totalorder %s20, 0
      %p208 = por %p206, %p207
      %p209 = scmp.ne.s32.totalorder %s201, %s203
      %p210 = scmp.eq.s32.totalorder %s25, 1
      %p211 = por %p209, %p210
      %p212 = scmp.ne.s32.totalorder %s203, %s204
      %p213 = scmp.eq.s32.totalorder %s25, 0
      %p214 = por %p212, %p213
      %p215 = scmp.ne.s32.totalorder %s203, %s204
      %p216 = scmp.eq.s32.totalorder %s26, 1
      %p217 = por %p215, %p216
      %p219 = scmp.ne.s32.totalorder %s204, %s218
      %p220 = scmp.eq.s32.totalorder %s26, 0
      %p221 = por %p219, %p220
      %s223 = sadd.s32 %s222, 1
      %p226 = scmp.eq.s32.totalorder %s20, 1
      %p227 = scmp.ne.s32.totalorder %s222, %s224
      %p228 = scmp.eq.s32.totalorder %s20, 0
      %p229 = por %p227, %p228
      %p230 = scmp.ne.s32.totalorder %s222, %s224
      %p231 = scmp.eq.s32.totalorder %s25, 1
      %p232 = por %p230, %p231
      %p233 = scmp.ne.s32.totalorder %s224, %s225
      %p234 = scmp.eq.s32.totalorder %s25, 0
      %p235 = por %p233, %p234
      %p236 = scmp.ne.s32.totalorder %s224, %s225
      %p237 = scmp.eq.s32.totalorder %s26, 1
      %p238 = por %p236, %p237
      %p240 = scmp.ne.s32.totalorder %s225, %s239
      %p241 = scmp.eq.s32.totalorder %s26, 0
      %p242 = por %p240, %p241
      %s244 = sadd.s32 %s243, 1
      %p247 = scmp.eq.s32.totalorder %s20, 1
      %p248 = scmp.ne.s32.totalorder %s243, %s245
      %p249 = scmp.eq.s32.totalorder %s20, 0
      %p250 = por %p248, %p249
      %p251 = scmp.ne.s32.totalorder %s243, %s245
      %p252 = scmp.eq.s32.totalorder %s25, 1
      %p253 = por %p251, %p252
      %p254 = scmp.ne.s32.totalorder %s245, %s246
      %p255 = scmp.eq.s32.totalorder %s25, 0
      %p256 = por %p254, %p255
      %p257 = scmp.ne.s32.totalorder %s245, %s246
      %p258 = scmp.eq.s32.totalorder %s26, 1
      %p259 = por %p257, %p258
      %p261 = scmp.ne.s32.totalorder %s246, %s260
      %p262 = scmp.eq.s32.totalorder %s26, 0
      %p263 = por %p261, %p262
      %s264 = ssub.s32 %s20, %s27
      %p265 = scmp.eq.s32.totalorder %s264, 0
      %s267 = sadd.s32 %s266, 1
      %s268 = scalar_select %p265, %s266, %s267
      %p271 = pneg %p265
      %p272 = scmp.eq.s32.totalorder %s20, 1
      %p273 = por %p271, %p272
      %p274 = scmp.ne.s32.totalorder %s266, %s269
      %p275 = scmp.eq.s32.totalorder %s20, 0
      %p276 = por %p274, %p275
      %p277 = scmp.ne.s32.totalorder %s266, %s269
      %p278 = scmp.eq.s32.totalorder %s25, 1
      %p279 = por %p277, %p278
      %p280 = scmp.ne.s32.totalorder %s269, %s270
      %p281 = scmp.eq.s32.totalorder %s25, 0
      %p282 = por %p280, %p281
      %p283 = scmp.ne.s32.totalorder %s269, %s270
      %p284 = scmp.eq.s32.totalorder %s26, 1
      %p285 = por %p283, %p284
      %p287 = scmp.ne.s32.totalorder %s270, %s286
      %p288 = scmp.eq.s32.totalorder %s26, 0
      %p289 = por %p287, %p288
      %p290 = scmp.le.s32.totalorder 1, %s20
      %p291 = scmp.lt.s32.totalorder %s20, 3
      %p292 = pnand %p290, %p291
      %p293 = pneg %p292
      // Predicated region
      $region9: #{m5_forward_pallas.1} parent=5 // pred_check
        _
      $region10: #{m5_forward_pallas.1} parent=5 // pred_check_branch
        %295 = sbr.rel (%p292) target = $region12
      $region11: #{m5_forward_pallas.1} parent=5 // pred_region
        %s296 = ssub.s32 %s20, 1
        // Predicated region
        $region13: #{m5_forward_pallas.1} parent=11 // pred_check
          %p297 = pneg %p67
        $region14: #{m5_forward_pallas.1} parent=11 // pred_check_branch
          %299 = sbr.rel (%p297) target = $region16
        $region15: #{m5_forward_pallas.1} parent=11 // pred_region
          _
        $region16: #{m5_forward_pallas.1} parent=11 // pred_fallthru
          _
        // Predicated region
        $region17: #{m5_forward_pallas.1} parent=11 // pred_check
          %p300 = pneg %p88
        $region18: #{m5_forward_pallas.1} parent=11 // pred_check_branch
          %302 = sbr.rel (%p300) target = $region20
        $region19: #{m5_forward_pallas.1} parent=11 // pred_region
          _
        $region20: #{m5_forward_pallas.1} parent=11 // pred_fallthru
          _
        // Predicated region
        $region21: #{m5_forward_pallas.1} parent=11 // pred_check
          %p303 = pneg %p109
        $region22: #{m5_forward_pallas.1} parent=11 // pred_check_branch
          %305 = sbr.rel (%p303) target = $region24
        $region23: #{m5_forward_pallas.1} parent=11 // pred_region
          _
        $region24: #{m5_forward_pallas.1} parent=11 // pred_fallthru
          _
        // Predicated region
        $region25: #{m5_forward_pallas.1} parent=11 // pred_check
          %p306 = pneg %p130
        $region26: #{m5_forward_pallas.1} parent=11 // pred_check_branch
          %308 = sbr.rel (%p306) target = $region28
        $region27: #{m5_forward_pallas.1} parent=11 // pred_region
          _
        $region28: #{m5_forward_pallas.1} parent=11 // pred_fallthru
          _
        // Predicated region
        $region29: #{m5_forward_pallas.1} parent=11 // pred_check
          %p309 = pneg %p151
        $region30: #{m5_forward_pallas.1} parent=11 // pred_check_branch
          %311 = sbr.rel (%p309) target = $region32
        $region31: #{m5_forward_pallas.1} parent=11 // pred_region
          _
        $region32: #{m5_forward_pallas.1} parent=11 // pred_fallthru
          _
        // Predicated region
        $region33: #{m5_forward_pallas.1} parent=11 // pred_check
          %p312 = pneg %p172
        $region34: #{m5_forward_pallas.1} parent=11 // pred_check_branch
          %314 = sbr.rel (%p312) target = $region36
        $region35: #{m5_forward_pallas.1} parent=11 // pred_region
          _
        $region36: #{m5_forward_pallas.1} parent=11 // pred_fallthru
          _
        // Predicated region
        $region37: #{m5_forward_pallas.1} parent=11 // pred_check
          %p315 = pneg %p193
        $region38: #{m5_forward_pallas.1} parent=11 // pred_check_branch
          %317 = sbr.rel (%p315) target = $region40
        $region39: #{m5_forward_pallas.1} parent=11 // pred_region
          _
        $region40: #{m5_forward_pallas.1} parent=11 // pred_fallthru
          _
        // Predicated region
        $region41: #{m5_forward_pallas.1} parent=11 // pred_check
          %p318 = pneg %p214
        $region42: #{m5_forward_pallas.1} parent=11 // pred_check_branch
          %320 = sbr.rel (%p318) target = $region44
        $region43: #{m5_forward_pallas.1} parent=11 // pred_region
          _
        $region44: #{m5_forward_pallas.1} parent=11 // pred_fallthru
          _
        // Predicated region
        $region45: #{m5_forward_pallas.1} parent=11 // pred_check
          %p321 = pneg %p235
        $region46: #{m5_forward_pallas.1} parent=11 // pred_check_branch
          %323 = sbr.rel (%p321) target = $region48
        $region47: #{m5_forward_pallas.1} parent=11 // pred_region
          _
        $region48: #{m5_forward_pallas.1} parent=11 // pred_fallthru
          _
        // Predicated region
        $region49: #{m5_forward_pallas.1} parent=11 // pred_check
          %p324 = pneg %p256
        $region50: #{m5_forward_pallas.1} parent=11 // pred_check_branch
          %326 = sbr.rel (%p324) target = $region52
        $region51: #{m5_forward_pallas.1} parent=11 // pred_region
          _
        $region52: #{m5_forward_pallas.1} parent=11 // pred_fallthru
          _
      $region12: #{m5_forward_pallas.1} parent=5 // pred_fallthru
        _
      %p327 = scmp.lt.s32.totalorder %s20, 2
      // Predicated region
      $region53: #{m5_forward_pallas.1} parent=5 // pred_check
        %p328 = pneg %p327
      $region54: #{m5_forward_pallas.1} parent=5 // pred_check_branch
        %330 = sbr.rel (%p328) target = $region56
      $region55: #{m5_forward_pallas.1} parent=5 // pred_region
        // Predicated region
        $region57: #{m5_forward_pallas.1} parent=55 // pred_check
          %p331 = pneg %p40
        $region58: #{m5_forward_pallas.1} parent=55 // pred_check_branch
          %333 = sbr.rel (%p331) target = $region60
        $region59: #{m5_forward_pallas.1} parent=55 // pred_region
          %p334 = scmp.lt.s32.totalorder %s20, 1
          %s335 = scalar_select %p334, %s20, 1
          %s336 = smul.addr %s335, 63
          %s337 = smul.addr %s336, 8
          %s338 = scalar_lea.vmem %s0, %s337
        $region60: #{m5_forward_pallas.1} parent=55 // pred_fallthru
          _
      $region56: #{m5_forward_pallas.1} parent=5 // pred_fallthru
        _
      %p339 = scmp.le.s32.totalorder 1, %s20
      %p340 = scmp.lt.s32.totalorder %s20, 3
      %p341 = pnand %p339, %p340
      %p342 = pneg %p341
      // Predicated region
      $region61: #{m5_forward_pallas.1} parent=5 // pred_check
        _
      $region62: #{m5_forward_pallas.1} parent=5 // pred_check_branch
        %344 = sbr.rel (%p341) target = $region64
      $region63: #{m5_forward_pallas.1} parent=5 // pred_region
        %s345 = ssub.s32 %s20, 1
        %p346 = scmp.lt.s32.totalorder %s25, 1
        %s347 = scalar_select %p346, %s25, 1
        %s348 = smul.addr %s347, 63
        %s349 = smul.addr %s348, 8
        %s350 = scalar_lea.vmem %s0, %s349
        %p351 = pneg %p46
        %p352 = pneg %p43
        %p353 = pneg %p67
        %p354 = pneg %p64
        %p355 = pneg %p88
        %p356 = pneg %p85
        %p357 = pneg %p109
        %p358 = pneg %p106
        %p359 = pneg %p130
        %p360 = pneg %p127
        %p361 = pneg %p151
        %p362 = pneg %p148
        %p363 = pneg %p172
        %p364 = pneg %p169
        %p365 = pneg %p193
        %p366 = pneg %p190
        %p367 = pneg %p214
        %p368 = pneg %p211
        %p369 = pneg %p235
        %p370 = pneg %p232
        %p371 = pneg %p256
        %p372 = pneg %p253
        %p373 = pneg %p282
        %p374 = pneg %p279
        %s375 = sand.u32 %s269, 1
        %s376 = scalar_lea.sflag [#allocation7], %s375
        %s377 = sand.u32 %s269, 1
        %s378 = scalar_lea.vmem [#allocation6], %s377
        %p379 = scmp.lt.s32.totalorder %s25, 1
        %s380 = scalar_select %p379, %s25, 1
        %s381 = smul.addr %s380, 63
        %s382 = smul.addr %s381, 8
        %s383 = scalar_lea.vmem %s0, %s382
        %v384 = vld [vmem:[%s383] sm:$0xff]
        %v385 = vld [vmem:[%s383 + $0x8] sm:$0xff]
        %v386 = vld [vmem:[%s383 + $0x10] sm:$0xff]
        %v387 = vld [vmem:[%s383 + $0x18] sm:$0xff]
        %v388 = vld [vmem:[%s383 + $0x20] sm:$0xff]
        %v389 = vld [vmem:[%s383 + $0x28] sm:$0xff]
        %v390 = vld [vmem:[%s383 + $0x30] sm:$0xff]
        %v391 = vld [vmem:[%s383 + $0x38] sm:$0xff]
        %v392 = vld [vmem:[%s383 + $0x40] sm:$0xff]
        %v393 = vld [vmem:[%s383 + $0x48] sm:$0xff]
        %v394 = vld [vmem:[%s383 + $0x50] sm:$0xff]
        %v395 = vld [vmem:[%s383 + $0x58] sm:$0xff]
        %v396 = vld [vmem:[%s383 + $0x60] sm:$0xff]
        %v397 = vld [vmem:[%s383 + $0x68] sm:$0xff]
        %v398 = vld [vmem:[%s383 + $0x70] sm:$0xff]
        %v399 = vld [vmem:[%s383 + $0x78] sm:$0xff]
        %v400 = vld [vmem:[%s383 + $0x80] sm:$0xff]
        %v401 = vld [vmem:[%s383 + $0x88] sm:$0xff]
        %v402 = vld [vmem:[%s383 + $0x90] sm:$0xff]
        %v403 = vld [vmem:[%s383 + $0x98] sm:$0xff]
        %v404 = vld [vmem:[%s383 + $0xa0] sm:$0xff]
        %v405 = vld [vmem:[%s383 + $0xa8] sm:$0xff]
        %v406 = vld [vmem:[%s383 + $0xb0] sm:$0xff]
        %v407 = vld [vmem:[%s383 + $0xb8] sm:$0xff]
        %v408 = vld [vmem:[%s383 + $0xc0] sm:$0xff]
        %v409 = vld [vmem:[%s383 + $0xc8] sm:$0xff]
        %v410 = vld [vmem:[%s383 + $0xd0] sm:$0xff]
        %v411 = vld [vmem:[%s383 + $0xd8] sm:$0xff]
        %v412 = vld [vmem:[%s383 + $0xe0] sm:$0xff]
        %v413 = vld [vmem:[%s383 + $0xe8] sm:$0xff]
        %v414 = vld [vmem:[%s383 + $0xf0] sm:$0xff]
        %v415 = vld [vmem:[%s383 + $0xf8] sm:$0xff]
        %v416 = vld [vmem:[%s383 + $0x100] sm:$0xff]
        %v417 = vld [vmem:[%s383 + $0x108] sm:$0xff]
        %v418 = vld [vmem:[%s383 + $0x110] sm:$0xff]
        %v419 = vld [vmem:[%s383 + $0x118] sm:$0xff]
        %v420 = vld [vmem:[%s383 + $0x120] sm:$0xff]
        %v421 = vld [vmem:[%s383 + $0x128] sm:$0xff]
        %v422 = vld [vmem:[%s383 + $0x130] sm:$0xff]
        %v423 = vld [vmem:[%s383 + $0x138] sm:$0xff]
        %v424 = vld [vmem:[%s383 + $0x140] sm:$0xff]
        %v425 = vld [vmem:[%s383 + $0x148] sm:$0xff]
        %v426 = vld [vmem:[%s383 + $0x150] sm:$0xff]
        %v427 = vld [vmem:[%s383 + $0x158] sm:$0xff]
        %v428 = vld [vmem:[%s383 + $0x160] sm:$0xff]
        %v429 = vld [vmem:[%s383 + $0x168] sm:$0xff]
        %v430 = vld [vmem:[%s383 + $0x170] sm:$0xff]
        %v431 = vld [vmem:[%s383 + $0x178] sm:$0xff]
        %v432 = vld [vmem:[%s383 + $0x180] sm:$0xff]
        %v433 = vld [vmem:[%s383 + $0x188] sm:$0xff]
        %v434 = vld [vmem:[%s383 + $0x190] sm:$0xff]
        %v435 = vld [vmem:[%s383 + $0x198] sm:$0xff]
        %v436 = vld [vmem:[%s383 + $0x1a0] sm:$0xff]
        %v437 = vld [vmem:[%s383 + $0x1a8] sm:$0xff]
        %v438 = vld [vmem:[%s383 + $0x1b0] sm:$0xff]
        %v439 = vld [vmem:[%s383 + $0x1b8] sm:$0xff]
        %v440 = vld [vmem:[%s383 + $0x1c0] sm:$0xff]
        %v441 = vld [vmem:[%s383 + $0x1c8] sm:$0xff]
        %v442 = vld [vmem:[%s383 + $0x1d0] sm:$0xff]
        %v443 = vld [vmem:[%s383 + $0x1d8] sm:$0xff]
        %v444 = vld [vmem:[%s383 + $0x1e0] sm:$0xff]
        %v445 = vld [vmem:[%s383 + $0x1e8] sm:$0xff]
        %v446 = vld [vmem:[%s383 + $0x1] sm:$0xff]
        %v447 = vld [vmem:[%s383 + $0x9] sm:$0xff]
        %v448 = vld [vmem:[%s383 + $0x11] sm:$0xff]
        %v449 = vld [vmem:[%s383 + $0x19] sm:$0xff]
        %v450 = vld [vmem:[%s383 + $0x21] sm:$0xff]
        %v451 = vld [vmem:[%s383 + $0x29] sm:$0xff]
        %v452 = vld [vmem:[%s383 + $0x31] sm:$0xff]
        %v453 = vld [vmem:[%s383 + $0x39] sm:$0xff]
        %v454 = vld [vmem:[%s383 + $0x41] sm:$0xff]
        %v455 = vld [vmem:[%s383 + $0x49] sm:$0xff]
        %v456 = vld [vmem:[%s383 + $0x51] sm:$0xff]
        %v457 = vld [vmem:[%s383 + $0x59] sm:$0xff]
        %v458 = vld [vmem:[%s383 + $0x61] sm:$0xff]
        %v459 = vld [vmem:[%s383 + $0x69] sm:$0xff]
        %v460 = vld [vmem:[%s383 + $0x71] sm:$0xff]
        %v461 = vld [vmem:[%s383 + $0x79] sm:$0xff]
        %v462 = vld [vmem:[%s383 + $0x81] sm:$0xff]
        %v463 = vld [vmem:[%s383 + $0x89] sm:$0xff]
        %v464 = vld [vmem:[%s383 + $0x91] sm:$0xff]
        %v465 = vld [vmem:[%s383 + $0x99] sm:$0xff]
        %v466 = vld [vmem:[%s383 + $0xa1] sm:$0xff]
        %v467 = vld [vmem:[%s383 + $0xa9] sm:$0xff]
        %v468 = vld [vmem:[%s383 + $0xb1] sm:$0xff]
        %v469 = vld [vmem:[%s383 + $0xb9] sm:$0xff]
        %v470 = vld [vmem:[%s383 + $0xc1] sm:$0xff]
        %v471 = vld [vmem:[%s383 + $0xc9] sm:$0xff]
        %v472 = vld [vmem:[%s383 + $0xd1] sm:$0xff]
        %v473 = vld [vmem:[%s383 + $0xd9] sm:$0xff]
        %v474 = vld [vmem:[%s383 + $0xe1] sm:$0xff]
        %v475 = vld [vmem:[%s383 + $0xe9] sm:$0xff]
        %v476 = vld [vmem:[%s383 + $0xf1] sm:$0xff]
        %v477 = vld [vmem:[%s383 + $0xf9] sm:$0xff]
        %v478 = vld [vmem:[%s383 + $0x101] sm:$0xff]
        %v479 = vld [vmem:[%s383 + $0x109] sm:$0xff]
        %v480 = vld [vmem:[%s383 + $0x111] sm:$0xff]
        %v481 = vld [vmem:[%s383 + $0x119] sm:$0xff]
        %v482 = vld [vmem:[%s383 + $0x121] sm:$0xff]
        %v483 = vld [vmem:[%s383 + $0x129] sm:$0xff]
        %v484 = vld [vmem:[%s383 + $0x131] sm:$0xff]
        %v485 = vld [vmem:[%s383 + $0x139] sm:$0xff]
        %v486 = vld [vmem:[%s383 + $0x141] sm:$0xff]
        %v487 = vld [vmem:[%s383 + $0x149] sm:$0xff]
        %v488 = vld [vmem:[%s383 + $0x151] sm:$0xff]
        %v489 = vld [vmem:[%s383 + $0x159] sm:$0xff]
        %v490 = vld [vmem:[%s383 + $0x161] sm:$0xff]
        %v491 = vld [vmem:[%s383 + $0x169] sm:$0xff]
        %v492 = vld [vmem:[%s383 + $0x171] sm:$0xff]
        %v493 = vld [vmem:[%s383 + $0x179] sm:$0xff]
        %v494 = vld [vmem:[%s383 + $0x181] sm:$0xff]
        %v495 = vld [vmem:[%s383 + $0x189] sm:$0xff]
        %v496 = vld [vmem:[%s383 + $0x191] sm:$0xff]
        %v497 = vld [vmem:[%s383 + $0x199] sm:$0xff]
        %v498 = vld [vmem:[%s383 + $0x1a1] sm:$0xff]
        %v499 = vld [vmem:[%s383 + $0x1a9] sm:$0xff]
        %v500 = vld [vmem:[%s383 + $0x1b1] sm:$0xff]
        %v501 = vld [vmem:[%s383 + $0x1b9] sm:$0xff]
        %v502 = vld [vmem:[%s383 + $0x1c1] sm:$0xff]
        %v503 = vld [vmem:[%s383 + $0x1c9] sm:$0xff]
        %v504 = vld [vmem:[%s383 + $0x1d1] sm:$0xff]
        %v505 = vld [vmem:[%s383 + $0x1d9] sm:$0xff]
        %v506 = vld [vmem:[%s383 + $0x1e1] sm:$0xff]
        %v507 = vld [vmem:[%s383 + $0x1e9] sm:$0xff]
        %v508 = vld [vmem:[%s383 + $0x2] sm:$0xff]
        %v509 = vld [vmem:[%s383 + $0xa] sm:$0xff]
        %v510 = vld [vmem:[%s383 + $0x12] sm:$0xff]
        %v511 = vld [vmem:[%s383 + $0x1a] sm:$0xff]
        %v512 = vld [vmem:[%s383 + $0x22] sm:$0xff]
        %v513 = vld [vmem:[%s383 + $0x2a] sm:$0xff]
        %v514 = vld [vmem:[%s383 + $0x32] sm:$0xff]
        %v515 = vld [vmem:[%s383 + $0x3a] sm:$0xff]
        %v516 = vld [vmem:[%s383 + $0x42] sm:$0xff]
        %v517 = vld [vmem:[%s383 + $0x4a] sm:$0xff]
        %v518 = vld [vmem:[%s383 + $0x52] sm:$0xff]
        %v519 = vld [vmem:[%s383 + $0x5a] sm:$0xff]
        %v520 = vld [vmem:[%s383 + $0x62] sm:$0xff]
        %v521 = vld [vmem:[%s383 + $0x6a] sm:$0xff]
        %v522 = vld [vmem:[%s383 + $0x72] sm:$0xff]
        %v523 = vld [vmem:[%s383 + $0x7a] sm:$0xff]
        %v524 = vld [vmem:[%s383 + $0x82] sm:$0xff]
        %v525 = vld [vmem:[%s383 + $0x8a] sm:$0xff]
        %v526 = vld [vmem:[%s383 + $0x92] sm:$0xff]
        %v527 = vld [vmem:[%s383 + $0x9a] sm:$0xff]
        %v528 = vld [vmem:[%s383 + $0xa2] sm:$0xff]
        %v529 = vld [vmem:[%s383 + $0xaa] sm:$0xff]
        %v530 = vld [vmem:[%s383 + $0xb2] sm:$0xff]
        %v531 = vld [vmem:[%s383 + $0xba] sm:$0xff]
        %v532 = vld [vmem:[%s383 + $0xc2] sm:$0xff]
        %v533 = vld [vmem:[%s383 + $0xca] sm:$0xff]
        %v534 = vld [vmem:[%s383 + $0xd2] sm:$0xff]
        %v535 = vld [vmem:[%s383 + $0xda] sm:$0xff]
        %v536 = vld [vmem:[%s383 + $0xe2] sm:$0xff]
        %v537 = vld [vmem:[%s383 + $0xea] sm:$0xff]
        %v538 = vld [vmem:[%s383 + $0xf2] sm:$0xff]
        %v539 = vld [vmem:[%s383 + $0xfa] sm:$0xff]
        %v540 = vld [vmem:[%s383 + $0x102] sm:$0xff]
        %v541 = vld [vmem:[%s383 + $0x10a] sm:$0xff]
        %v542 = vld [vmem:[%s383 + $0x112] sm:$0xff]
        %v543 = vld [vmem:[%s383 + $0x11a] sm:$0xff]
        %v544 = vld [vmem:[%s383 + $0x122] sm:$0xff]
        %v545 = vld [vmem:[%s383 + $0x12a] sm:$0xff]
        %v546 = vld [vmem:[%s383 + $0x132] sm:$0xff]
        %v547 = vld [vmem:[%s383 + $0x13a] sm:$0xff]
        %v548 = vld [vmem:[%s383 + $0x142] sm:$0xff]
        %v549 = vld [vmem:[%s383 + $0x14a] sm:$0xff]
        %v550 = vld [vmem:[%s383 + $0x152] sm:$0xff]
        %v551 = vld [vmem:[%s383 + $0x15a] sm:$0xff]
        %v552 = vld [vmem:[%s383 + $0x162] sm:$0xff]
        %v553 = vld [vmem:[%s383 + $0x16a] sm:$0xff]
        %v554 = vld [vmem:[%s383 + $0x172] sm:$0xff]
        %v555 = vld [vmem:[%s383 + $0x17a] sm:$0xff]
        %v556 = vld [vmem:[%s383 + $0x182] sm:$0xff]
        %v557 = vld [vmem:[%s383 + $0x18a] sm:$0xff]
        %v558 = vld [vmem:[%s383 + $0x192] sm:$0xff]
        %v559 = vld [vmem:[%s383 + $0x19a] sm:$0xff]
        %v560 = vld [vmem:[%s383 + $0x1a2] sm:$0xff]
        %v561 = vld [vmem:[%s383 + $0x1aa] sm:$0xff]
        %v562 = vld [vmem:[%s383 + $0x1b2] sm:$0xff]
        %v563 = vld [vmem:[%s383 + $0x1ba] sm:$0xff]
        %v564 = vld [vmem:[%s383 + $0x1c2] sm:$0xff]
        %v565 = vld [vmem:[%s383 + $0x1ca] sm:$0xff]
        %v566 = vld [vmem:[%s383 + $0x1d2] sm:$0xff]
        %v567 = vld [vmem:[%s383 + $0x1da] sm:$0xff]
        %v568 = vld [vmem:[%s383 + $0x1e2] sm:$0xff]
        %v569 = vld [vmem:[%s383 + $0x1ea] sm:$0xff]
        %v570 = vld [vmem:[%s383 + $0x3] sm:$0xff]
        %v571 = vld [vmem:[%s383 + $0xb] sm:$0xff]
        %v572 = vld [vmem:[%s383 + $0x13] sm:$0xff]
        %v573 = vld [vmem:[%s383 + $0x1b] sm:$0xff]
        %v574 = vld [vmem:[%s383 + $0x23] sm:$0xff]
        %v575 = vld [vmem:[%s383 + $0x2b] sm:$0xff]
        %v576 = vld [vmem:[%s383 + $0x33] sm:$0xff]
        %v577 = vld [vmem:[%s383 + $0x3b] sm:$0xff]
        %v578 = vld [vmem:[%s383 + $0x43] sm:$0xff]
        %v579 = vld [vmem:[%s383 + $0x4b] sm:$0xff]
        %v580 = vld [vmem:[%s383 + $0x53] sm:$0xff]
        %v581 = vld [vmem:[%s383 + $0x5b] sm:$0xff]
        %v582 = vld [vmem:[%s383 + $0x63] sm:$0xff]
        %v583 = vld [vmem:[%s383 + $0x6b] sm:$0xff]
        %v584 = vld [vmem:[%s383 + $0x73] sm:$0xff]
        %v585 = vld [vmem:[%s383 + $0x7b] sm:$0xff]
        %v586 = vld [vmem:[%s383 + $0x83] sm:$0xff]
        %v587 = vld [vmem:[%s383 + $0x8b] sm:$0xff]
        %v588 = vld [vmem:[%s383 + $0x93] sm:$0xff]
        %v589 = vld [vmem:[%s383 + $0x9b] sm:$0xff]
        %v590 = vld [vmem:[%s383 + $0xa3] sm:$0xff]
        %v591 = vld [vmem:[%s383 + $0xab] sm:$0xff]
        %v592 = vld [vmem:[%s383 + $0xb3] sm:$0xff]
        %v593 = vld [vmem:[%s383 + $0xbb] sm:$0xff]
        %v594 = vld [vmem:[%s383 + $0xc3] sm:$0xff]
        %v595 = vld [vmem:[%s383 + $0xcb] sm:$0xff]
        %v596 = vld [vmem:[%s383 + $0xd3] sm:$0xff]
        %v597 = vld [vmem:[%s383 + $0xdb] sm:$0xff]
        %v598 = vld [vmem:[%s383 + $0xe3] sm:$0xff]
        %v599 = vld [vmem:[%s383 + $0xeb] sm:$0xff]
        %v600 = vld [vmem:[%s383 + $0xf3] sm:$0xff]
        %v601 = vld [vmem:[%s383 + $0xfb] sm:$0xff]
        %v602 = vld [vmem:[%s383 + $0x103] sm:$0xff]
        %v603 = vld [vmem:[%s383 + $0x10b] sm:$0xff]
        %v604 = vld [vmem:[%s383 + $0x113] sm:$0xff]
        %v605 = vld [vmem:[%s383 + $0x11b] sm:$0xff]
        %v606 = vld [vmem:[%s383 + $0x123] sm:$0xff]
        %v607 = vld [vmem:[%s383 + $0x12b] sm:$0xff]
        %v608 = vld [vmem:[%s383 + $0x133] sm:$0xff]
        %v609 = vld [vmem:[%s383 + $0x13b] sm:$0xff]
        %v610 = vld [vmem:[%s383 + $0x143] sm:$0xff]
        %v611 = vld [vmem:[%s383 + $0x14b] sm:$0xff]
        %v612 = vld [vmem:[%s383 + $0x153] sm:$0xff]
        %v613 = vld [vmem:[%s383 + $0x15b] sm:$0xff]
        %v614 = vld [vmem:[%s383 + $0x163] sm:$0xff]
        %v615 = vld [vmem:[%s383 + $0x16b] sm:$0xff]
        %v616 = vld [vmem:[%s383 + $0x173] sm:$0xff]
        %v617 = vld [vmem:[%s383 + $0x17b] sm:$0xff]
        %v618 = vld [vmem:[%s383 + $0x183] sm:$0xff]
        %v619 = vld [vmem:[%s383 + $0x18b] sm:$0xff]
        %v620 = vld [vmem:[%s383 + $0x193] sm:$0xff]
        %v621 = vld [vmem:[%s383 + $0x19b] sm:$0xff]
        %v622 = vld [vmem:[%s383 + $0x1a3] sm:$0xff]
        %v623 = vld [vmem:[%s383 + $0x1ab] sm:$0xff]
        %v624 = vld [vmem:[%s383 + $0x1b3] sm:$0xff]
        %v625 = vld [vmem:[%s383 + $0x1bb] sm:$0xff]
        %v626 = vld [vmem:[%s383 + $0x1c3] sm:$0xff]
        %v627 = vld [vmem:[%s383 + $0x1cb] sm:$0xff]
        %v628 = vld [vmem:[%s383 + $0x1d3] sm:$0xff]
        %v629 = vld [vmem:[%s383 + $0x1db] sm:$0xff]
        %v630 = vld [vmem:[%s383 + $0x1e3] sm:$0xff]
        %v631 = vld [vmem:[%s383 + $0x1eb] sm:$0xff]
        %v632 = vld [vmem:[%s383 + $0x4] sm:$0xff]
        %v633 = vld [vmem:[%s383 + $0xc] sm:$0xff]
        %v634 = vld [vmem:[%s383 + $0x14] sm:$0xff]
        %v635 = vld [vmem:[%s383 + $0x1c] sm:$0xff]
        %v636 = vld [vmem:[%s383 + $0x24] sm:$0xff]
        %v637 = vld [vmem:[%s383 + $0x2c] sm:$0xff]
        %v638 = vld [vmem:[%s383 + $0x34] sm:$0xff]
        %v639 = vld [vmem:[%s383 + $0x3c] sm:$0xff]
        %v640 = vld [vmem:[%s383 + $0x44] sm:$0xff]
        %v641 = vld [vmem:[%s383 + $0x4c] sm:$0xff]
        %v642 = vld [vmem:[%s383 + $0x54] sm:$0xff]
        %v643 = vld [vmem:[%s383 + $0x5c] sm:$0xff]
        %v644 = vld [vmem:[%s383 + $0x64] sm:$0xff]
        %v645 = vld [vmem:[%s383 + $0x6c] sm:$0xff]
        %v646 = vld [vmem:[%s383 + $0x74] sm:$0xff]
        %v647 = vld [vmem:[%s383 + $0x7c] sm:$0xff]
        %v648 = vld [vmem:[%s383 + $0x84] sm:$0xff]
        %v649 = vld [vmem:[%s383 + $0x8c] sm:$0xff]
        %v650 = vld [vmem:[%s383 + $0x94] sm:$0xff]
        %v651 = vld [vmem:[%s383 + $0x9c] sm:$0xff]
        %v652 = vld [vmem:[%s383 + $0xa4] sm:$0xff]
        %v653 = vld [vmem:[%s383 + $0xac] sm:$0xff]
        %v654 = vld [vmem:[%s383 + $0xb4] sm:$0xff]
        %v655 = vld [vmem:[%s383 + $0xbc] sm:$0xff]
        %v656 = vld [vmem:[%s383 + $0xc4] sm:$0xff]
        %v657 = vld [vmem:[%s383 + $0xcc] sm:$0xff]
        %v658 = vld [vmem:[%s383 + $0xd4] sm:$0xff]
        %v659 = vld [vmem:[%s383 + $0xdc] sm:$0xff]
        %v660 = vld [vmem:[%s383 + $0xe4] sm:$0xff]
        %v661 = vld [vmem:[%s383 + $0xec] sm:$0xff]
        %v662 = vld [vmem:[%s383 + $0xf4] sm:$0xff]
        %v663 = vld [vmem:[%s383 + $0xfc] sm:$0xff]
        %v664 = vld [vmem:[%s383 + $0x104] sm:$0xff]
        %v665 = vld [vmem:[%s383 + $0x10c] sm:$0xff]
        %v666 = vld [vmem:[%s383 + $0x114] sm:$0xff]
        %v667 = vld [vmem:[%s383 + $0x11c] sm:$0xff]
        %v668 = vld [vmem:[%s383 + $0x124] sm:$0xff]
        %v669 = vld [vmem:[%s383 + $0x12c] sm:$0xff]
        %v670 = vld [vmem:[%s383 + $0x134] sm:$0xff]
        %v671 = vld [vmem:[%s383 + $0x13c] sm:$0xff]
        %v672 = vld [vmem:[%s383 + $0x144] sm:$0xff]
        %v673 = vld [vmem:[%s383 + $0x14c] sm:$0xff]
        %v674 = vld [vmem:[%s383 + $0x154] sm:$0xff]
        %v675 = vld [vmem:[%s383 + $0x15c] sm:$0xff]
        %v676 = vld [vmem:[%s383 + $0x164] sm:$0xff]
        %v677 = vld [vmem:[%s383 + $0x16c] sm:$0xff]
        %v678 = vld [vmem:[%s383 + $0x174] sm:$0xff]
        %v679 = vld [vmem:[%s383 + $0x17c] sm:$0xff]
        %v680 = vld [vmem:[%s383 + $0x184] sm:$0xff]
        %v681 = vld [vmem:[%s383 + $0x18c] sm:$0xff]
        %v682 = vld [vmem:[%s383 + $0x194] sm:$0xff]
        %v683 = vld [vmem:[%s383 + $0x19c] sm:$0xff]
        %v684 = vld [vmem:[%s383 + $0x1a4] sm:$0xff]
        %v685 = vld [vmem:[%s383 + $0x1ac] sm:$0xff]
        %v686 = vld [vmem:[%s383 + $0x1b4] sm:$0xff]
        %v687 = vld [vmem:[%s383 + $0x1bc] sm:$0xff]
        %v688 = vld [vmem:[%s383 + $0x1c4] sm:$0xff]
        %v689 = vld [vmem:[%s383 + $0x1cc] sm:$0xff]
        %v690 = vld [vmem:[%s383 + $0x1d4] sm:$0xff]
        %v691 = vld [vmem:[%s383 + $0x1dc] sm:$0xff]
        %v692 = vld [vmem:[%s383 + $0x1e4] sm:$0xff]
        %v693 = vld [vmem:[%s383 + $0x1ec] sm:$0xff]
        %756 = vrot.lane.b32.xlu0 %v446, 16
        %v757 = vpop.permute.xlu0 %756
        %758 = vrot.lane.b32.xlu0 %v447, 16
        %v759 = vpop.permute.xlu0 %758
        %760 = vrot.lane.b32.xlu0 %v448, 16
        %v761 = vpop.permute.xlu0 %760
        %762 = vrot.lane.b32.xlu0 %v449, 16
        %v763 = vpop.permute.xlu0 %762
        %764 = vrot.lane.b32.xlu0 %v450, 16
        %v765 = vpop.permute.xlu0 %764
        %766 = vrot.lane.b32.xlu0 %v451, 16
        %v767 = vpop.permute.xlu0 %766
        %768 = vrot.lane.b32.xlu0 %v452, 16
        %v769 = vpop.permute.xlu0 %768
        %770 = vrot.lane.b32.xlu0 %v453, 16
        %v771 = vpop.permute.xlu0 %770
        %772 = vrot.lane.b32.xlu0 %v454, 16
        %v773 = vpop.permute.xlu0 %772
        %774 = vrot.lane.b32.xlu0 %v455, 16
        %v775 = vpop.permute.xlu0 %774
        %776 = vrot.lane.b32.xlu0 %v456, 16
        %v777 = vpop.permute.xlu0 %776
        %778 = vrot.lane.b32.xlu0 %v457, 16
        %v779 = vpop.permute.xlu0 %778
        %780 = vrot.lane.b32.xlu0 %v458, 16
        %v781 = vpop.permute.xlu0 %780
        %782 = vrot.lane.b32.xlu0 %v459, 16
        %v783 = vpop.permute.xlu0 %782
        %784 = vrot.lane.b32.xlu0 %v460, 16
        %v785 = vpop.permute.xlu0 %784
        %786 = vrot.lane.b32.xlu0 %v461, 16
        %v787 = vpop.permute.xlu0 %786
        %788 = vrot.lane.b32.xlu0 %v462, 16
        %v789 = vpop.permute.xlu0 %788
        %790 = vrot.lane.b32.xlu0 %v463, 16
        %v791 = vpop.permute.xlu0 %790
        %792 = vrot.lane.b32.xlu0 %v464, 16
        %v793 = vpop.permute.xlu0 %792
        %794 = vrot.lane.b32.xlu0 %v465, 16
        %v795 = vpop.permute.xlu0 %794
        %796 = vrot.lane.b32.xlu0 %v466, 16
        %v797 = vpop.permute.xlu0 %796
        %798 = vrot.lane.b32.xlu0 %v467, 16
        %v799 = vpop.permute.xlu0 %798
        %800 = vrot.lane.b32.xlu0 %v468, 16
        %v801 = vpop.permute.xlu0 %800
        %802 = vrot.lane.b32.xlu0 %v469, 16
        %v803 = vpop.permute.xlu0 %802
        %804 = vrot.lane.b32.xlu0 %v470, 16
        %v805 = vpop.permute.xlu0 %804
        %806 = vrot.lane.b32.xlu0 %v471, 16
        %v807 = vpop.permute.xlu0 %806
        %808 = vrot.lane.b32.xlu0 %v472, 16
        %v809 = vpop.permute.xlu0 %808
        %810 = vrot.lane.b32.xlu0 %v473, 16
        %v811 = vpop.permute.xlu0 %810
        %812 = vrot.lane.b32.xlu0 %v474, 16
        %v813 = vpop.permute.xlu0 %812
        %814 = vrot.lane.b32.xlu0 %v475, 16
        %v815 = vpop.permute.xlu0 %814
        %816 = vrot.lane.b32.xlu0 %v476, 16
        %v817 = vpop.permute.xlu0 %816
        %818 = vrot.lane.b32.xlu0 %v477, 16
        %v819 = vpop.permute.xlu0 %818
        %820 = vrot.lane.b32.xlu0 %v478, 16
        %v821 = vpop.permute.xlu0 %820
        %822 = vrot.lane.b32.xlu0 %v479, 16
        %v823 = vpop.permute.xlu0 %822
        %824 = vrot.lane.b32.xlu0 %v480, 16
        %v825 = vpop.permute.xlu0 %824
        %826 = vrot.lane.b32.xlu0 %v481, 16
        %v827 = vpop.permute.xlu0 %826
        %828 = vrot.lane.b32.xlu0 %v482, 16
        %v829 = vpop.permute.xlu0 %828
        %830 = vrot.lane.b32.xlu0 %v483, 16
        %v831 = vpop.permute.xlu0 %830
        %832 = vrot.lane.b32.xlu0 %v484, 16
        %v833 = vpop.permute.xlu0 %832
        %834 = vrot.lane.b32.xlu0 %v485, 16
        %v835 = vpop.permute.xlu0 %834
        %836 = vrot.lane.b32.xlu0 %v486, 16
        %v837 = vpop.permute.xlu0 %836
        %838 = vrot.lane.b32.xlu0 %v487, 16
        %v839 = vpop.permute.xlu0 %838
        %840 = vrot.lane.b32.xlu0 %v488, 16
        %v841 = vpop.permute.xlu0 %840
        %842 = vrot.lane.b32.xlu0 %v489, 16
        %v843 = vpop.permute.xlu0 %842
        %844 = vrot.lane.b32.xlu0 %v490, 16
        %v845 = vpop.permute.xlu0 %844
        %846 = vrot.lane.b32.xlu0 %v491, 16
        %v847 = vpop.permute.xlu0 %846
        %848 = vrot.lane.b32.xlu0 %v492, 16
        %v849 = vpop.permute.xlu0 %848
        %850 = vrot.lane.b32.xlu0 %v493, 16
        %v851 = vpop.permute.xlu0 %850
        %852 = vrot.lane.b32.xlu0 %v494, 16
        %v853 = vpop.permute.xlu0 %852
        %854 = vrot.lane.b32.xlu0 %v495, 16
        %v855 = vpop.permute.xlu0 %854
        %856 = vrot.lane.b32.xlu0 %v496, 16
        %v857 = vpop.permute.xlu0 %856
        %858 = vrot.lane.b32.xlu0 %v497, 16
        %v859 = vpop.permute.xlu0 %858
        %860 = vrot.lane.b32.xlu0 %v498, 16
        %v861 = vpop.permute.xlu0 %860
        %862 = vrot.lane.b32.xlu0 %v499, 16
        %v863 = vpop.permute.xlu0 %862
        %864 = vrot.lane.b32.xlu0 %v500, 16
        %v865 = vpop.permute.xlu0 %864
        %866 = vrot.lane.b32.xlu0 %v501, 16
        %v867 = vpop.permute.xlu0 %866
        %868 = vrot.lane.b32.xlu0 %v502, 16
        %v869 = vpop.permute.xlu0 %868
        %870 = vrot.lane.b32.xlu0 %v503, 16
        %v871 = vpop.permute.xlu0 %870
        %872 = vrot.lane.b32.xlu0 %v504, 16
        %v873 = vpop.permute.xlu0 %872
        %874 = vrot.lane.b32.xlu0 %v505, 16
        %v875 = vpop.permute.xlu0 %874
        %876 = vrot.lane.b32.xlu0 %v506, 16
        %v877 = vpop.permute.xlu0 %876
        %878 = vrot.lane.b32.xlu0 %v507, 16
        %v879 = vpop.permute.xlu0 %878
        %1004 = vrot.lane.b32.xlu0 %v508, 32
        %v1005 = vpop.permute.xlu0 %1004
        %1006 = vrot.lane.b32.xlu0 %v509, 32
        %v1007 = vpop.permute.xlu0 %1006
        %1008 = vrot.lane.b32.xlu0 %v510, 32
        %v1009 = vpop.permute.xlu0 %1008
        %1010 = vrot.lane.b32.xlu0 %v511, 32
        %v1011 = vpop.permute.xlu0 %1010
        %1012 = vrot.lane.b32.xlu0 %v512, 32
        %v1013 = vpop.permute.xlu0 %1012
        %1014 = vrot.lane.b32.xlu0 %v513, 32
        %v1015 = vpop.permute.xlu0 %1014
        %1016 = vrot.lane.b32.xlu0 %v514, 32
        %v1017 = vpop.permute.xlu0 %1016
        %1018 = vrot.lane.b32.xlu0 %v515, 32
        %v1019 = vpop.permute.xlu0 %1018
        %1020 = vrot.lane.b32.xlu0 %v516, 32
        %v1021 = vpop.permute.xlu0 %1020
        %1022 = vrot.lane.b32.xlu0 %v517, 32
        %v1023 = vpop.permute.xlu0 %1022
        %1024 = vrot.lane.b32.xlu0 %v518, 32
        %v1025 = vpop.permute.xlu0 %1024
        %1026 = vrot.lane.b32.xlu0 %v519, 32
        %v1027 = vpop.permute.xlu0 %1026
        %1028 = vrot.lane.b32.xlu0 %v520, 32
        %v1029 = vpop.permute.xlu0 %1028
        %1030 = vrot.lane.b32.xlu0 %v521, 32
        %v1031 = vpop.permute.xlu0 %1030
        %1032 = vrot.lane.b32.xlu0 %v522, 32
        %v1033 = vpop.permute.xlu0 %1032
        %1034 = vrot.lane.b32.xlu0 %v523, 32
        %v1035 = vpop.permute.xlu0 %1034
        %1036 = vrot.lane.b32.xlu0 %v524, 32
        %v1037 = vpop.permute.xlu0 %1036
        %1038 = vrot.lane.b32.xlu0 %v525, 32
        %v1039 = vpop.permute.xlu0 %1038
        %1040 = vrot.lane.b32.xlu0 %v526, 32
        %v1041 = vpop.permute.xlu0 %1040
        %1042 = vrot.lane.b32.xlu0 %v527, 32
        %v1043 = vpop.permute.xlu0 %1042
        %1044 = vrot.lane.b32.xlu0 %v528, 32
        %v1045 = vpop.permute.xlu0 %1044
        %1046 = vrot.lane.b32.xlu0 %v529, 32
        %v1047 = vpop.permute.xlu0 %1046
        %1048 = vrot.lane.b32.xlu0 %v530, 32
        %v1049 = vpop.permute.xlu0 %1048
        %1050 = vrot.lane.b32.xlu0 %v531, 32
        %v1051 = vpop.permute.xlu0 %1050
        %1052 = vrot.lane.b32.xlu0 %v532, 32
        %v1053 = vpop.permute.xlu0 %1052
        %1054 = vrot.lane.b32.xlu0 %v533, 32
        %v1055 = vpop.permute.xlu0 %1054
        %1056 = vrot.lane.b32.xlu0 %v534, 32
        %v1057 = vpop.permute.xlu0 %1056
        %1058 = vrot.lane.b32.xlu0 %v535, 32
        %v1059 = vpop.permute.xlu0 %1058
        %1060 = vrot.lane.b32.xlu0 %v536, 32
        %v1061 = vpop.permute.xlu0 %1060
        %1062 = vrot.lane.b32.xlu0 %v537, 32
        %v1063 = vpop.permute.xlu0 %1062
        %1064 = vrot.lane.b32.xlu0 %v538, 32
        %v1065 = vpop.permute.xlu0 %1064
        %1066 = vrot.lane.b32.xlu0 %v539, 32
        %v1067 = vpop.permute.xlu0 %1066
        %1068 = vrot.lane.b32.xlu0 %v540, 32
        %v1069 = vpop.permute.xlu0 %1068
        %1070 = vrot.lane.b32.xlu0 %v541, 32
        %v1071 = vpop.permute.xlu0 %1070
        %1072 = vrot.lane.b32.xlu0 %v542, 32
        %v1073 = vpop.permute.xlu0 %1072
        %1074 = vrot.lane.b32.xlu0 %v543, 32
        %v1075 = vpop.permute.xlu0 %1074
        %1076 = vrot.lane.b32.xlu0 %v544, 32
        %v1077 = vpop.permute.xlu0 %1076
        %1078 = vrot.lane.b32.xlu0 %v545, 32
        %v1079 = vpop.permute.xlu0 %1078
        %1080 = vrot.lane.b32.xlu0 %v546, 32
        %v1081 = vpop.permute.xlu0 %1080
        %1082 = vrot.lane.b32.xlu0 %v547, 32
        %v1083 = vpop.permute.xlu0 %1082
        %1084 = vrot.lane.b32.xlu0 %v548, 32
        %v1085 = vpop.permute.xlu0 %1084
        %1086 = vrot.lane.b32.xlu0 %v549, 32
        %v1087 = vpop.permute.xlu0 %1086
        %1088 = vrot.lane.b32.xlu0 %v550, 32
        %v1089 = vpop.permute.xlu0 %1088
        %1090 = vrot.lane.b32.xlu0 %v551, 32
        %v1091 = vpop.permute.xlu0 %1090
        %1092 = vrot.lane.b32.xlu0 %v552, 32
        %v1093 = vpop.permute.xlu0 %1092
        %1094 = vrot.lane.b32.xlu0 %v553, 32
        %v1095 = vpop.permute.xlu0 %1094
        %1096 = vrot.lane.b32.xlu0 %v554, 32
        %v1097 = vpop.permute.xlu0 %1096
        %1098 = vrot.lane.b32.xlu0 %v555, 32
        %v1099 = vpop.permute.xlu0 %1098
        %1100 = vrot.lane.b32.xlu0 %v556, 32
        %v1101 = vpop.permute.xlu0 %1100
        %1102 = vrot.lane.b32.xlu0 %v557, 32
        %v1103 = vpop.permute.xlu0 %1102
        %1104 = vrot.lane.b32.xlu0 %v558, 32
        %v1105 = vpop.permute.xlu0 %1104
        %1106 = vrot.lane.b32.xlu0 %v559, 32
        %v1107 = vpop.permute.xlu0 %1106
        %1108 = vrot.lane.b32.xlu0 %v560, 32
        %v1109 = vpop.permute.xlu0 %1108
        %1110 = vrot.lane.b32.xlu0 %v561, 32
        %v1111 = vpop.permute.xlu0 %1110
        %1112 = vrot.lane.b32.xlu0 %v562, 32
        %v1113 = vpop.permute.xlu0 %1112
        %1114 = vrot.lane.b32.xlu0 %v563, 32
        %v1115 = vpop.permute.xlu0 %1114
        %1116 = vrot.lane.b32.xlu0 %v564, 32
        %v1117 = vpop.permute.xlu0 %1116
        %1118 = vrot.lane.b32.xlu0 %v565, 32
        %v1119 = vpop.permute.xlu0 %1118
        %1120 = vrot.lane.b32.xlu0 %v566, 32
        %v1121 = vpop.permute.xlu0 %1120
        %1122 = vrot.lane.b32.xlu0 %v567, 32
        %v1123 = vpop.permute.xlu0 %1122
        %1124 = vrot.lane.b32.xlu0 %v568, 32
        %v1125 = vpop.permute.xlu0 %1124
        %1126 = vrot.lane.b32.xlu0 %v569, 32
        %v1127 = vpop.permute.xlu0 %1126
        %1252 = vrot.lane.b32.xlu0 %v570, 48
        %v1253 = vpop.permute.xlu0 %1252
        %1254 = vrot.lane.b32.xlu0 %v571, 48
        %v1255 = vpop.permute.xlu0 %1254
        %1256 = vrot.lane.b32.xlu0 %v572, 48
        %v1257 = vpop.permute.xlu0 %1256
        %1258 = vrot.lane.b32.xlu0 %v573, 48
        %v1259 = vpop.permute.xlu0 %1258
        %1260 = vrot.lane.b32.xlu0 %v574, 48
        %v1261 = vpop.permute.xlu0 %1260
        %1262 = vrot.lane.b32.xlu0 %v575, 48
        %v1263 = vpop.permute.xlu0 %1262
        %1264 = vrot.lane.b32.xlu0 %v576, 48
        %v1265 = vpop.permute.xlu0 %1264
        %1266 = vrot.lane.b32.xlu0 %v577, 48
        %v1267 = vpop.permute.xlu0 %1266
        %1268 = vrot.lane.b32.xlu0 %v578, 48
        %v1269 = vpop.permute.xlu0 %1268
        %1270 = vrot.lane.b32.xlu0 %v579, 48
        %v1271 = vpop.permute.xlu0 %1270
        %1272 = vrot.lane.b32.xlu0 %v580, 48
        %v1273 = vpop.permute.xlu0 %1272
        %1274 = vrot.lane.b32.xlu0 %v581, 48
        %v1275 = vpop.permute.xlu0 %1274
        %1276 = vrot.lane.b32.xlu0 %v582, 48
        %v1277 = vpop.permute.xlu0 %1276
        %1278 = vrot.lane.b32.xlu0 %v583, 48
        %v1279 = vpop.permute.xlu0 %1278
        %1280 = vrot.lane.b32.xlu0 %v584, 48
        %v1281 = vpop.permute.xlu0 %1280
        %1282 = vrot.lane.b32.xlu0 %v585, 48
        %v1283 = vpop.permute.xlu0 %1282
        %1284 = vrot.lane.b32.xlu0 %v586, 48
        %v1285 = vpop.permute.xlu0 %1284
        %1286 = vrot.lane.b32.xlu0 %v587, 48
        %v1287 = vpop.permute.xlu0 %1286
        %1288 = vrot.lane.b32.xlu0 %v588, 48
        %v1289 = vpop.permute.xlu0 %1288
        %1290 = vrot.lane.b32.xlu0 %v589, 48
        %v1291 = vpop.permute.xlu0 %1290
        %1292 = vrot.lane.b32.xlu0 %v590, 48
        %v1293 = vpop.permute.xlu0 %1292
        %1294 = vrot.lane.b32.xlu0 %v591, 48
        %v1295 = vpop.permute.xlu0 %1294
        %1296 = vrot.lane.b32.xlu0 %v592, 48
        %v1297 = vpop.permute.xlu0 %1296
        %1298 = vrot.lane.b32.xlu0 %v593, 48
        %v1299 = vpop.permute.xlu0 %1298
        %1300 = vrot.lane.b32.xlu0 %v594, 48
        %v1301 = vpop.permute.xlu0 %1300
        %1302 = vrot.lane.b32.xlu0 %v595, 48
        %v1303 = vpop.permute.xlu0 %1302
        %1304 = vrot.lane.b32.xlu0 %v596, 48
        %v1305 = vpop.permute.xlu0 %1304
        %1306 = vrot.lane.b32.xlu0 %v597, 48
        %v1307 = vpop.permute.xlu0 %1306
        %1308 = vrot.lane.b32.xlu0 %v598, 48
        %v1309 = vpop.permute.xlu0 %1308
        %1310 = vrot.lane.b32.xlu0 %v599, 48
        %v1311 = vpop.permute.xlu0 %1310
        %1312 = vrot.lane.b32.xlu0 %v600, 48
        %v1313 = vpop.permute.xlu0 %1312
        %1314 = vrot.lane.b32.xlu0 %v601, 48
        %v1315 = vpop.permute.xlu0 %1314
        %1316 = vrot.lane.b32.xlu0 %v602, 48
        %v1317 = vpop.permute.xlu0 %1316
        %1318 = vrot.lane.b32.xlu0 %v603, 48
        %v1319 = vpop.permute.xlu0 %1318
        %1320 = vrot.lane.b32.xlu0 %v604, 48
        %v1321 = vpop.permute.xlu0 %1320
        %1322 = vrot.lane.b32.xlu0 %v605, 48
        %v1323 = vpop.permute.xlu0 %1322
        %1324 = vrot.lane.b32.xlu0 %v606, 48
        %v1325 = vpop.permute.xlu0 %1324
        %1326 = vrot.lane.b32.xlu0 %v607, 48
        %v1327 = vpop.permute.xlu0 %1326
        %1328 = vrot.lane.b32.xlu0 %v608, 48
        %v1329 = vpop.permute.xlu0 %1328
        %1330 = vrot.lane.b32.xlu0 %v609, 48
        %v1331 = vpop.permute.xlu0 %1330
        %1332 = vrot.lane.b32.xlu0 %v610, 48
        %v1333 = vpop.permute.xlu0 %1332
        %1334 = vrot.lane.b32.xlu0 %v611, 48
        %v1335 = vpop.permute.xlu0 %1334
        %1336 = vrot.lane.b32.xlu0 %v612, 48
        %v1337 = vpop.permute.xlu0 %1336
        %1338 = vrot.lane.b32.xlu0 %v613, 48
        %v1339 = vpop.permute.xlu0 %1338
        %1340 = vrot.lane.b32.xlu0 %v614, 48
        %v1341 = vpop.permute.xlu0 %1340
        %1342 = vrot.lane.b32.xlu0 %v615, 48
        %v1343 = vpop.permute.xlu0 %1342
        %1344 = vrot.lane.b32.xlu0 %v616, 48
        %v1345 = vpop.permute.xlu0 %1344
        %1346 = vrot.lane.b32.xlu0 %v617, 48
        %v1347 = vpop.permute.xlu0 %1346
        %1348 = vrot.lane.b32.xlu0 %v618, 48
        %v1349 = vpop.permute.xlu0 %1348
        %1350 = vrot.lane.b32.xlu0 %v619, 48
        %v1351 = vpop.permute.xlu0 %1350
        %1352 = vrot.lane.b32.xlu0 %v620, 48
        %v1353 = vpop.permute.xlu0 %1352
        %1354 = vrot.lane.b32.xlu0 %v621, 48
        %v1355 = vpop.permute.xlu0 %1354
        %1356 = vrot.lane.b32.xlu0 %v622, 48
        %v1357 = vpop.permute.xlu0 %1356
        %1358 = vrot.lane.b32.xlu0 %v623, 48
        %v1359 = vpop.permute.xlu0 %1358
        %1360 = vrot.lane.b32.xlu0 %v624, 48
        %v1361 = vpop.permute.xlu0 %1360
        %1362 = vrot.lane.b32.xlu0 %v625, 48
        %v1363 = vpop.permute.xlu0 %1362
        %1364 = vrot.lane.b32.xlu0 %v626, 48
        %v1365 = vpop.permute.xlu0 %1364
        %1366 = vrot.lane.b32.xlu0 %v627, 48
        %v1367 = vpop.permute.xlu0 %1366
        %1368 = vrot.lane.b32.xlu0 %v628, 48
        %v1369 = vpop.permute.xlu0 %1368
        %1370 = vrot.lane.b32.xlu0 %v629, 48
        %v1371 = vpop.permute.xlu0 %1370
        %1372 = vrot.lane.b32.xlu0 %v630, 48
        %v1373 = vpop.permute.xlu0 %1372
        %1374 = vrot.lane.b32.xlu0 %v631, 48
        %v1375 = vpop.permute.xlu0 %1374
        %1500 = vrot.lane.b32.xlu0 %v632, 64
        %v1501 = vpop.permute.xlu0 %1500
        %1502 = vrot.lane.b32.xlu0 %v633, 64
        %v1503 = vpop.permute.xlu0 %1502
        %1504 = vrot.lane.b32.xlu0 %v634, 64
        %v1505 = vpop.permute.xlu0 %1504
        %1506 = vrot.lane.b32.xlu0 %v635, 64
        %v1507 = vpop.permute.xlu0 %1506
        %1508 = vrot.lane.b32.xlu0 %v636, 64
        %v1509 = vpop.permute.xlu0 %1508
        %1510 = vrot.lane.b32.xlu0 %v637, 64
        %v1511 = vpop.permute.xlu0 %1510
        %1512 = vrot.lane.b32.xlu0 %v638, 64
        %v1513 = vpop.permute.xlu0 %1512
        %1514 = vrot.lane.b32.xlu0 %v639, 64
        %v1515 = vpop.permute.xlu0 %1514
        %1516 = vrot.lane.b32.xlu0 %v640, 64
        %v1517 = vpop.permute.xlu0 %1516
        %1518 = vrot.lane.b32.xlu0 %v641, 64
        %v1519 = vpop.permute.xlu0 %1518
        %1520 = vrot.lane.b32.xlu0 %v642, 64
        %v1521 = vpop.permute.xlu0 %1520
        %1522 = vrot.lane.b32.xlu0 %v643, 64
        %v1523 = vpop.permute.xlu0 %1522
        %1524 = vrot.lane.b32.xlu0 %v644, 64
        %v1525 = vpop.permute.xlu0 %1524
        %1526 = vrot.lane.b32.xlu0 %v645, 64
        %v1527 = vpop.permute.xlu0 %1526
        %1528 = vrot.lane.b32.xlu0 %v646, 64
        %v1529 = vpop.permute.xlu0 %1528
        %1530 = vrot.lane.b32.xlu0 %v647, 64
        %v1531 = vpop.permute.xlu0 %1530
        %1532 = vrot.lane.b32.xlu0 %v648, 64
        %v1533 = vpop.permute.xlu0 %1532
        %1534 = vrot.lane.b32.xlu0 %v649, 64
        %v1535 = vpop.permute.xlu0 %1534
        %1536 = vrot.lane.b32.xlu0 %v650, 64
        %v1537 = vpop.permute.xlu0 %1536
        %1538 = vrot.lane.b32.xlu0 %v651, 64
        %v1539 = vpop.permute.xlu0 %1538
        %1540 = vrot.lane.b32.xlu0 %v652, 64
        %v1541 = vpop.permute.xlu0 %1540
        %1542 = vrot.lane.b32.xlu0 %v653, 64
        %v1543 = vpop.permute.xlu0 %1542
        %1544 = vrot.lane.b32.xlu0 %v654, 64
        %v1545 = vpop.permute.xlu0 %1544
        %1546 = vrot.lane.b32.xlu0 %v655, 64
        %v1547 = vpop.permute.xlu0 %1546
        %1548 = vrot.lane.b32.xlu0 %v656, 64
        %v1549 = vpop.permute.xlu0 %1548
        %1550 = vrot.lane.b32.xlu0 %v657, 64
        %v1551 = vpop.permute.xlu0 %1550
        %1552 = vrot.lane.b32.xlu0 %v658, 64
        %v1553 = vpop.permute.xlu0 %1552
        %1554 = vrot.lane.b32.xlu0 %v659, 64
        %v1555 = vpop.permute.xlu0 %1554
        %1556 = vrot.lane.b32.xlu0 %v660, 64
        %v1557 = vpop.permute.xlu0 %1556
        %1558 = vrot.lane.b32.xlu0 %v661, 64
        %v1559 = vpop.permute.xlu0 %1558
        %1560 = vrot.lane.b32.xlu0 %v662, 64
        %v1561 = vpop.permute.xlu0 %1560
        %1562 = vrot.lane.b32.xlu0 %v663, 64
        %v1563 = vpop.permute.xlu0 %1562
        %1564 = vrot.lane.b32.xlu0 %v664, 64
        %v1565 = vpop.permute.xlu0 %1564
        %1566 = vrot.lane.b32.xlu0 %v665, 64
        %v1567 = vpop.permute.xlu0 %1566
        %1568 = vrot.lane.b32.xlu0 %v666, 64
        %v1569 = vpop.permute.xlu0 %1568
        %1570 = vrot.lane.b32.xlu0 %v667, 64
        %v1571 = vpop.permute.xlu0 %1570
        %1572 = vrot.lane.b32.xlu0 %v668, 64
        %v1573 = vpop.permute.xlu0 %1572
        %1574 = vrot.lane.b32.xlu0 %v669, 64
        %v1575 = vpop.permute.xlu0 %1574
        %1576 = vrot.lane.b32.xlu0 %v670, 64
        %v1577 = vpop.permute.xlu0 %1576
        %1578 = vrot.lane.b32.xlu0 %v671, 64
        %v1579 = vpop.permute.xlu0 %1578
        %1580 = vrot.lane.b32.xlu0 %v672, 64
        %v1581 = vpop.permute.xlu0 %1580
        %1582 = vrot.lane.b32.xlu0 %v673, 64
        %v1583 = vpop.permute.xlu0 %1582
        %1584 = vrot.lane.b32.xlu0 %v674, 64
        %v1585 = vpop.permute.xlu0 %1584
        %1586 = vrot.lane.b32.xlu0 %v675, 64
        %v1587 = vpop.permute.xlu0 %1586
        %1588 = vrot.lane.b32.xlu0 %v676, 64
        %v1589 = vpop.permute.xlu0 %1588
        %1590 = vrot.lane.b32.xlu0 %v677, 64
        %v1591 = vpop.permute.xlu0 %1590
        %1592 = vrot.lane.b32.xlu0 %v678, 64
        %v1593 = vpop.permute.xlu0 %1592
        %1594 = vrot.lane.b32.xlu0 %v679, 64
        %v1595 = vpop.permute.xlu0 %1594
        %1596 = vrot.lane.b32.xlu0 %v680, 64
        %v1597 = vpop.permute.xlu0 %1596
        %1598 = vrot.lane.b32.xlu0 %v681, 64
        %v1599 = vpop.permute.xlu0 %1598
        %1600 = vrot.lane.b32.xlu0 %v682, 64
        %v1601 = vpop.permute.xlu0 %1600
        %1602 = vrot.lane.b32.xlu0 %v683, 64
        %v1603 = vpop.permute.xlu0 %1602
        %1604 = vrot.lane.b32.xlu0 %v684, 64
        %v1605 = vpop.permute.xlu0 %1604
        %1606 = vrot.lane.b32.xlu0 %v685, 64
        %v1607 = vpop.permute.xlu0 %1606
        %1608 = vrot.lane.b32.xlu0 %v686, 64
        %v1609 = vpop.permute.xlu0 %1608
        %1610 = vrot.lane.b32.xlu0 %v687, 64
        %v1611 = vpop.permute.xlu0 %1610
        %1612 = vrot.lane.b32.xlu0 %v688, 64
        %v1613 = vpop.permute.xlu0 %1612
        %1614 = vrot.lane.b32.xlu0 %v689, 64
        %v1615 = vpop.permute.xlu0 %1614
        %1616 = vrot.lane.b32.xlu0 %v690, 64
        %v1617 = vpop.permute.xlu0 %1616
        %1618 = vrot.lane.b32.xlu0 %v691, 64
        %v1619 = vpop.permute.xlu0 %1618
        %1620 = vrot.lane.b32.xlu0 %v692, 64
        %v1621 = vpop.permute.xlu0 %1620
        %1622 = vrot.lane.b32.xlu0 %v693, 64
        %v1623 = vpop.permute.xlu0 %1622
        %vm1686 = vcmask 130048
        %v1687 = vsel %vm1686, %v384, %v757
        %v1688 = vsel %vm1686, %v385, %v759
        %v1689 = vsel %vm1686, %v386, %v761
        %v1690 = vsel %vm1686, %v387, %v763
        %v1691 = vsel %vm1686, %v388, %v765
        %v1692 = vsel %vm1686, %v389, %v767
        %v1693 = vsel %vm1686, %v390, %v769
        %v1694 = vsel %vm1686, %v391, %v771
        %v1695 = vsel %vm1686, %v392, %v773
        %v1696 = vsel %vm1686, %v393, %v775
        %v1697 = vsel %vm1686, %v394, %v777
        %v1698 = vsel %vm1686, %v395, %v779
        %v1699 = vsel %vm1686, %v396, %v781
        %v1700 = vsel %vm1686, %v397, %v783
        %v1701 = vsel %vm1686, %v398, %v785
        %v1702 = vsel %vm1686, %v399, %v787
        %v1703 = vsel %vm1686, %v400, %v789
        %v1704 = vsel %vm1686, %v401, %v791
        %v1705 = vsel %vm1686, %v402, %v793
        %v1706 = vsel %vm1686, %v403, %v795
        %v1707 = vsel %vm1686, %v404, %v797
        %v1708 = vsel %vm1686, %v405, %v799
        %v1709 = vsel %vm1686, %v406, %v801
        %v1710 = vsel %vm1686, %v407, %v803
        %v1711 = vsel %vm1686, %v408, %v805
        %v1712 = vsel %vm1686, %v409, %v807
        %v1713 = vsel %vm1686, %v410, %v809
        %v1714 = vsel %vm1686, %v411, %v811
        %v1715 = vsel %vm1686, %v412, %v813
        %v1716 = vsel %vm1686, %v413, %v815
        %v1717 = vsel %vm1686, %v414, %v817
        %v1718 = vsel %vm1686, %v415, %v819
        %v1719 = vsel %vm1686, %v416, %v821
        %v1720 = vsel %vm1686, %v417, %v823
        %v1721 = vsel %vm1686, %v418, %v825
        %v1722 = vsel %vm1686, %v419, %v827
        %v1723 = vsel %vm1686, %v420, %v829
        %v1724 = vsel %vm1686, %v421, %v831
        %v1725 = vsel %vm1686, %v422, %v833
        %v1726 = vsel %vm1686, %v423, %v835
        %v1727 = vsel %vm1686, %v424, %v837
        %v1728 = vsel %vm1686, %v425, %v839
        %v1729 = vsel %vm1686, %v426, %v841
        %v1730 = vsel %vm1686, %v427, %v843
        %v1731 = vsel %vm1686, %v428, %v845
        %v1732 = vsel %vm1686, %v429, %v847
        %v1733 = vsel %vm1686, %v430, %v849
        %v1734 = vsel %vm1686, %v431, %v851
        %v1735 = vsel %vm1686, %v432, %v853
        %v1736 = vsel %vm1686, %v433, %v855
        %v1737 = vsel %vm1686, %v434, %v857
        %v1738 = vsel %vm1686, %v435, %v859
        %v1739 = vsel %vm1686, %v436, %v861
        %v1740 = vsel %vm1686, %v437, %v863
        %v1741 = vsel %vm1686, %v438, %v865
        %v1742 = vsel %vm1686, %v439, %v867
        %v1743 = vsel %vm1686, %v440, %v869
        %v1744 = vsel %vm1686, %v441, %v871
        %v1745 = vsel %vm1686, %v442, %v873
        %v1746 = vsel %vm1686, %v443, %v875
        %v1747 = vsel %vm1686, %v444, %v877
        %v1748 = vsel %vm1686, %v445, %v879
        %vm1749 = vcmask 261120
        %v1750 = vsel %vm1749, %v1687, %v1005
        %v1751 = vsel %vm1749, %v1688, %v1007
        %v1752 = vsel %vm1749, %v1689, %v1009
        %v1753 = vsel %vm1749, %v1690, %v1011
        %v1754 = vsel %vm1749, %v1691, %v1013
        %v1755 = vsel %vm1749, %v1692, %v1015
        %v1756 = vsel %vm1749, %v1693, %v1017
        %v1757 = vsel %vm1749, %v1694, %v1019
        %v1758 = vsel %vm1749, %v1695, %v1021
        %v1759 = vsel %vm1749, %v1696, %v1023
        %v1760 = vsel %vm1749, %v1697, %v1025
        %v1761 = vsel %vm1749, %v1698, %v1027
        %v1762 = vsel %vm1749, %v1699, %v1029
        %v1763 = vsel %vm1749, %v1700, %v1031
        %v1764 = vsel %vm1749, %v1701, %v1033
        %v1765 = vsel %vm1749, %v1702, %v1035
        %v1766 = vsel %vm1749, %v1703, %v1037
        %v1767 = vsel %vm1749, %v1704, %v1039
        %v1768 = vsel %vm1749, %v1705, %v1041
        %v1769 = vsel %vm1749, %v1706, %v1043
        %v1770 = vsel %vm1749, %v1707, %v1045
        %v1771 = vsel %vm1749, %v1708, %v1047
        %v1772 = vsel %vm1749, %v1709, %v1049
        %v1773 = vsel %vm1749, %v1710, %v1051
        %v1774 = vsel %vm1749, %v1711, %v1053
        %v1775 = vsel %vm1749, %v1712, %v1055
        %v1776 = vsel %vm1749, %v1713, %v1057
        %v1777 = vsel %vm1749, %v1714, %v1059
        %v1778 = vsel %vm1749, %v1715, %v1061
        %v1779 = vsel %vm1749, %v1716, %v1063
        %v1780 = vsel %vm1749, %v1717, %v1065
        %v1781 = vsel %vm1749, %v1718, %v1067
        %v1782 = vsel %vm1749, %v1719, %v1069
        %v1783 = vsel %vm1749, %v1720, %v1071
        %v1784 = vsel %vm1749, %v1721, %v1073
        %v1785 = vsel %vm1749, %v1722, %v1075
        %v1786 = vsel %vm1749, %v1723, %v1077
        %v1787 = vsel %vm1749, %v1724, %v1079
        %v1788 = vsel %vm1749, %v1725, %v1081
        %v1789 = vsel %vm1749, %v1726, %v1083
        %v1790 = vsel %vm1749, %v1727, %v1085
        %v1791 = vsel %vm1749, %v1728, %v1087
        %v1792 = vsel %vm1749, %v1729, %v1089
        %v1793 = vsel %vm1749, %v1730, %v1091
        %v1794 = vsel %vm1749, %v1731, %v1093
        %v1795 = vsel %vm1749, %v1732, %v1095
        %v1796 = vsel %vm1749, %v1733, %v1097
        %v1797 = vsel %vm1749, %v1734, %v1099
        %v1798 = vsel %vm1749, %v1735, %v1101
        %v1799 = vsel %vm1749, %v1736, %v1103
        %v1800 = vsel %vm1749, %v1737, %v1105
        %v1801 = vsel %vm1749, %v1738, %v1107
        %v1802 = vsel %vm1749, %v1739, %v1109
        %v1803 = vsel %vm1749, %v1740, %v1111
        %v1804 = vsel %vm1749, %v1741, %v1113
        %v1805 = vsel %vm1749, %v1742, %v1115
        %v1806 = vsel %vm1749, %v1743, %v1117
        %v1807 = vsel %vm1749, %v1744, %v1119
        %v1808 = vsel %vm1749, %v1745, %v1121
        %v1809 = vsel %vm1749, %v1746, %v1123
        %v1810 = vsel %vm1749, %v1747, %v1125
        %v1811 = vsel %vm1749, %v1748, %v1127
        %vm1812 = vcmask 392192
        %v1813 = vsel %vm1812, %v1750, %v1253
        %v1814 = vsel %vm1812, %v1751, %v1255
        %v1815 = vsel %vm1812, %v1752, %v1257
        %v1816 = vsel %vm1812, %v1753, %v1259
        %v1817 = vsel %vm1812, %v1754, %v1261
        %v1818 = vsel %vm1812, %v1755, %v1263
        %v1819 = vsel %vm1812, %v1756, %v1265
        %v1820 = vsel %vm1812, %v1757, %v1267
        %v1821 = vsel %vm1812, %v1758, %v1269
        %v1822 = vsel %vm1812, %v1759, %v1271
        %v1823 = vsel %vm1812, %v1760, %v1273
        %v1824 = vsel %vm1812, %v1761, %v1275
        %v1825 = vsel %vm1812, %v1762, %v1277
        %v1826 = vsel %vm1812, %v1763, %v1279
        %v1827 = vsel %vm1812, %v1764, %v1281
        %v1828 = vsel %vm1812, %v1765, %v1283
        %v1829 = vsel %vm1812, %v1766, %v1285
        %v1830 = vsel %vm1812, %v1767, %v1287
        %v1831 = vsel %vm1812, %v1768, %v1289
        %v1832 = vsel %vm1812, %v1769, %v1291
        %v1833 = vsel %vm1812, %v1770, %v1293
        %v1834 = vsel %vm1812, %v1771, %v1295
        %v1835 = vsel %vm1812, %v1772, %v1297
        %v1836 = vsel %vm1812, %v1773, %v1299
        %v1837 = vsel %vm1812, %v1774, %v1301
        %v1838 = vsel %vm1812, %v1775, %v1303
        %v1839 = vsel %vm1812, %v1776, %v1305
        %v1840 = vsel %vm1812, %v1777, %v1307
        %v1841 = vsel %vm1812, %v1778, %v1309
        %v1842 = vsel %vm1812, %v1779, %v1311
        %v1843 = vsel %vm1812, %v1780, %v1313
        %v1844 = vsel %vm1812, %v1781, %v1315
        %v1845 = vsel %vm1812, %v1782, %v1317
        %v1846 = vsel %vm1812, %v1783, %v1319
        %v1847 = vsel %vm1812, %v1784, %v1321
        %v1848 = vsel %vm1812, %v1785, %v1323
        %v1849 = vsel %vm1812, %v1786, %v1325
        %v1850 = vsel %vm1812, %v1787, %v1327
        %v1851 = vsel %vm1812, %v1788, %v1329
        %v1852 = vsel %vm1812, %v1789, %v1331
        %v1853 = vsel %vm1812, %v1790, %v1333
        %v1854 = vsel %vm1812, %v1791, %v1335
        %v1855 = vsel %vm1812, %v1792, %v1337
        %v1856 = vsel %vm1812, %v1793, %v1339
        %v1857 = vsel %vm1812, %v1794, %v1341
        %v1858 = vsel %vm1812, %v1795, %v1343
        %v1859 = vsel %vm1812, %v1796, %v1345
        %v1860 = vsel %vm1812, %v1797, %v1347
        %v1861 = vsel %vm1812, %v1798, %v1349
        %v1862 = vsel %vm1812, %v1799, %v1351
        %v1863 = vsel %vm1812, %v1800, %v1353
        %v1864 = vsel %vm1812, %v1801, %v1355
        %v1865 = vsel %vm1812, %v1802, %v1357
        %v1866 = vsel %vm1812, %v1803, %v1359
        %v1867 = vsel %vm1812, %v1804, %v1361
        %v1868 = vsel %vm1812, %v1805, %v1363
        %v1869 = vsel %vm1812, %v1806, %v1365
        %v1870 = vsel %vm1812, %v1807, %v1367
        %v1871 = vsel %vm1812, %v1808, %v1369
        %v1872 = vsel %vm1812, %v1809, %v1371
        %v1873 = vsel %vm1812, %v1810, %v1373
        %v1874 = vsel %vm1812, %v1811, %v1375
        %vm1875 = vcmask 523264
        %v1876 = vsel %vm1875, %v1813, %v1501
        %v1877 = vsel %vm1875, %v1814, %v1503
        %v1878 = vsel %vm1875, %v1815, %v1505
        %v1879 = vsel %vm1875, %v1816, %v1507
        %v1880 = vsel %vm1875, %v1817, %v1509
        %v1881 = vsel %vm1875, %v1818, %v1511
        %v1882 = vsel %vm1875, %v1819, %v1513
        %v1883 = vsel %vm1875, %v1820, %v1515
        %v1884 = vsel %vm1875, %v1821, %v1517
        %v1885 = vsel %vm1875, %v1822, %v1519
        %v1886 = vsel %vm1875, %v1823, %v1521
        %v1887 = vsel %vm1875, %v1824, %v1523
        %v1888 = vsel %vm1875, %v1825, %v1525
        %v1889 = vsel %vm1875, %v1826, %v1527
        %v1890 = vsel %vm1875, %v1827, %v1529
        %v1891 = vsel %vm1875, %v1828, %v1531
        %v1892 = vsel %vm1875, %v1829, %v1533
        %v1893 = vsel %vm1875, %v1830, %v1535
        %v1894 = vsel %vm1875, %v1831, %v1537
        %v1895 = vsel %vm1875, %v1832, %v1539
        %v1896 = vsel %vm1875, %v1833, %v1541
        %v1897 = vsel %vm1875, %v1834, %v1543
        %v1898 = vsel %vm1875, %v1835, %v1545
        %v1899 = vsel %vm1875, %v1836, %v1547
        %v1900 = vsel %vm1875, %v1837, %v1549
        %v1901 = vsel %vm1875, %v1838, %v1551
        %v1902 = vsel %vm1875, %v1839, %v1553
        %v1903 = vsel %vm1875, %v1840, %v1555
        %v1904 = vsel %vm1875, %v1841, %v1557
        %v1905 = vsel %vm1875, %v1842, %v1559
        %v1906 = vsel %vm1875, %v1843, %v1561
        %v1907 = vsel %vm1875, %v1844, %v1563
        %v1908 = vsel %vm1875, %v1845, %v1565
        %v1909 = vsel %vm1875, %v1846, %v1567
        %v1910 = vsel %vm1875, %v1847, %v1569
        %v1911 = vsel %vm1875, %v1848, %v1571
        %v1912 = vsel %vm1875, %v1849, %v1573
        %v1913 = vsel %vm1875, %v1850, %v1575
        %v1914 = vsel %vm1875, %v1851, %v1577
        %v1915 = vsel %vm1875, %v1852, %v1579
        %v1916 = vsel %vm1875, %v1853, %v1581
        %v1917 = vsel %vm1875, %v1854, %v1583
        %v1918 = vsel %vm1875, %v1855, %v1585
        %v1919 = vsel %vm1875, %v1856, %v1587
        %v1920 = vsel %vm1875, %v1857, %v1589
        %v1921 = vsel %vm1875, %v1858, %v1591
        %v1922 = vsel %vm1875, %v1859, %v1593
        %v1923 = vsel %vm1875, %v1860, %v1595
        %v1924 = vsel %vm1875, %v1861, %v1597
        %v1925 = vsel %vm1875, %v1862, %v1599
        %v1926 = vsel %vm1875, %v1863, %v1601
        %v1927 = vsel %vm1875, %v1864, %v1603
        %v1928 = vsel %vm1875, %v1865, %v1605
        %v1929 = vsel %vm1875, %v1866, %v1607
        %v1930 = vsel %vm1875, %v1867, %v1609
        %v1931 = vsel %vm1875, %v1868, %v1611
        %v1932 = vsel %vm1875, %v1869, %v1613
        %v1933 = vsel %vm1875, %v1870, %v1615
        %v1934 = vsel %vm1875, %v1871, %v1617
        %v1935 = vsel %vm1875, %v1872, %v1619
        %v1936 = vsel %vm1875, %v1873, %v1621
        %v1937 = vsel %vm1875, %v1874, %v1623
        %v1938 = vld [vmem:[%s1] sm:$0xff]
        %v1939 = vld [vmem:[%s1 + $0x8] sm:$0xff]
        %v1940 = vld [vmem:[%s1 + $0x10] sm:$0xff]
        %v1941 = vld [vmem:[%s1 + $0x18] sm:$0xff]
        %v1942 = vld [vmem:[%s1 + $0x20] sm:$0xff]
        %v1943 = vld [vmem:[%s1 + $0x28] sm:$0xff]
        %v1944 = vld [vmem:[%s1 + $0x30] sm:$0xff]
        %v1945 = vld [vmem:[%s1 + $0x38] sm:$0xff]
        %v1946 = vld [vmem:[%s1 + $0x40] sm:$0xff]
        %v1947 = vld [vmem:[%s1 + $0x48] sm:$0xff]
        %v1948 = vld [vmem:[%s2] sm:$0x1]
        %v1950 = vlaneseq
        %v1951 = vshrl.u32 %v1950, 7
        %v1952 = vsub.s32 0, %v1951
        %v1953 = vrot.slane %v1948, %v1952
        %vm1955 = vcmask 654336
        %v1957 = vsel %vm1955, %v1876, 0
        %v1960 = vsel %vm1955, %v1877, 0
        %v1963 = vsel %vm1955, %v1878, 0
        %v1966 = vsel %vm1955, %v1879, 0
        %v1969 = vsel %vm1955, %v1880, 0
        %v1972 = vsel %vm1955, %v1881, 0
        %v1975 = vsel %vm1955, %v1882, 0
        %v1978 = vsel %vm1955, %v1883, 0
        %v1981 = vsel %vm1955, %v1884, 0
        %v1984 = vsel %vm1955, %v1885, 0
        %v1987 = vsel %vm1955, %v1886, 0
        %v1990 = vsel %vm1955, %v1887, 0
        %v1993 = vsel %vm1955, %v1888, 0
        %v1996 = vsel %vm1955, %v1889, 0
        %v1999 = vsel %vm1955, %v1890, 0
        %v2002 = vsel %vm1955, %v1891, 0
        %v2005 = vsel %vm1955, %v1892, 0
        %v2008 = vsel %vm1955, %v1893, 0
        %v2011 = vsel %vm1955, %v1894, 0
        %v2014 = vsel %vm1955, %v1895, 0
        %v2017 = vsel %vm1955, %v1896, 0
        %v2020 = vsel %vm1955, %v1897, 0
        %v2023 = vsel %vm1955, %v1898, 0
        %v2026 = vsel %vm1955, %v1899, 0
        %v2029 = vsel %vm1955, %v1900, 0
        %v2032 = vsel %vm1955, %v1901, 0
        %v2035 = vsel %vm1955, %v1902, 0
        %v2038 = vsel %vm1955, %v1903, 0
        %v2041 = vsel %vm1955, %v1904, 0
        %v2044 = vsel %vm1955, %v1905, 0
        %v2047 = vsel %vm1955, %v1906, 0
        %v2050 = vsel %vm1955, %v1907, 0
        %v2053 = vsel %vm1955, %v1908, 0
        %v2056 = vsel %vm1955, %v1909, 0
        %v2059 = vsel %vm1955, %v1910, 0
        %v2062 = vsel %vm1955, %v1911, 0
        %v2065 = vsel %vm1955, %v1912, 0
        %v2068 = vsel %vm1955, %v1913, 0
        %v2071 = vsel %vm1955, %v1914, 0
        %v2074 = vsel %vm1955, %v1915, 0
        %v2077 = vsel %vm1955, %v1916, 0
        %v2080 = vsel %vm1955, %v1917, 0
        %v2083 = vsel %vm1955, %v1918, 0
        %v2086 = vsel %vm1955, %v1919, 0
        %v2089 = vsel %vm1955, %v1920, 0
        %v2092 = vsel %vm1955, %v1921, 0
        %v2095 = vsel %vm1955, %v1922, 0
        %v2098 = vsel %vm1955, %v1923, 0
        %v2101 = vsel %vm1955, %v1924, 0
        %v2104 = vsel %vm1955, %v1925, 0
        %v2107 = vsel %vm1955, %v1926, 0
        %v2110 = vsel %vm1955, %v1927, 0
        %v2113 = vsel %vm1955, %v1928, 0
        %v2116 = vsel %vm1955, %v1929, 0
        %v2119 = vsel %vm1955, %v1930, 0
        %v2122 = vsel %vm1955, %v1931, 0
        %v2125 = vsel %vm1955, %v1932, 0
        %v2128 = vsel %vm1955, %v1933, 0
        %v2131 = vsel %vm1955, %v1934, 0
        %v2134 = vsel %vm1955, %v1935, 0
        %v2137 = vsel %vm1955, %v1936, 0
        %v2140 = vsel %vm1955, %v1937, 0
        %2142 = vmatprep.subr.mxu0 0.0
        %2143 = vmatpush1.msra.mxu0 %v1938
        %2144 = vmatprep.subr.mxu0 0.0
        %2145 = vmatpush1.msra.mxu0 %v1939
        %2146 = vmatprep.subr.mxu0 0.0
        %2147 = vmatpush1.msra.mxu0 %v1940
        %2148 = vmatprep.subr.mxu0 0.0
        %2149 = vmatpush1.msra.mxu0 %v1941
        %2150 = vmatprep.subr.mxu0 0.0
        %2151 = vmatpush1.msra.mxu0 %v1942
        %2152 = vmatprep.subr.mxu0 0.0
        %2153 = vmatpush1.msra.mxu0 %v1943
        %2154 = vmatprep.subr.mxu0 0.0
        %2155 = vmatpush1.msra.mxu0 %v1944
        %2156 = vmatprep.subr.mxu0 0.0
        %2157 = vmatpush1.msra.mxu0 %v1945
        %2158 = vmatprep.subr.mxu0 0.0
        %2159 = vmatpush1.msra.mxu0 %v1946
        %2160 = vmatprep.subr.mxu0 0.0
        %2161 = vmatpush1.msra.mxu0 %v1947
        %2162 = vmatprep.subr.mxu0 0.0
        %2163 = vmatpush1.msra.mxu0 0.0
        %2164 = vmatprep.subr.mxu0 0.0
        %2165 = vmatpush1.msra.mxu0 0.0
        %2166 = vmatprep.subr.mxu0 0.0
        %2167 = vmatpush1.msra.mxu0 0.0
        %2168 = vmatprep.subr.mxu0 0.0
        %2169 = vmatpush1.msra.mxu0 0.0
        %2170 = vmatprep.subr.mxu0 0.0
        %2171 = vmatpush1.msra.mxu0 0.0
        %2172 = vmatprep.subr.mxu0 0.0
        %2173 = vmatpush1.msra.mxu0 0.0
        %2174 = vmatprep.subr.mxu0 0.0
        %2175 = vmatpush1.msra.mxu0 0.0
        %2176 = vmatprep.subr.mxu0 0.0
        %2177 = vmatpush1.msra.mxu0 0.0
        %2178 = vmatprep.subr.mxu0 0.0
        %2179 = vmatpush1.msra.mxu0 0.0
        %2180 = vmatprep.subr.mxu0 0.0
        %2181 = vmatpush1.msra.mxu0 0.0
        %2182 = vmatprep.subr.mxu0 0.0
        %2183 = vmatpush1.msra.mxu0 0.0
        %2184 = vmatprep.subr.mxu0 0.0
        %2185 = vmatpush1.msra.mxu0 0.0
        %2186 = vmatprep.subr.mxu0 0.0
        %2187 = vmatpush1.msra.mxu0 0.0
        %2188 = vmatprep.subr.mxu0 0.0
        %2189 = vmatpush1.msra.mxu0 0.0
        %2190 = vmatprep.subr.mxu0 0.0
        %2191 = vmatpush1.msra.mxu0 0.0
        %2192 = vmatprep.subr.mxu0 0.0
        %2193 = vmatpush1.msra.mxu0 0.0
        %2194 = vmatprep.subr.mxu0 0.0
        %2195 = vmatpush1.msra.mxu0 0.0
        %2196 = vmatprep.subr.mxu0 0.0
        %2197 = vmatpush1.msra.mxu0 0.0
        %2198 = vmatprep.subr.mxu0 0.0
        %2199 = vmatpush1.msra.mxu0 0.0
        %2200 = vmatprep.subr.mxu0 0.0
        %2201 = vmatpush1.msra.mxu0 0.0
        %2202 = vmatprep.subr.mxu0 0.0
        %2203 = vmatpush1.msra.mxu0 0.0
        %2204 = vmatprep.subr.mxu0 0.0
        %2205 = vmatpush1.msra.mxu0 0.0
        %2206 = vmatprep.mubr.f32.mxu0 0.0
        %2207 = vmatmul.mubr.f32.gmra.mrb[0].mxu0 %v1957
        %v2208 = vpop.f32.mrb[0].mxu0
        %v2209 = vadd.f32 %v1953, %v2208
        %v2210 = vpop.f32.mrb[0].mxu0
        %2211 = vmatprep.mubr.f32.mxu0 0.0
        %2212 = vmatmul.mubr.f32.gmra.mrb[0].mxu0 %v1960
        %v2213 = vpop.f32.mrb[0].mxu0
        %v2214 = vadd.f32 %v1953, %v2213
        %v2215 = vpop.f32.mrb[0].mxu0
        %2216 = vmatprep.mubr.f32.mxu0 0.0
        %2217 = vmatmul.mubr.f32.gmra.mrb[0].mxu0 %v1963
        %v2218 = vpop.f32.mrb[0].mxu0
        %v2219 = vadd.f32 %v1953, %v2218
        %v2220 = vpop.f32.mrb[0].mxu0
        %2221 = vmatprep.mubr.f32.mxu0 0.0
        %2222 = vmatmul.mubr.f32.gmra.mrb[0].mxu0 %v1966
        %v2223 = vpop.f32.mrb[0].mxu0
        %v2224 = vadd.f32 %v1953, %v2223
        %v2225 = vpop.f32.mrb[0].mxu0
        %2226 = vmatprep.mubr.f32.mxu0 0.0
        %2227 = vmatmul.mubr.f32.gmra.mrb[0].mxu0 %v1969
        %v2228 = vpop.f32.mrb[0].mxu0
        %v2229 = vadd.f32 %v1953, %v2228
        %v2230 = vpop.f32.mrb[0].mxu0
        %2231 = vmatprep.mubr.f32.mxu0 0.0
        %2232 = vmatmul.mubr.f32.gmra.mrb[0].mxu0 %v1972
        %v2233 = vpop.f32.mrb[0].mxu0
        %v2234 = vadd.f32 %v1953, %v2233
        %v2235 = vpop.f32.mrb[0].mxu0
        %2236 = vmatprep.mubr.f32.mxu0 0.0
        %2237 = vmatmul.mubr.f32.gmra.mrb[0].mxu0 %v1975
        %v2238 = vpop.f32.mrb[0].mxu0
        %v2239 = vadd.f32 %v1953, %v2238
        %v2240 = vpop.f32.mrb[0].mxu0
        %2241 = vmatprep.mubr.f32.mxu0 0.0
        %2242 = vmatmul.mubr.f32.gmra.mrb[0].mxu0 %v1978
        %v2243 = vpop.f32.mrb[0].mxu0
        %v2244 = vadd.f32 %v1953, %v2243
        %v2245 = vpop.f32.mrb[0].mxu0
        %2246 = vmatprep.mubr.f32.mxu0 0.0
        %2247 = vmatmul.mubr.f32.gmra.mrb[0].mxu0 %v1981
        %v2248 = vpop.f32.mrb[0].mxu0
        %v2249 = vadd.f32 %v1953, %v2248
        %v2250 = vpop.f32.mrb[0].mxu0
        %2251 = vmatprep.mubr.f32.mxu0 0.0
        %2252 = vmatmul.mubr.f32.gmra.mrb[0].mxu0 %v1984
        %v2253 = vpop.f32.mrb[0].mxu0
        %v2254 = vadd.f32 %v1953, %v2253
        %v2255 = vpop.f32.mrb[0].mxu0
        %2256 = vmatprep.mubr.f32.mxu0 0.0
        %2257 = vmatmul.mubr.f32.gmra.mrb[0].mxu0 %v1987
        %v2258 = vpop.f32.mrb[0].mxu0
        %v2259 = vadd.f32 %v1953, %v2258
        %v2260 = vpop.f32.mrb[0].mxu0
        %2261 = vmatprep.mubr.f32.mxu0 0.0
        %2262 = vmatmul.mubr.f32.gmra.mrb[0].mxu0 %v1990
        %v2263 = vpop.f32.mrb[0].mxu0
        %v2264 = vadd.f32 %v1953, %v2263
        %v2265 = vpop.f32.mrb[0].mxu0
        %2266 = vmatprep.mubr.f32.mxu0 0.0
        %2267 = vmatmul.mubr.f32.gmra.mrb[0].mxu0 %v1993
        %v2268 = vpop.f32.mrb[0].mxu0
        %v2269 = vadd.f32 %v1953, %v2268
        %v2270 = vpop.f32.mrb[0].mxu0
        %2271 = vmatprep.mubr.f32.mxu0 0.0
        %2272 = vmatmul.mubr.f32.gmra.mrb[0].mxu0 %v1996
        %v2273 = vpop.f32.mrb[0].mxu0
        %v2274 = vadd.f32 %v1953, %v2273
        %v2275 = vpop.f32.mrb[0].mxu0
        %2276 = vmatprep.mubr.f32.mxu0 0.0
        %2277 = vmatmul.mubr.f32.gmra.mrb[0].mxu0 %v1999
        %v2278 = vpop.f32.mrb[0].mxu0
        %v2279 = vadd.f32 %v1953, %v2278
        %v2280 = vpop.f32.mrb[0].mxu0
        %2281 = vmatprep.mubr.f32.mxu0 0.0
        %2282 = vmatmul.mubr.f32.gmra.mrb[0].mxu0 %v2002
        %v2283 = vpop.f32.mrb[0].mxu0
        %v2284 = vadd.f32 %v1953, %v2283
        %v2285 = vpop.f32.mrb[0].mxu0
        %2286 = vmatprep.mubr.f32.mxu0 0.0
        %2287 = vmatmul.mubr.f32.gmra.mrb[0].mxu0 %v2005
        %v2288 = vpop.f32.mrb[0].mxu0
        %v2289 = vadd.f32 %v1953, %v2288
        %v2290 = vpop.f32.mrb[0].mxu0
        %2291 = vmatprep.mubr.f32.mxu0 0.0
        %2292 = vmatmul.mubr.f32.gmra.mrb[0].mxu0 %v2008
        %v2293 = vpop.f32.mrb[0].mxu0
        %v2294 = vadd.f32 %v1953, %v2293
        %v2295 = vpop.f32.mrb[0].mxu0
        %2296 = vmatprep.mubr.f32.mxu0 0.0
        %2297 = vmatmul.mubr.f32.gmra.mrb[0].mxu0 %v2011
        %v2298 = vpop.f32.mrb[0].mxu0
        %v2299 = vadd.f32 %v1953, %v2298
        %v2300 = vpop.f32.mrb[0].mxu0
        %2301 = vmatprep.mubr.f32.mxu0 0.0
        %2302 = vmatmul.mubr.f32.gmra.mrb[0].mxu0 %v2014
        %v2303 = vpop.f32.mrb[0].mxu0
        %v2304 = vadd.f32 %v1953, %v2303
        %v2305 = vpop.f32.mrb[0].mxu0
        %2306 = vmatprep.mubr.f32.mxu0 0.0
        %2307 = vmatmul.mubr.f32.gmra.mrb[0].mxu0 %v2017
        %v2308 = vpop.f32.mrb[0].mxu0
        %v2309 = vadd.f32 %v1953, %v2308
        %v2310 = vpop.f32.mrb[0].mxu0
        %2311 = vmatprep.mubr.f32.mxu0 0.0
        %2312 = vmatmul.mubr.f32.gmra.mrb[0].mxu0 %v2020
        %v2313 = vpop.f32.mrb[0].mxu0
        %v2314 = vadd.f32 %v1953, %v2313
        %v2315 = vpop.f32.mrb[0].mxu0
        %2316 = vmatprep.mubr.f32.mxu0 0.0
        %2317 = vmatmul.mubr.f32.gmra.mrb[0].mxu0 %v2023
        %v2318 = vpop.f32.mrb[0].mxu0
        %v2319 = vadd.f32 %v1953, %v2318
        %v2320 = vpop.f32.mrb[0].mxu0
        %2321 = vmatprep.mubr.f32.mxu0 0.0
        %2322 = vmatmul.mubr.f32.gmra.mrb[0].mxu0 %v2026
        %v2323 = vpop.f32.mrb[0].mxu0
        %v2324 = vadd.f32 %v1953, %v2323
        %v2325 = vpop.f32.mrb[0].mxu0
        %2326 = vmatprep.mubr.f32.mxu0 0.0
        %2327 = vmatmul.mubr.f32.gmra.mrb[0].mxu0 %v2029
        %v2328 = vpop.f32.mrb[0].mxu0
        %v2329 = vadd.f32 %v1953, %v2328
        %v2330 = vpop.f32.mrb[0].mxu0
        %2331 = vmatprep.mubr.f32.mxu0 0.0
        %2332 = vmatmul.mubr.f32.gmra.mrb[0].mxu0 %v2032
        %v2333 = vpop.f32.mrb[0].mxu0
        %v2334 = vadd.f32 %v1953, %v2333
        %v2335 = vpop.f32.mrb[0].mxu0
        %2336 = vmatprep.mubr.f32.mxu0 0.0
        %2337 = vmatmul.mubr.f32.gmra.mrb[0].mxu0 %v2035
        %v2338 = vpop.f32.mrb[0].mxu0
        %v2339 = vadd.f32 %v1953, %v2338
        %v2340 = vpop.f32.mrb[0].mxu0
        %2341 = vmatprep.mubr.f32.mxu0 0.0
        %2342 = vmatmul.mubr.f32.gmra.mrb[0].mxu0 %v2038
        %v2343 = vpop.f32.mrb[0].mxu0
        %v2344 = vadd.f32 %v1953, %v2343
        %v2345 = vpop.f32.mrb[0].mxu0
        %2346 = vmatprep.mubr.f32.mxu0 0.0
        %2347 = vmatmul.mubr.f32.gmra.mrb[0].mxu0 %v2041
        %v2348 = vpop.f32.mrb[0].mxu0
        %v2349 = vadd.f32 %v1953, %v2348
        %v2350 = vpop.f32.mrb[0].mxu0
        %2351 = vmatprep.mubr.f32.mxu0 0.0
        %2352 = vmatmul.mubr.f32.gmra.mrb[0].mxu0 %v2044
        %v2353 = vpop.f32.mrb[0].mxu0
        %v2354 = vadd.f32 %v1953, %v2353
        %v2355 = vpop.f32.mrb[0].mxu0
        %2356 = vmatprep.mubr.f32.mxu0 0.0
        %2357 = vmatmul.mubr.f32.gmra.mrb[0].mxu0 %v2047
        %v2358 = vpop.f32.mrb[0].mxu0
        %v2359 = vadd.f32 %v1953, %v2358
        %v2360 = vpop.f32.mrb[0].mxu0
        %2361 = vmatprep.mubr.f32.mxu0 0.0
        %2362 = vmatmul.mubr.f32.gmra.mrb[0].mxu0 %v2050
        %v2363 = vpop.f32.mrb[0].mxu0
        %v2364 = vadd.f32 %v1953, %v2363
        %v2365 = vpop.f32.mrb[0].mxu0
        %2366 = vmatprep.mubr.f32.mxu0 0.0
        %2367 = vmatmul.mubr.f32.gmra.mrb[0].mxu0 %v2053
        %v2368 = vpop.f32.mrb[0].mxu0
        %v2369 = vadd.f32 %v1953, %v2368
        %v2370 = vpop.f32.mrb[0].mxu0
        %2371 = vmatprep.mubr.f32.mxu0 0.0
        %2372 = vmatmul.mubr.f32.gmra.mrb[0].mxu0 %v2056
        %v2373 = vpop.f32.mrb[0].mxu0
        %v2374 = vadd.f32 %v1953, %v2373
        %v2375 = vpop.f32.mrb[0].mxu0
        %2376 = vmatprep.mubr.f32.mxu0 0.0
        %2377 = vmatmul.mubr.f32.gmra.mrb[0].mxu0 %v2059
        %v2378 = vpop.f32.mrb[0].mxu0
        %v2379 = vadd.f32 %v1953, %v2378
        %v2380 = vpop.f32.mrb[0].mxu0
        %2381 = vmatprep.mubr.f32.mxu0 0.0
        %2382 = vmatmul.mubr.f32.gmra.mrb[0].mxu0 %v2062
        %v2383 = vpop.f32.mrb[0].mxu0
        %v2384 = vadd.f32 %v1953, %v2383
        %v2385 = vpop.f32.mrb[0].mxu0
        %2386 = vmatprep.mubr.f32.mxu0 0.0
        %2387 = vmatmul.mubr.f32.gmra.mrb[0].mxu0 %v2065
        %v2388 = vpop.f32.mrb[0].mxu0
        %v2389 = vadd.f32 %v1953, %v2388
        %v2390 = vpop.f32.mrb[0].mxu0
        %2391 = vmatprep.mubr.f32.mxu0 0.0
        %2392 = vmatmul.mubr.f32.gmra.mrb[0].mxu0 %v2068
        %v2393 = vpop.f32.mrb[0].mxu0
        %v2394 = vadd.f32 %v1953, %v2393
        %v2395 = vpop.f32.mrb[0].mxu0
        %2396 = vmatprep.mubr.f32.mxu0 0.0
        %2397 = vmatmul.mubr.f32.gmra.mrb[0].mxu0 %v2071
        %v2398 = vpop.f32.mrb[0].mxu0
        %v2399 = vadd.f32 %v1953, %v2398
        %v2400 = vpop.f32.mrb[0].mxu0
        %2401 = vmatprep.mubr.f32.mxu0 0.0
        %2402 = vmatmul.mubr.f32.gmra.mrb[0].mxu0 %v2074
        %v2403 = vpop.f32.mrb[0].mxu0
        %v2404 = vadd.f32 %v1953, %v2403
        %v2405 = vpop.f32.mrb[0].mxu0
        %2406 = vmatprep.mubr.f32.mxu0 0.0
        %2407 = vmatmul.mubr.f32.gmra.mrb[0].mxu0 %v2077
        %v2408 = vpop.f32.mrb[0].mxu0
        %v2409 = vadd.f32 %v1953, %v2408
        %v2410 = vpop.f32.mrb[0].mxu0
        %2411 = vmatprep.mubr.f32.mxu0 0.0
        %2412 = vmatmul.mubr.f32.gmra.mrb[0].mxu0 %v2080
        %v2413 = vpop.f32.mrb[0].mxu0
        %v2414 = vadd.f32 %v1953, %v2413
        %v2415 = vpop.f32.mrb[0].mxu0
        %2416 = vmatprep.mubr.f32.mxu0 0.0
        %2417 = vmatmul.mubr.f32.gmra.mrb[0].mxu0 %v2083
        %v2418 = vpop.f32.mrb[0].mxu0
        %v2419 = vadd.f32 %v1953, %v2418
        %v2420 = vpop.f32.mrb[0].mxu0
        %2421 = vmatprep.mubr.f32.mxu0 0.0
        %2422 = vmatmul.mubr.f32.gmra.mrb[0].mxu0 %v2086
        %v2423 = vpop.f32.mrb[0].mxu0
        %v2424 = vadd.f32 %v1953, %v2423
        %v2425 = vpop.f32.mrb[0].mxu0
        %2426 = vmatprep.mubr.f32.mxu0 0.0
        %2427 = vmatmul.mubr.f32.gmra.mrb[0].mxu0 %v2089
        %v2428 = vpop.f32.mrb[0].mxu0
        %v2429 = vadd.f32 %v1953, %v2428
        %v2430 = vpop.f32.mrb[0].mxu0
        %2431 = vmatprep.mubr.f32.mxu0 0.0
        %2432 = vmatmul.mubr.f32.gmra.mrb[0].mxu0 %v2092
        %v2433 = vpop.f32.mrb[0].mxu0
        %v2434 = vadd.f32 %v1953, %v2433
        %v2435 = vpop.f32.mrb[0].mxu0
        %2436 = vmatprep.mubr.f32.mxu0 0.0
        %2437 = vmatmul.mubr.f32.gmra.mrb[0].mxu0 %v2095
        %v2438 = vpop.f32.mrb[0].mxu0
        %v2439 = vadd.f32 %v1953, %v2438
        %v2440 = vpop.f32.mrb[0].mxu0
        %2441 = vmatprep.mubr.f32.mxu0 0.0
        %2442 = vmatmul.mubr.f32.gmra.mrb[0].mxu0 %v2098
        %v2443 = vpop.f32.mrb[0].mxu0
        %v2444 = vadd.f32 %v1953, %v2443
        %v2445 = vpop.f32.mrb[0].mxu0
        %2446 = vmatprep.mubr.f32.mxu0 0.0
        %2447 = vmatmul.mubr.f32.gmra.mrb[0].mxu0 %v2101
        %v2448 = vpop.f32.mrb[0].mxu0
        %v2449 = vadd.f32 %v1953, %v2448
        %v2450 = vpop.f32.mrb[0].mxu0
        %2451 = vmatprep.mubr.f32.mxu0 0.0
        %2452 = vmatmul.mubr.f32.gmra.mrb[0].mxu0 %v2104
        %v2453 = vpop.f32.mrb[0].mxu0
        %v2454 = vadd.f32 %v1953, %v2453
        %v2455 = vpop.f32.mrb[0].mxu0
        %2456 = vmatprep.mubr.f32.mxu0 0.0
        %2457 = vmatmul.mubr.f32.gmra.mrb[0].mxu0 %v2107
        %v2458 = vpop.f32.mrb[0].mxu0
        %v2459 = vadd.f32 %v1953, %v2458
        %v2460 = vpop.f32.mrb[0].mxu0
        %2461 = vmatprep.mubr.f32.mxu0 0.0
        %2462 = vmatmul.mubr.f32.gmra.mrb[0].mxu0 %v2110
        %v2463 = vpop.f32.mrb[0].mxu0
        %v2464 = vadd.f32 %v1953, %v2463
        %v2465 = vpop.f32.mrb[0].mxu0
        %2466 = vmatprep.mubr.f32.mxu0 0.0
        %2467 = vmatmul.mubr.f32.gmra.mrb[0].mxu0 %v2113
        %v2468 = vpop.f32.mrb[0].mxu0
        %v2469 = vadd.f32 %v1953, %v2468
        %v2470 = vpop.f32.mrb[0].mxu0
        %2471 = vmatprep.mubr.f32.mxu0 0.0
        %2472 = vmatmul.mubr.f32.gmra.mrb[0].mxu0 %v2116
        %v2473 = vpop.f32.mrb[0].mxu0
        %v2474 = vadd.f32 %v1953, %v2473
        %v2475 = vpop.f32.mrb[0].mxu0
        %2476 = vmatprep.mubr.f32.mxu0 0.0
        %2477 = vmatmul.mubr.f32.gmra.mrb[0].mxu0 %v2119
        %v2478 = vpop.f32.mrb[0].mxu0
        %v2479 = vadd.f32 %v1953, %v2478
        %v2480 = vpop.f32.mrb[0].mxu0
        %2481 = vmatprep.mubr.f32.mxu0 0.0
        %2482 = vmatmul.mubr.f32.gmra.mrb[0].mxu0 %v2122
        %v2483 = vpop.f32.mrb[0].mxu0
        %v2484 = vadd.f32 %v1953, %v2483
        %v2485 = vpop.f32.mrb[0].mxu0
        %2486 = vmatprep.mubr.f32.mxu0 0.0
        %2487 = vmatmul.mubr.f32.gmra.mrb[0].mxu0 %v2125
        %v2488 = vpop.f32.mrb[0].mxu0
        %v2489 = vadd.f32 %v1953, %v2488
        %v2490 = vpop.f32.mrb[0].mxu0
        %2491 = vmatprep.mubr.f32.mxu0 0.0
        %2492 = vmatmul.mubr.f32.gmra.mrb[0].mxu0 %v2128
        %v2493 = vpop.f32.mrb[0].mxu0
        %v2494 = vadd.f32 %v1953, %v2493
        %v2495 = vpop.f32.mrb[0].mxu0
        %2496 = vmatprep.mubr.f32.mxu0 0.0
        %2497 = vmatmul.mubr.f32.gmra.mrb[0].mxu0 %v2131
        %v2498 = vpop.f32.mrb[0].mxu0
        %v2499 = vadd.f32 %v1953, %v2498
        %v2500 = vpop.f32.mrb[0].mxu0
        %2501 = vmatprep.mubr.f32.mxu0 0.0
        %2502 = vmatmul.mubr.f32.gmra.mrb[0].mxu0 %v2134
        %v2503 = vpop.f32.mrb[0].mxu0
        %v2504 = vadd.f32 %v1953, %v2503
        %v2505 = vpop.f32.mrb[0].mxu0
        %2506 = vmatprep.mubr.f32.mxu0 0.0
        %2507 = vmatmul.mubr.f32.gmra.mrb[0].mxu0 %v2137
        %v2508 = vpop.f32.mrb[0].mxu0
        %v2509 = vadd.f32 %v1953, %v2508
        %v2510 = vpop.f32.mrb[0].mxu0
        %2511 = vmatprep.mubr.f32.mxu0 0.0
        %2512 = vmatmul.mubr.f32.gmra.mrb[0].mxu0 %v2140
        %v2513 = vpop.f32.mrb[0].mxu0
        %v2514 = vadd.f32 %v1953, %v2513
        %v2515 = vpop.f32.mrb[0].mxu0
        %2516 = vdwg.mxu0
        %v2517 = vmax.f32 %v2209, 0.0
        %v2518 = vmax.f32 %v2214, 0.0
        %v2519 = vmax.f32 %v2219, 0.0
        %v2520 = vmax.f32 %v2224, 0.0
        %v2521 = vmax.f32 %v2229, 0.0
        %v2522 = vmax.f32 %v2234, 0.0
        %v2523 = vmax.f32 %v2239, 0.0
        %v2524 = vmax.f32 %v2244, 0.0
        %v2525 = vmax.f32 %v2249, 0.0
        %v2526 = vmax.f32 %v2254, 0.0
        %v2527 = vmax.f32 %v2259, 0.0
        %v2528 = vmax.f32 %v2264, 0.0
        %v2529 = vmax.f32 %v2269, 0.0
        %v2530 = vmax.f32 %v2274, 0.0
        %v2531 = vmax.f32 %v2279, 0.0
        %v2532 = vmax.f32 %v2284, 0.0
        %v2533 = vmax.f32 %v2289, 0.0
        %v2534 = vmax.f32 %v2294, 0.0
        %v2535 = vmax.f32 %v2299, 0.0
        %v2536 = vmax.f32 %v2304, 0.0
        %v2537 = vmax.f32 %v2309, 0.0
        %v2538 = vmax.f32 %v2314, 0.0
        %v2539 = vmax.f32 %v2319, 0.0
        %v2540 = vmax.f32 %v2324, 0.0
        %v2541 = vmax.f32 %v2329, 0.0
        %v2542 = vmax.f32 %v2334, 0.0
        %v2543 = vmax.f32 %v2339, 0.0
        %v2544 = vmax.f32 %v2344, 0.0
        %v2545 = vmax.f32 %v2349, 0.0
        %v2546 = vmax.f32 %v2354, 0.0
        %v2547 = vmax.f32 %v2359, 0.0
        %v2548 = vmax.f32 %v2364, 0.0
        %v2549 = vmax.f32 %v2369, 0.0
        %v2550 = vmax.f32 %v2374, 0.0
        %v2551 = vmax.f32 %v2379, 0.0
        %v2552 = vmax.f32 %v2384, 0.0
        %v2553 = vmax.f32 %v2389, 0.0
        %v2554 = vmax.f32 %v2394, 0.0
        %v2555 = vmax.f32 %v2399, 0.0
        %v2556 = vmax.f32 %v2404, 0.0
        %v2557 = vmax.f32 %v2409, 0.0
        %v2558 = vmax.f32 %v2414, 0.0
        %v2559 = vmax.f32 %v2419, 0.0
        %v2560 = vmax.f32 %v2424, 0.0
        %v2561 = vmax.f32 %v2429, 0.0
        %v2562 = vmax.f32 %v2434, 0.0
        %v2563 = vmax.f32 %v2439, 0.0
        %v2564 = vmax.f32 %v2444, 0.0
        %v2565 = vmax.f32 %v2449, 0.0
        %v2566 = vmax.f32 %v2454, 0.0
        %v2567 = vmax.f32 %v2459, 0.0
        %v2568 = vmax.f32 %v2464, 0.0
        %v2569 = vmax.f32 %v2469, 0.0
        %v2570 = vmax.f32 %v2474, 0.0
        %v2571 = vmax.f32 %v2479, 0.0
        %v2572 = vmax.f32 %v2484, 0.0
        %v2573 = vmax.f32 %v2489, 0.0
        %v2574 = vmax.f32 %v2494, 0.0
        %v2575 = vmax.f32 %v2499, 0.0
        %v2576 = vmax.f32 %v2504, 0.0
        %v2577 = vmax.f32 %v2509, 0.0
        %v2578 = vmax.f32 %v2514, 0.0
        %2579 = vst.msk [vmem:[#allocation2] sm:$0xff] %vm1749, %v2517
        %2580 = vst.msk [vmem:[#allocation2 + $0x8] sm:$0xff] %vm1749, %v2518
        %2581 = vst.msk [vmem:[#allocation2 + $0x10] sm:$0xff] %vm1749, %v2519
        %2582 = vst.msk [vmem:[#allocation2 + $0x18] sm:$0xff] %vm1749, %v2520
        %2583 = vst.msk [vmem:[#allocation2 + $0x20] sm:$0xff] %vm1749, %v2521
        %2584 = vst.msk [vmem:[#allocation2 + $0x28] sm:$0xff] %vm1749, %v2522
        %2585 = vst.msk [vmem:[#allocation2 + $0x30] sm:$0xff] %vm1749, %v2523
        %2586 = vst.msk [vmem:[#allocation2 + $0x38] sm:$0xff] %vm1749, %v2524
        %2587 = vst.msk [vmem:[#allocation2 + $0x40] sm:$0xff] %vm1749, %v2525
        %2588 = vst.msk [vmem:[#allocation2 + $0x48] sm:$0xff] %vm1749, %v2526
        %2589 = vst.msk [vmem:[#allocation2 + $0x50] sm:$0xff] %vm1749, %v2527
        %2590 = vst.msk [vmem:[#allocation2 + $0x58] sm:$0xff] %vm1749, %v2528
        %2591 = vst.msk [vmem:[#allocation2 + $0x60] sm:$0xff] %vm1749, %v2529
        %2592 = vst.msk [vmem:[#allocation2 + $0x68] sm:$0xff] %vm1749, %v2530
        %2593 = vst.msk [vmem:[#allocation2 + $0x70] sm:$0xff] %vm1749, %v2531
        %2594 = vst.msk [vmem:[#allocation2 + $0x78] sm:$0xff] %vm1749, %v2532
        %2595 = vst.msk [vmem:[#allocation2 + $0x80] sm:$0xff] %vm1749, %v2533
        %2596 = vst.msk [vmem:[#allocation2 + $0x88] sm:$0xff] %vm1749, %v2534
        %2597 = vst.msk [vmem:[#allocation2 + $0x90] sm:$0xff] %vm1749, %v2535
        %2598 = vst.msk [vmem:[#allocation2 + $0x98] sm:$0xff] %vm1749, %v2536
        %2599 = vst.msk [vmem:[#allocation2 + $0xa0] sm:$0xff] %vm1749, %v2537
        %2600 = vst.msk [vmem:[#allocation2 + $0xa8] sm:$0xff] %vm1749, %v2538
        %2601 = vst.msk [vmem:[#allocation2 + $0xb0] sm:$0xff] %vm1749, %v2539
        %2602 = vst.msk [vmem:[#allocation2 + $0xb8] sm:$0xff] %vm1749, %v2540
        %2603 = vst.msk [vmem:[#allocation2 + $0xc0] sm:$0xff] %vm1749, %v2541
        %2604 = vst.msk [vmem:[#allocation2 + $0xc8] sm:$0xff] %vm1749, %v2542
        %2605 = vst.msk [vmem:[#allocation2 + $0xd0] sm:$0xff] %vm1749, %v2543
        %2606 = vst.msk [vmem:[#allocation2 + $0xd8] sm:$0xff] %vm1749, %v2544
        %2607 = vst.msk [vmem:[#allocation2 + $0xe0] sm:$0xff] %vm1749, %v2545
        %2608 = vst.msk [vmem:[#allocation2 + $0xe8] sm:$0xff] %vm1749, %v2546
        %2609 = vst.msk [vmem:[#allocation2 + $0xf0] sm:$0xff] %vm1749, %v2547
        %2610 = vst.msk [vmem:[#allocation2 + $0xf8] sm:$0xff] %vm1749, %v2548
        %2611 = vst.msk [vmem:[#allocation2 + $0x100] sm:$0xff] %vm1749, %v2549
        %2612 = vst.msk [vmem:[#allocation2 + $0x108] sm:$0xff] %vm1749, %v2550
        %2613 = vst.msk [vmem:[#allocation2 + $0x110] sm:$0xff] %vm1749, %v2551
        %2614 = vst.msk [vmem:[#allocation2 + $0x118] sm:$0xff] %vm1749, %v2552
        %2615 = vst.msk [vmem:[#allocation2 + $0x120] sm:$0xff] %vm1749, %v2553
        %2616 = vst.msk [vmem:[#allocation2 + $0x128] sm:$0xff] %vm1749, %v2554
        %2617 = vst.msk [vmem:[#allocation2 + $0x130] sm:$0xff] %vm1749, %v2555
        %2618 = vst.msk [vmem:[#allocation2 + $0x138] sm:$0xff] %vm1749, %v2556
        %2619 = vst.msk [vmem:[#allocation2 + $0x140] sm:$0xff] %vm1749, %v2557
        %2620 = vst.msk [vmem:[#allocation2 + $0x148] sm:$0xff] %vm1749, %v2558
        %2621 = vst.msk [vmem:[#allocation2 + $0x150] sm:$0xff] %vm1749, %v2559
        %2622 = vst.msk [vmem:[#allocation2 + $0x158] sm:$0xff] %vm1749, %v2560
        %2623 = vst.msk [vmem:[#allocation2 + $0x160] sm:$0xff] %vm1749, %v2561
        %2624 = vst.msk [vmem:[#allocation2 + $0x168] sm:$0xff] %vm1749, %v2562
        %2625 = vst.msk [vmem:[#allocation2 + $0x170] sm:$0xff] %vm1749, %v2563
        %2626 = vst.msk [vmem:[#allocation2 + $0x178] sm:$0xff] %vm1749, %v2564
        %2627 = vst.msk [vmem:[#allocation2 + $0x180] sm:$0xff] %vm1749, %v2565
        %2628 = vst.msk [vmem:[#allocation2 + $0x188] sm:$0xff] %vm1749, %v2566
        %2629 = vst.msk [vmem:[#allocation2 + $0x190] sm:$0xff] %vm1749, %v2567
        %2630 = vst.msk [vmem:[#allocation2 + $0x198] sm:$0xff] %vm1749, %v2568
        %2631 = vst.msk [vmem:[#allocation2 + $0x1a0] sm:$0xff] %vm1749, %v2569
        %2632 = vst.msk [vmem:[#allocation2 + $0x1a8] sm:$0xff] %vm1749, %v2570
        %2633 = vst.msk [vmem:[#allocation2 + $0x1b0] sm:$0xff] %vm1749, %v2571
        %2634 = vst.msk [vmem:[#allocation2 + $0x1b8] sm:$0xff] %vm1749, %v2572
        %2635 = vst.msk [vmem:[#allocation2 + $0x1c0] sm:$0xff] %vm1749, %v2573
        %2636 = vst.msk [vmem:[#allocation2 + $0x1c8] sm:$0xff] %vm1749, %v2574
        %2637 = vst.msk [vmem:[#allocation2 + $0x1d0] sm:$0xff] %vm1749, %v2575
        %2638 = vst.msk [vmem:[#allocation2 + $0x1d8] sm:$0xff] %vm1749, %v2576
        %2639 = vst.msk [vmem:[#allocation2 + $0x1e0] sm:$0xff] %vm1749, %v2577
        %2640 = vst.msk [vmem:[#allocation2 + $0x1e8] sm:$0xff] %vm1749, %v2578
        %v2641 = vld [vmem:[#allocation2] ss:$4 sm:$0xff]
        %s2642 = scalar_lea.vmem [#allocation2], 32
        %v2643 = vld [vmem:[%s2642] ss:$4 sm:$0xff]
        %s2644 = scalar_lea.vmem [#allocation2], 64
        %v2645 = vld [vmem:[%s2644] ss:$4 sm:$0xff]
        %s2646 = scalar_lea.vmem [#allocation2], 96
        %v2647 = vld [vmem:[%s2646] ss:$4 sm:$0xff]
        %s2648 = scalar_lea.vmem [#allocation2], 128
        %v2649 = vld [vmem:[%s2648] ss:$4 sm:$0xff]
        %s2650 = scalar_lea.vmem [#allocation2], 160
        %v2651 = vld [vmem:[%s2650] ss:$4 sm:$0xff]
        %s2652 = scalar_lea.vmem [#allocation2], 192
        %v2653 = vld [vmem:[%s2652] ss:$4 sm:$0xff]
        %s2654 = scalar_lea.vmem [#allocation2], 224
        %v2655 = vld [vmem:[%s2654] ss:$4 sm:$0xff]
        %s2656 = scalar_lea.vmem [#allocation2], 256
        %v2657 = vld [vmem:[%s2656] ss:$4 sm:$0xff]
        %s2658 = scalar_lea.vmem [#allocation2], 288
        %v2659 = vld [vmem:[%s2658] ss:$4 sm:$0xff]
        %s2660 = scalar_lea.vmem [#allocation2], 320
        %v2661 = vld [vmem:[%s2660] ss:$4 sm:$0xff]
        %s2662 = scalar_lea.vmem [#allocation2], 352
        %v2663 = vld [vmem:[%s2662] ss:$4 sm:$0xff]
        %s2664 = scalar_lea.vmem [#allocation2], 384
        %v2665 = vld [vmem:[%s2664] ss:$4 sm:$0xff]
        %s2666 = scalar_lea.vmem [#allocation2], 416
        %v2667 = vld [vmem:[%s2666] ss:$4 sm:$0xff]
        %s2668 = scalar_lea.vmem [#allocation2], 448
        %v2669 = vld [vmem:[%s2668] ss:$4 sm:$0xff]
        %s2670 = scalar_lea.vmem [#allocation2], 480
        %v2671 = vld [vmem:[%s2670] ss:$4 sm:$0xf]
        %s2672 = scalar_lea.vmem [#allocation2], 1
        %v2673 = vld [vmem:[%s2672] ss:$4 sm:$0xff]
        %s2674 = scalar_lea.vmem [#allocation2], 33
        %v2675 = vld [vmem:[%s2674] ss:$4 sm:$0xff]
        %s2676 = scalar_lea.vmem [#allocation2], 65
        %v2677 = vld [vmem:[%s2676] ss:$4 sm:$0xff]
        %s2678 = scalar_lea.vmem [#allocation2], 97
        %v2679 = vld [vmem:[%s2678] ss:$4 sm:$0xff]
        %s2680 = scalar_lea.vmem [#allocation2], 129
        %v2681 = vld [vmem:[%s2680] ss:$4 sm:$0xff]
        %s2682 = scalar_lea.vmem [#allocation2], 161
        %v2683 = vld [vmem:[%s2682] ss:$4 sm:$0xff]
        %s2684 = scalar_lea.vmem [#allocation2], 193
        %v2685 = vld [vmem:[%s2684] ss:$4 sm:$0xff]
        %s2686 = scalar_lea.vmem [#allocation2], 225
        %v2687 = vld [vmem:[%s2686] ss:$4 sm:$0xff]
        %s2688 = scalar_lea.vmem [#allocation2], 257
        %v2689 = vld [vmem:[%s2688] ss:$4 sm:$0xff]
        %s2690 = scalar_lea.vmem [#allocation2], 289
        %v2691 = vld [vmem:[%s2690] ss:$4 sm:$0xff]
        %s2692 = scalar_lea.vmem [#allocation2], 321
        %v2693 = vld [vmem:[%s2692] ss:$4 sm:$0xff]
        %s2694 = scalar_lea.vmem [#allocation2], 353
        %v2695 = vld [vmem:[%s2694] ss:$4 sm:$0xff]
        %s2696 = scalar_lea.vmem [#allocation2], 385
        %v2697 = vld [vmem:[%s2696] ss:$4 sm:$0xff]
        %s2698 = scalar_lea.vmem [#allocation2], 417
        %v2699 = vld [vmem:[%s2698] ss:$4 sm:$0xff]
        %s2700 = scalar_lea.vmem [#allocation2], 449
        %v2701 = vld [vmem:[%s2700] ss:$4 sm:$0xff]
        %s2702 = scalar_lea.vmem [#allocation2], 481
        %v2703 = vld [vmem:[%s2702] ss:$4 sm:$0xf]
        %v2704 = vmax.f32 %v2641, %v2673
        %v2705 = vmax.f32 %v2643, %v2675
        %v2706 = vmax.f32 %v2645, %v2677
        %v2707 = vmax.f32 %v2647, %v2679
        %v2708 = vmax.f32 %v2649, %v2681
        %v2709 = vmax.f32 %v2651, %v2683
        %v2710 = vmax.f32 %v2653, %v2685
        %v2711 = vmax.f32 %v2655, %v2687
        %v2712 = vmax.f32 %v2657, %v2689
        %v2713 = vmax.f32 %v2659, %v2691
        %v2714 = vmax.f32 %v2661, %v2693
        %v2715 = vmax.f32 %v2663, %v2695
        %v2716 = vmax.f32 %v2665, %v2697
        %v2717 = vmax.f32 %v2667, %v2699
        %v2718 = vmax.f32 %v2669, %v2701
        %v2719 = vmax.f32 %v2671, %v2703
        %s2720 = scalar_lea.vmem [#allocation2], 2
        %v2721 = vld [vmem:[%s2720] ss:$4 sm:$0xff]
        %s2722 = scalar_lea.vmem [#allocation2], 34
        %v2723 = vld [vmem:[%s2722] ss:$4 sm:$0xff]
        %s2724 = scalar_lea.vmem [#allocation2], 66
        %v2725 = vld [vmem:[%s2724] ss:$4 sm:$0xff]
        %s2726 = scalar_lea.vmem [#allocation2], 98
        %v2727 = vld [vmem:[%s2726] ss:$4 sm:$0xff]
        %s2728 = scalar_lea.vmem [#allocation2], 130
        %v2729 = vld [vmem:[%s2728] ss:$4 sm:$0xff]
        %s2730 = scalar_lea.vmem [#allocation2], 162
        %v2731 = vld [vmem:[%s2730] ss:$4 sm:$0xff]
        %s2732 = scalar_lea.vmem [#allocation2], 194
        %v2733 = vld [vmem:[%s2732] ss:$4 sm:$0xff]
        %s2734 = scalar_lea.vmem [#allocation2], 226
        %v2735 = vld [vmem:[%s2734] ss:$4 sm:$0xff]
        %s2736 = scalar_lea.vmem [#allocation2], 258
        %v2737 = vld [vmem:[%s2736] ss:$4 sm:$0xff]
        %s2738 = scalar_lea.vmem [#allocation2], 290
        %v2739 = vld [vmem:[%s2738] ss:$4 sm:$0xff]
        %s2740 = scalar_lea.vmem [#allocation2], 322
        %v2741 = vld [vmem:[%s2740] ss:$4 sm:$0xff]
        %s2742 = scalar_lea.vmem [#allocation2], 354
        %v2743 = vld [vmem:[%s2742] ss:$4 sm:$0xff]
        %s2744 = scalar_lea.vmem [#allocation2], 386
        %v2745 = vld [vmem:[%s2744] ss:$4 sm:$0xff]
        %s2746 = scalar_lea.vmem [#allocation2], 418
        %v2747 = vld [vmem:[%s2746] ss:$4 sm:$0xff]
        %s2748 = scalar_lea.vmem [#allocation2], 450
        %v2749 = vld [vmem:[%s2748] ss:$4 sm:$0xff]
        %s2750 = scalar_lea.vmem [#allocation2], 482
        %v2751 = vld [vmem:[%s2750] ss:$4 sm:$0xf]
        %s2752 = scalar_lea.vmem [#allocation2], 3
        %v2753 = vld [vmem:[%s2752] ss:$4 sm:$0xff]
        %s2754 = scalar_lea.vmem [#allocation2], 35
        %v2755 = vld [vmem:[%s2754] ss:$4 sm:$0xff]
        %s2756 = scalar_lea.vmem [#allocation2], 67
        %v2757 = vld [vmem:[%s2756] ss:$4 sm:$0xff]
        %s2758 = scalar_lea.vmem [#allocation2], 99
        %v2759 = vld [vmem:[%s2758] ss:$4 sm:$0xff]
        %s2760 = scalar_lea.vmem [#allocation2], 131
        %v2761 = vld [vmem:[%s2760] ss:$4 sm:$0xff]
        %s2762 = scalar_lea.vmem [#allocation2], 163
        %v2763 = vld [vmem:[%s2762] ss:$4 sm:$0xff]
        %s2764 = scalar_lea.vmem [#allocation2], 195
        %v2765 = vld [vmem:[%s2764] ss:$4 sm:$0xff]
        %s2766 = scalar_lea.vmem [#allocation2], 227
        %v2767 = vld [vmem:[%s2766] ss:$4 sm:$0xff]
        %s2768 = scalar_lea.vmem [#allocation2], 259
        %v2769 = vld [vmem:[%s2768] ss:$4 sm:$0xff]
        %s2770 = scalar_lea.vmem [#allocation2], 291
        %v2771 = vld [vmem:[%s2770] ss:$4 sm:$0xff]
        %s2772 = scalar_lea.vmem [#allocation2], 323
        %v2773 = vld [vmem:[%s2772] ss:$4 sm:$0xff]
        %s2774 = scalar_lea.vmem [#allocation2], 355
        %v2775 = vld [vmem:[%s2774] ss:$4 sm:$0xff]
        %s2776 = scalar_lea.vmem [#allocation2], 387
        %v2777 = vld [vmem:[%s2776] ss:$4 sm:$0xff]
        %s2778 = scalar_lea.vmem [#allocation2], 419
        %v2779 = vld [vmem:[%s2778] ss:$4 sm:$0xff]
        %s2780 = scalar_lea.vmem [#allocation2], 451
        %v2781 = vld [vmem:[%s2780] ss:$4 sm:$0xff]
        %s2782 = scalar_lea.vmem [#allocation2], 483
        %v2783 = vld [vmem:[%s2782] ss:$4 sm:$0xf]
        %v2784 = vmax.f32 %v2721, %v2753
        %v2785 = vmax.f32 %v2723, %v2755
        %v2786 = vmax.f32 %v2725, %v2757
        %v2787 = vmax.f32 %v2727, %v2759
        %v2788 = vmax.f32 %v2729, %v2761
        %v2789 = vmax.f32 %v2731, %v2763
        %v2790 = vmax.f32 %v2733, %v2765
        %v2791 = vmax.f32 %v2735, %v2767
        %v2792 = vmax.f32 %v2737, %v2769
        %v2793 = vmax.f32 %v2739, %v2771
        %v2794 = vmax.f32 %v2741, %v2773
        %v2795 = vmax.f32 %v2743, %v2775
        %v2796 = vmax.f32 %v2745, %v2777
        %v2797 = vmax.f32 %v2747, %v2779
        %v2798 = vmax.f32 %v2749, %v2781
        %v2799 = vmax.f32 %v2751, %v2783
        %v2800 = vmax.f32 %v2704, %v2784
        %v2801 = vmax.f32 %v2705, %v2785
        %v2802 = vmax.f32 %v2706, %v2786
        %v2803 = vmax.f32 %v2707, %v2787
        %v2804 = vmax.f32 %v2708, %v2788
        %v2805 = vmax.f32 %v2709, %v2789
        %v2806 = vmax.f32 %v2710, %v2790
        %v2807 = vmax.f32 %v2711, %v2791
        %v2808 = vmax.f32 %v2712, %v2792
        %v2809 = vmax.f32 %v2713, %v2793
        %v2810 = vmax.f32 %v2714, %v2794
        %v2811 = vmax.f32 %v2715, %v2795
        %v2812 = vmax.f32 %v2716, %v2796
        %v2813 = vmax.f32 %v2717, %v2797
        %v2814 = vmax.f32 %v2718, %v2798
        %v2815 = vmax.f32 %v2719, %v2799
        %vm2832 = vcmask 1046528
        %v2833 = vrot.slane %v2800, 1
        %v2834 = vrot.slane %v2801, 1
        %v2835 = vsel %vm2832, %v2833, %v2834
        %v2836 = vrot.slane %v2802, 1
        %v2837 = vsel %vm2832, %v2834, %v2836
        %v2838 = vrot.slane %v2803, 1
        %v2839 = vsel %vm2832, %v2836, %v2838
        %v2840 = vrot.slane %v2804, 1
        %v2841 = vsel %vm2832, %v2838, %v2840
        %v2842 = vrot.slane %v2805, 1
        %v2843 = vsel %vm2832, %v2840, %v2842
        %v2844 = vrot.slane %v2806, 1
        %v2845 = vsel %vm2832, %v2842, %v2844
        %v2846 = vrot.slane %v2807, 1
        %v2847 = vsel %vm2832, %v2844, %v2846
        %v2848 = vrot.slane %v2808, 1
        %v2849 = vsel %vm2832, %v2846, %v2848
        %v2850 = vrot.slane %v2809, 1
        %v2851 = vsel %vm2832, %v2848, %v2850
        %v2852 = vrot.slane %v2810, 1
        %v2853 = vsel %vm2832, %v2850, %v2852
        %v2854 = vrot.slane %v2811, 1
        %v2855 = vsel %vm2832, %v2852, %v2854
        %v2856 = vrot.slane %v2812, 1
        %v2857 = vsel %vm2832, %v2854, %v2856
        %v2858 = vrot.slane %v2813, 1
        %v2859 = vsel %vm2832, %v2856, %v2858
        %v2860 = vrot.slane %v2814, 1
        %v2861 = vsel %vm2832, %v2858, %v2860
        %v2862 = vrot.slane %v2815, 1
        %v2863 = vsel %vm2832, %v2860, %v2862
        %2864 = vrot.lane.b32.xlu0 %v2835, 32
        %v2865 = vpop.permute.xlu0 %2864
        %2866 = vrot.lane.b32.xlu0 %v2837, 32
        %v2867 = vpop.permute.xlu0 %2866
        %2868 = vrot.lane.b32.xlu0 %v2839, 32
        %v2869 = vpop.permute.xlu0 %2868
        %2870 = vrot.lane.b32.xlu0 %v2841, 32
        %v2871 = vpop.permute.xlu0 %2870
        %2872 = vrot.lane.b32.xlu0 %v2843, 32
        %v2873 = vpop.permute.xlu0 %2872
        %2874 = vrot.lane.b32.xlu0 %v2845, 32
        %v2875 = vpop.permute.xlu0 %2874
        %2876 = vrot.lane.b32.xlu0 %v2847, 32
        %v2877 = vpop.permute.xlu0 %2876
        %2878 = vrot.lane.b32.xlu0 %v2849, 32
        %v2879 = vpop.permute.xlu0 %2878
        %2880 = vrot.lane.b32.xlu0 %v2851, 32
        %v2881 = vpop.permute.xlu0 %2880
        %2882 = vrot.lane.b32.xlu0 %v2853, 32
        %v2883 = vpop.permute.xlu0 %2882
        %2884 = vrot.lane.b32.xlu0 %v2855, 32
        %v2885 = vpop.permute.xlu0 %2884
        %2886 = vrot.lane.b32.xlu0 %v2857, 32
        %v2887 = vpop.permute.xlu0 %2886
        %2888 = vrot.lane.b32.xlu0 %v2859, 32
        %v2889 = vpop.permute.xlu0 %2888
        %2890 = vrot.lane.b32.xlu0 %v2861, 32
        %v2891 = vpop.permute.xlu0 %2890
        %2892 = vrot.lane.b32.xlu0 %v2863, 32
        %v2893 = vpop.permute.xlu0 %2892
        %2894 = vrot.lane.b32.xlu0 %v2862, 32
        %v2895 = vpop.permute.xlu0 %2894
        %vm2912 = vcmask 1045504
        %v2913 = vrot.slane %v2800, 2
        %v2914 = vrot.slane %v2801, 2
        %v2915 = vsel %vm2912, %v2913, %v2914
        %v2916 = vrot.slane %v2802, 2
        %v2917 = vsel %vm2912, %v2914, %v2916
        %v2918 = vrot.slane %v2803, 2
        %v2919 = vsel %vm2912, %v2916, %v2918
        %v2920 = vrot.slane %v2804, 2
        %v2921 = vsel %vm2912, %v2918, %v2920
        %v2922 = vrot.slane %v2805, 2
        %v2923 = vsel %vm2912, %v2920, %v2922
        %v2924 = vrot.slane %v2806, 2
        %v2925 = vsel %vm2912, %v2922, %v2924
        %v2926 = vrot.slane %v2807, 2
        %v2927 = vsel %vm2912, %v2924, %v2926
        %v2928 = vrot.slane %v2808, 2
        %v2929 = vsel %vm2912, %v2926, %v2928
        %v2930 = vrot.slane %v2809, 2
        %v2931 = vsel %vm2912, %v2928, %v2930
        %v2932 = vrot.slane %v2810, 2
        %v2933 = vsel %vm2912, %v2930, %v2932
        %v2934 = vrot.slane %v2811, 2
        %v2935 = vsel %vm2912, %v2932, %v2934
        %v2936 = vrot.slane %v2812, 2
        %v2937 = vsel %vm2912, %v2934, %v2936
        %v2938 = vrot.slane %v2813, 2
        %v2939 = vsel %vm2912, %v2936, %v2938
        %v2940 = vrot.slane %v2814, 2
        %v2941 = vsel %vm2912, %v2938, %v2940
        %v2942 = vrot.slane %v2815, 2
        %v2943 = vsel %vm2912, %v2940, %v2942
        %2944 = vrot.lane.b32.xlu0 %v2915, 64
        %v2945 = vpop.permute.xlu0 %2944
        %2946 = vrot.lane.b32.xlu0 %v2917, 64
        %v2947 = vpop.permute.xlu0 %2946
        %2948 = vrot.lane.b32.xlu0 %v2919, 64
        %v2949 = vpop.permute.xlu0 %2948
        %2950 = vrot.lane.b32.xlu0 %v2921, 64
        %v2951 = vpop.permute.xlu0 %2950
        %2952 = vrot.lane.b32.xlu0 %v2923, 64
        %v2953 = vpop.permute.xlu0 %2952
        %2954 = vrot.lane.b32.xlu0 %v2925, 64
        %v2955 = vpop.permute.xlu0 %2954
        %2956 = vrot.lane.b32.xlu0 %v2927, 64
        %v2957 = vpop.permute.xlu0 %2956
        %2958 = vrot.lane.b32.xlu0 %v2929, 64
        %v2959 = vpop.permute.xlu0 %2958
        %2960 = vrot.lane.b32.xlu0 %v2931, 64
        %v2961 = vpop.permute.xlu0 %2960
        %2962 = vrot.lane.b32.xlu0 %v2933, 64
        %v2963 = vpop.permute.xlu0 %2962
        %2964 = vrot.lane.b32.xlu0 %v2935, 64
        %v2965 = vpop.permute.xlu0 %2964
        %2966 = vrot.lane.b32.xlu0 %v2937, 64
        %v2967 = vpop.permute.xlu0 %2966
        %2968 = vrot.lane.b32.xlu0 %v2939, 64
        %v2969 = vpop.permute.xlu0 %2968
        %2970 = vrot.lane.b32.xlu0 %v2941, 64
        %v2971 = vpop.permute.xlu0 %2970
        %2972 = vrot.lane.b32.xlu0 %v2943, 64
        %v2973 = vpop.permute.xlu0 %2972
        %2974 = vrot.lane.b32.xlu0 %v2942, 64
        %v2975 = vpop.permute.xlu0 %2974
        %v2992 = vsel %vm1749, %v2800, %v2865
        %v2993 = vsel %vm1749, %v2801, %v2867
        %v2994 = vsel %vm1749, %v2802, %v2869
        %v2995 = vsel %vm1749, %v2803, %v2871
        %v2996 = vsel %vm1749, %v2804, %v2873
        %v2997 = vsel %vm1749, %v2805, %v2875
        %v2998 = vsel %vm1749, %v2806, %v2877
        %v2999 = vsel %vm1749, %v2807, %v2879
        %v3000 = vsel %vm1749, %v2808, %v2881
        %v3001 = vsel %vm1749, %v2809, %v2883
        %v3002 = vsel %vm1749, %v2810, %v2885
        %v3003 = vsel %vm1749, %v2811, %v2887
        %v3004 = vsel %vm1749, %v2812, %v2889
        %v3005 = vsel %vm1749, %v2813, %v2891
        %v3006 = vsel %vm1749, %v2814, %v2893
        %v3007 = vsel %vm1749, %v2815, %v2895
        %v3008 = vsel %vm1875, %v2992, %v2945
        %v3009 = vsel %vm1875, %v2993, %v2947
        %v3010 = vsel %vm1875, %v2994, %v2949
        %v3011 = vsel %vm1875, %v2995, %v2951
        %v3012 = vsel %vm1875, %v2996, %v2953
        %v3013 = vsel %vm1875, %v2997, %v2955
        %v3014 = vsel %vm1875, %v2998, %v2957
        %v3015 = vsel %vm1875, %v2999, %v2959
        %v3016 = vsel %vm1875, %v3000, %v2961
        %v3017 = vsel %vm1875, %v3001, %v2963
        %v3018 = vsel %vm1875, %v3002, %v2965
        %v3019 = vsel %vm1875, %v3003, %v2967
        %v3020 = vsel %vm1875, %v3004, %v2969
        %v3021 = vsel %vm1875, %v3005, %v2971
        %v3022 = vsel %vm1875, %v3006, %v2973
        %v3023 = vsel %vm1875, %v3007, %v2975
        %v3024 = vld [vmem:[%s3] sm:$0xff]
        %v3025 = vld [vmem:[%s3 + $0x8] sm:$0xff]
        %v3026 = vld [vmem:[%s3 + $0x10] sm:$0xff]
        %v3027 = vld [vmem:[%s3 + $0x18] sm:$0xff]
        %v3028 = vld [vmem:[%s3 + $0x20] sm:$0xff]
        %v3029 = vld [vmem:[%s3 + $0x28] sm:$0xff]
        %v3030 = vld [vmem:[%s3 + $0x30] sm:$0xff]
        %v3031 = vld [vmem:[%s3 + $0x38] sm:$0xff]
        %v3032 = vld [vmem:[%s3 + $0x40] sm:$0xff]
        %v3033 = vld [vmem:[%s3 + $0x48] sm:$0xff]
        %v3034 = vld [vmem:[%s3 + $0x50] sm:$0xff]
        %v3035 = vld [vmem:[%s3 + $0x58] sm:$0xff]
        %v3036 = vld [vmem:[%s4] sm:$0x1]
        %v3038 = vlaneseq
        %v3039 = vshrl.u32 %v3038, 7
        %v3040 = vsub.s32 0, %v3039
        %v3041 = vrot.slane %v3036, %v3040
        %vm3043 = vcmask 785408
        %v3045 = vsel %vm3043, %v3008, 0
        %v3048 = vsel %vm3043, %v3009, 0
        %v3051 = vsel %vm3043, %v3010, 0
        %v3054 = vsel %vm3043, %v3011, 0
        %v3057 = vsel %vm3043, %v3012, 0
        %v3060 = vsel %vm3043, %v3013, 0
        %v3063 = vsel %vm3043, %v3014, 0
        %v3066 = vsel %vm3043, %v3015, 0
        %v3069 = vsel %vm3043, %v3016, 0
        %v3072 = vsel %vm3043, %v3017, 0
        %v3075 = vsel %vm3043, %v3018, 0
        %v3078 = vsel %vm3043, %v3019, 0
        %v3081 = vsel %vm3043, %v3020, 0
        %v3084 = vsel %vm3043, %v3021, 0
        %v3087 = vsel %vm3043, %v3022, 0
        %v3090 = vsel %vm3043, %v3023, 0
        %3092 = vmatprep.subr.mxu0 0.0
        %3093 = vmatpush1.msra.mxu0 %v3024
        %3094 = vmatprep.subr.mxu0 0.0
        %3095 = vmatpush1.msra.mxu0 %v3025
        %3096 = vmatprep.subr.mxu0 0.0
        %3097 = vmatpush1.msra.mxu0 %v3026
        %3098 = vmatprep.subr.mxu0 0.0
        %3099 = vmatpush1.msra.mxu0 %v3027
        %3100 = vmatprep.subr.mxu0 0.0
        %3101 = vmatpush1.msra.mxu0 %v3028
        %3102 = vmatprep.subr.mxu0 0.0
        %3103 = vmatpush1.msra.mxu0 %v3029
        %3104 = vmatprep.subr.mxu0 0.0
        %3105 = vmatpush1.msra.mxu0 %v3030
        %3106 = vmatprep.subr.mxu0 0.0
        %3107 = vmatpush1.msra.mxu0 %v3031
        %3108 = vmatprep.subr.mxu0 0.0
        %3109 = vmatpush1.msra.mxu0 %v3032
        %3110 = vmatprep.subr.mxu0 0.0
        %3111 = vmatpush1.msra.mxu0 %v3033
        %3112 = vmatprep.subr.mxu0 0.0
        %3113 = vmatpush1.msra.mxu0 %v3034
        %3114 = vmatprep.subr.mxu0 0.0
        %3115 = vmatpush1.msra.mxu0 %v3035
        %3116 = vmatprep.subr.mxu0 0.0
        %3117 = vmatpush1.msra.mxu0 0.0
        %3118 = vmatprep.subr.mxu0 0.0
        %3119 = vmatpush1.msra.mxu0 0.0
        %3120 = vmatprep.subr.mxu0 0.0
        %3121 = vmatpush1.msra.mxu0 0.0
        %3122 = vmatprep.subr.mxu0 0.0
        %3123 = vmatpush1.msra.mxu0 0.0
        %3124 = vmatprep.subr.mxu0 0.0
        %3125 = vmatpush1.msra.mxu0 0.0
        %3126 = vmatprep.subr.mxu0 0.0
        %3127 = vmatpush1.msra.mxu0 0.0
        %3128 = vmatprep.subr.mxu0 0.0
        %3129 = vmatpush1.msra.mxu0 0.0
        %3130 = vmatprep.subr.mxu0 0.0
        %3131 = vmatpush1.msra.mxu0 0.0
        %3132 = vmatprep.subr.mxu0 0.0
        %3133 = vmatpush1.msra.mxu0 0.0
        %3134 = vmatprep.subr.mxu0 0.0
        %3135 = vmatpush1.msra.mxu0 0.0
        %3136 = vmatprep.subr.mxu0 0.0
        %3137 = vmatpush1.msra.mxu0 0.0
        %3138 = vmatprep.subr.mxu0 0.0
        %3139 = vmatpush1.msra.mxu0 0.0
        %3140 = vmatprep.subr.mxu0 0.0
        %3141 = vmatpush1.msra.mxu0 0.0
        %3142 = vmatprep.subr.mxu0 0.0
        %3143 = vmatpush1.msra.mxu0 0.0
        %3144 = vmatprep.subr.mxu0 0.0
        %3145 = vmatpush1.msra.mxu0 0.0
        %3146 = vmatprep.subr.mxu0 0.0
        %3147 = vmatpush1.msra.mxu0 0.0
        %3148 = vmatprep.subr.mxu0 0.0
        %3149 = vmatpush1.msra.mxu0 0.0
        %3150 = vmatprep.subr.mxu0 0.0
        %3151 = vmatpush1.msra.mxu0 0.0
        %3152 = vmatprep.subr.mxu0 0.0
        %3153 = vmatpush1.msra.mxu0 0.0
        %3154 = vmatprep.subr.mxu0 0.0
        %3155 = vmatpush1.msra.mxu0 0.0
        %3156 = vmatprep.mubr.f32.mxu0 0.0
        %3157 = vmatmul.mubr.f32.gmra.mrb[0].mxu0 %v3045
        %v3158 = vpop.f32.mrb[0].mxu0
        %v3159 = vadd.f32 %v3041, %v3158
        %v3160 = vpop.f32.mrb[0].mxu0
        %3161 = vmatprep.mubr.f32.mxu0 0.0
        %3162 = vmatmul.mubr.f32.gmra.mrb[0].mxu0 %v3048
        %v3163 = vpop.f32.mrb[0].mxu0
        %v3164 = vadd.f32 %v3041, %v3163
        %v3165 = vpop.f32.mrb[0].mxu0
        %3166 = vmatprep.mubr.f32.mxu0 0.0
        %3167 = vmatmul.mubr.f32.gmra.mrb[0].mxu0 %v3051
        %v3168 = vpop.f32.mrb[0].mxu0
        %v3169 = vadd.f32 %v3041, %v3168
        %v3170 = vpop.f32.mrb[0].mxu0
        %3171 = vmatprep.mubr.f32.mxu0 0.0
        %3172 = vmatmul.mubr.f32.gmra.mrb[0].mxu0 %v3054
        %v3173 = vpop.f32.mrb[0].mxu0
        %v3174 = vadd.f32 %v3041, %v3173
        %v3175 = vpop.f32.mrb[0].mxu0
        %3176 = vmatprep.mubr.f32.mxu0 0.0
        %3177 = vmatmul.mubr.f32.gmra.mrb[0].mxu0 %v3057
        %v3178 = vpop.f32.mrb[0].mxu0
        %v3179 = vadd.f32 %v3041, %v3178
        %v3180 = vpop.f32.mrb[0].mxu0
        %3181 = vmatprep.mubr.f32.mxu0 0.0
        %3182 = vmatmul.mubr.f32.gmra.mrb[0].mxu0 %v3060
        %v3183 = vpop.f32.mrb[0].mxu0
        %v3184 = vadd.f32 %v3041, %v3183
        %v3185 = vpop.f32.mrb[0].mxu0
        %3186 = vmatprep.mubr.f32.mxu0 0.0
        %3187 = vmatmul.mubr.f32.gmra.mrb[0].mxu0 %v3063
        %v3188 = vpop.f32.mrb[0].mxu0
        %v3189 = vadd.f32 %v3041, %v3188
        %v3190 = vpop.f32.mrb[0].mxu0
        %3191 = vmatprep.mubr.f32.mxu0 0.0
        %3192 = vmatmul.mubr.f32.gmra.mrb[0].mxu0 %v3066
        %v3193 = vpop.f32.mrb[0].mxu0
        %v3194 = vadd.f32 %v3041, %v3193
        %v3195 = vpop.f32.mrb[0].mxu0
        %3196 = vmatprep.mubr.f32.mxu0 0.0
        %3197 = vmatmul.mubr.f32.gmra.mrb[0].mxu0 %v3069
        %v3198 = vpop.f32.mrb[0].mxu0
        %v3199 = vadd.f32 %v3041, %v3198
        %v3200 = vpop.f32.mrb[0].mxu0
        %3201 = vmatprep.mubr.f32.mxu0 0.0
        %3202 = vmatmul.mubr.f32.gmra.mrb[0].mxu0 %v3072
        %v3203 = vpop.f32.mrb[0].mxu0
        %v3204 = vadd.f32 %v3041, %v3203
        %v3205 = vpop.f32.mrb[0].mxu0
        %3206 = vmatprep.mubr.f32.mxu0 0.0
        %3207 = vmatmul.mubr.f32.gmra.mrb[0].mxu0 %v3075
        %v3208 = vpop.f32.mrb[0].mxu0
        %v3209 = vadd.f32 %v3041, %v3208
        %v3210 = vpop.f32.mrb[0].mxu0
        %3211 = vmatprep.mubr.f32.mxu0 0.0
        %3212 = vmatmul.mubr.f32.gmra.mrb[0].mxu0 %v3078
        %v3213 = vpop.f32.mrb[0].mxu0
        %v3214 = vadd.f32 %v3041, %v3213
        %v3215 = vpop.f32.mrb[0].mxu0
        %3216 = vmatprep.mubr.f32.mxu0 0.0
        %3217 = vmatmul.mubr.f32.gmra.mrb[0].mxu0 %v3081
        %v3218 = vpop.f32.mrb[0].mxu0
        %v3219 = vadd.f32 %v3041, %v3218
        %v3220 = vpop.f32.mrb[0].mxu0
        %3221 = vmatprep.mubr.f32.mxu0 0.0
        %3222 = vmatmul.mubr.f32.gmra.mrb[0].mxu0 %v3084
        %v3223 = vpop.f32.mrb[0].mxu0
        %v3224 = vadd.f32 %v3041, %v3223
        %v3225 = vpop.f32.mrb[0].mxu0
        %3226 = vmatprep.mubr.f32.mxu0 0.0
        %3227 = vmatmul.mubr.f32.gmra.mrb[0].mxu0 %v3087
        %v3228 = vpop.f32.mrb[0].mxu0
        %v3229 = vadd.f32 %v3041, %v3228
        %v3230 = vpop.f32.mrb[0].mxu0
        %3231 = vmatprep.mubr.f32.mxu0 0.0
        %3232 = vmatmul.mubr.f32.gmra.mrb[0].mxu0 %v3090
        %v3233 = vpop.f32.mrb[0].mxu0
        %v3234 = vadd.f32 %v3041, %v3233
        %v3235 = vpop.f32.mrb[0].mxu0
        %3236 = vdwg.mxu0
        %v3237 = vmax.f32 %v3159, 0.0
        %v3238 = vmax.f32 %v3164, 0.0
        %v3239 = vmax.f32 %v3169, 0.0
        %v3240 = vmax.f32 %v3174, 0.0
        %v3241 = vmax.f32 %v3179, 0.0
        %v3242 = vmax.f32 %v3184, 0.0
        %v3243 = vmax.f32 %v3189, 0.0
        %v3244 = vmax.f32 %v3194, 0.0
        %v3245 = vmax.f32 %v3199, 0.0
        %v3246 = vmax.f32 %v3204, 0.0
        %v3247 = vmax.f32 %v3209, 0.0
        %v3248 = vmax.f32 %v3214, 0.0
        %v3249 = vmax.f32 %v3219, 0.0
        %v3250 = vmax.f32 %v3224, 0.0
        %v3251 = vmax.f32 %v3229, 0.0
        %v3252 = vmax.f32 %v3234, 0.0
        %3253 = vst.msk [vmem:[#allocation3] sm:$0xff] %vm1749, %v3237
        %3254 = vst.msk [vmem:[#allocation3 + $0x8] sm:$0xff] %vm1749, %v3238
        %3255 = vst.msk [vmem:[#allocation3 + $0x10] sm:$0xff] %vm1749, %v3239
        %3256 = vst.msk [vmem:[#allocation3 + $0x18] sm:$0xff] %vm1749, %v3240
        %3257 = vst.msk [vmem:[#allocation3 + $0x20] sm:$0xff] %vm1749, %v3241
        %3258 = vst.msk [vmem:[#allocation3 + $0x28] sm:$0xff] %vm1749, %v3242
        %3259 = vst.msk [vmem:[#allocation3 + $0x30] sm:$0xff] %vm1749, %v3243
        %3260 = vst.msk [vmem:[#allocation3 + $0x38] sm:$0xff] %vm1749, %v3244
        %3261 = vst.msk [vmem:[#allocation3 + $0x40] sm:$0xff] %vm1749, %v3245
        %3262 = vst.msk [vmem:[#allocation3 + $0x48] sm:$0xff] %vm1749, %v3246
        %3263 = vst.msk [vmem:[#allocation3 + $0x50] sm:$0xff] %vm1749, %v3247
        %3264 = vst.msk [vmem:[#allocation3 + $0x58] sm:$0xff] %vm1749, %v3248
        %3265 = vst.msk [vmem:[#allocation3 + $0x60] sm:$0xff] %vm1749, %v3249
        %3266 = vst.msk [vmem:[#allocation3 + $0x68] sm:$0xff] %vm1749, %v3250
        %3267 = vst.msk [vmem:[#allocation3 + $0x70] sm:$0xff] %vm1749, %v3251
        %vm3268 = vcmask 254976
        %3269 = vst.msk [vmem:[#allocation3 + $0x78] sm:$0x3] %vm3268, %v3252
        %v3270 = vld [vmem:[#allocation3] ss:$4 sm:$0xff]
        %s3271 = scalar_lea.vmem [#allocation3], 32
        %v3272 = vld [vmem:[%s3271] ss:$4 sm:$0xff]
        %s3273 = scalar_lea.vmem [#allocation3], 64
        %v3274 = vld [vmem:[%s3273] ss:$4 sm:$0xff]
        %s3275 = scalar_lea.vmem [#allocation3], 96
        %v3276 = vld [vmem:[%s3275] ss:$4 sm:$0x3f]
        %s3277 = scalar_lea.vmem [#allocation3], 1
        %v3278 = vld [vmem:[%s3277] ss:$4 sm:$0xff]
        %s3279 = scalar_lea.vmem [#allocation3], 33
        %v3280 = vld [vmem:[%s3279] ss:$4 sm:$0xff]
        %s3281 = scalar_lea.vmem [#allocation3], 65
        %v3282 = vld [vmem:[%s3281] ss:$4 sm:$0xff]
        %s3283 = scalar_lea.vmem [#allocation3], 97
        %v3284 = vld [vmem:[%s3283] ss:$4 sm:$0x3f]
        %v3285 = vmax.f32 %v3270, %v3278
        %v3286 = vmax.f32 %v3272, %v3280
        %v3287 = vmax.f32 %v3274, %v3282
        %v3288 = vmax.f32 %v3276, %v3284
        %s3289 = scalar_lea.vmem [#allocation3], 2
        %v3290 = vld [vmem:[%s3289] ss:$4 sm:$0xff]
        %s3291 = scalar_lea.vmem [#allocation3], 34
        %v3292 = vld [vmem:[%s3291] ss:$4 sm:$0xff]
        %s3293 = scalar_lea.vmem [#allocation3], 66
        %v3294 = vld [vmem:[%s3293] ss:$4 sm:$0xff]
        %s3295 = scalar_lea.vmem [#allocation3], 98
        %v3296 = vld [vmem:[%s3295] ss:$4 sm:$0x3f]
        %s3297 = scalar_lea.vmem [#allocation3], 3
        %v3298 = vld [vmem:[%s3297] ss:$4 sm:$0xff]
        %s3299 = scalar_lea.vmem [#allocation3], 35
        %v3300 = vld [vmem:[%s3299] ss:$4 sm:$0xff]
        %s3301 = scalar_lea.vmem [#allocation3], 67
        %v3302 = vld [vmem:[%s3301] ss:$4 sm:$0xff]
        %s3303 = scalar_lea.vmem [#allocation3], 99
        %v3304 = vld [vmem:[%s3303] ss:$4 sm:$0x3f]
        %v3305 = vmax.f32 %v3290, %v3298
        %v3306 = vmax.f32 %v3292, %v3300
        %v3307 = vmax.f32 %v3294, %v3302
        %v3308 = vmax.f32 %v3296, %v3304
        %v3309 = vmax.f32 %v3285, %v3305
        %v3310 = vmax.f32 %v3286, %v3306
        %v3311 = vmax.f32 %v3287, %v3307
        %v3312 = vmax.f32 %v3288, %v3308
        %v3317 = vrot.slane %v3309, 1
        %v3318 = vrot.slane %v3310, 1
        %v3319 = vsel %vm2832, %v3317, %v3318
        %v3320 = vrot.slane %v3311, 1
        %v3321 = vsel %vm2832, %v3318, %v3320
        %v3322 = vrot.slane %v3312, 1
        %v3323 = vsel %vm2832, %v3320, %v3322
        %3324 = vrot.lane.b32.xlu0 %v3319, 32
        %v3325 = vpop.permute.xlu0 %3324
        %3326 = vrot.lane.b32.xlu0 %v3321, 32
        %v3327 = vpop.permute.xlu0 %3326
        %3328 = vrot.lane.b32.xlu0 %v3323, 32
        %v3329 = vpop.permute.xlu0 %3328
        %3330 = vrot.lane.b32.xlu0 %v3322, 32
        %v3331 = vpop.permute.xlu0 %3330
        %v3336 = vrot.slane %v3309, 2
        %v3337 = vrot.slane %v3310, 2
        %v3338 = vsel %vm2912, %v3336, %v3337
        %v3339 = vrot.slane %v3311, 2
        %v3340 = vsel %vm2912, %v3337, %v3339
        %v3341 = vrot.slane %v3312, 2
        %v3342 = vsel %vm2912, %v3339, %v3341
        %3343 = vrot.lane.b32.xlu0 %v3338, 64
        %v3344 = vpop.permute.xlu0 %3343
        %3345 = vrot.lane.b32.xlu0 %v3340, 64
        %v3346 = vpop.permute.xlu0 %3345
        %3347 = vrot.lane.b32.xlu0 %v3342, 64
        %v3348 = vpop.permute.xlu0 %3347
        %3349 = vrot.lane.b32.xlu0 %v3341, 64
        %v3350 = vpop.permute.xlu0 %3349
        %v3355 = vsel %vm1749, %v3309, %v3325
        %v3356 = vsel %vm1749, %v3310, %v3327
        %v3357 = vsel %vm1749, %v3311, %v3329
        %v3358 = vsel %vm1749, %v3312, %v3331
        %v3359 = vsel %vm1875, %v3355, %v3344
        %v3360 = vsel %vm1875, %v3356, %v3346
        %v3361 = vsel %vm1875, %v3357, %v3348
        %v3362 = vsel %vm1875, %v3358, %v3350
        %v3363 = vld [vmem:[%s5] sm:$0xff]
        %v3364 = vld [vmem:[%s5 + $0x8] sm:$0xff]
        %v3365 = vld [vmem:[%s5 + $0x10] sm:$0xff]
        %v3366 = vld [vmem:[%s5 + $0x18] sm:$0xff]
        %v3367 = vld [vmem:[%s5 + $0x20] sm:$0xff]
        %v3368 = vld [vmem:[%s5 + $0x28] sm:$0xff]
        %v3369 = vld [vmem:[%s5 + $0x30] sm:$0xff]
        %v3370 = vld [vmem:[%s5 + $0x38] sm:$0xff]
        %v3371 = vld [vmem:[%s5 + $0x40] sm:$0xff]
        %v3372 = vld [vmem:[%s5 + $0x48] sm:$0xff]
        %v3373 = vld [vmem:[%s5 + $0x50] sm:$0xff]
        %v3374 = vld [vmem:[%s5 + $0x58] sm:$0xff]
        %v3375 = vld [vmem:[%s6] sm:$0x1]
        %v3377 = vlaneseq
        %v3378 = vshrl.u32 %v3377, 7
        %v3379 = vsub.s32 0, %v3378
        %v3380 = vrot.slane %v3375, %v3379
        %v3383 = vsel %vm3043, %v3359, 0
        %v3386 = vsel %vm3043, %v3360, 0
        %v3389 = vsel %vm3043, %v3361, 0
        %v3392 = vsel %vm3043, %v3362, 0
        %3394 = vmatprep.subr.mxu0 0.0
        %3395 = vmatpush1.msra.mxu0 %v3363
        %3396 = vmatprep.subr.mxu0 0.0
        %3397 = vmatpush1.msra.mxu0 %v3364
        %3398 = vmatprep.subr.mxu0 0.0
        %3399 = vmatpush1.msra.mxu0 %v3365
        %3400 = vmatprep.subr.mxu0 0.0
        %3401 = vmatpush1.msra.mxu0 %v3366
        %3402 = vmatprep.subr.mxu0 0.0
        %3403 = vmatpush1.msra.mxu0 %v3367
        %3404 = vmatprep.subr.mxu0 0.0
        %3405 = vmatpush1.msra.mxu0 %v3368
        %3406 = vmatprep.subr.mxu0 0.0
        %3407 = vmatpush1.msra.mxu0 %v3369
        %3408 = vmatprep.subr.mxu0 0.0
        %3409 = vmatpush1.msra.mxu0 %v3370
        %3410 = vmatprep.subr.mxu0 0.0
        %3411 = vmatpush1.msra.mxu0 %v3371
        %3412 = vmatprep.subr.mxu0 0.0
        %3413 = vmatpush1.msra.mxu0 %v3372
        %3414 = vmatprep.subr.mxu0 0.0
        %3415 = vmatpush1.msra.mxu0 %v3373
        %3416 = vmatprep.subr.mxu0 0.0
        %3417 = vmatpush1.msra.mxu0 %v3374
        %3418 = vmatprep.subr.mxu0 0.0
        %3419 = vmatpush1.msra.mxu0 0.0
        %3420 = vmatprep.subr.mxu0 0.0
        %3421 = vmatpush1.msra.mxu0 0.0
        %3422 = vmatprep.subr.mxu0 0.0
        %3423 = vmatpush1.msra.mxu0 0.0
        %3424 = vmatprep.subr.mxu0 0.0
        %3425 = vmatpush1.msra.mxu0 0.0
        %3426 = vmatprep.subr.mxu0 0.0
        %3427 = vmatpush1.msra.mxu0 0.0
        %3428 = vmatprep.subr.mxu0 0.0
        %3429 = vmatpush1.msra.mxu0 0.0
        %3430 = vmatprep.subr.mxu0 0.0
        %3431 = vmatpush1.msra.mxu0 0.0
        %3432 = vmatprep.subr.mxu0 0.0
        %3433 = vmatpush1.msra.mxu0 0.0
        %3434 = vmatprep.subr.mxu0 0.0
        %3435 = vmatpush1.msra.mxu0 0.0
        %3436 = vmatprep.subr.mxu0 0.0
        %3437 = vmatpush1.msra.mxu0 0.0
        %3438 = vmatprep.subr.mxu0 0.0
        %3439 = vmatpush1.msra.mxu0 0.0
        %3440 = vmatprep.subr.mxu0 0.0
        %3441 = vmatpush1.msra.mxu0 0.0
        %3442 = vmatprep.subr.mxu0 0.0
        %3443 = vmatpush1.msra.mxu0 0.0
        %3444 = vmatprep.subr.mxu0 0.0
        %3445 = vmatpush1.msra.mxu0 0.0
        %3446 = vmatprep.subr.mxu0 0.0
        %3447 = vmatpush1.msra.mxu0 0.0
        %3448 = vmatprep.subr.mxu0 0.0
        %3449 = vmatpush1.msra.mxu0 0.0
        %3450 = vmatprep.subr.mxu0 0.0
        %3451 = vmatpush1.msra.mxu0 0.0
        %3452 = vmatprep.subr.mxu0 0.0
        %3453 = vmatpush1.msra.mxu0 0.0
        %3454 = vmatprep.subr.mxu0 0.0
        %3455 = vmatpush1.msra.mxu0 0.0
        %3456 = vmatprep.subr.mxu0 0.0
        %3457 = vmatpush1.msra.mxu0 0.0
        %3458 = vmatprep.mubr.f32.mxu0 0.0
        %3459 = vmatmul.mubr.f32.gmra.mrb[0].mxu0 %v3383
        %v3460 = vpop.f32.mrb[0].mxu0
        %v3461 = vadd.f32 %v3380, %v3460
        %v3462 = vpop.f32.mrb[0].mxu0
        %3463 = vmatprep.mubr.f32.mxu0 0.0
        %3464 = vmatmul.mubr.f32.gmra.mrb[0].mxu0 %v3386
        %v3465 = vpop.f32.mrb[0].mxu0
        %v3466 = vadd.f32 %v3380, %v3465
        %v3467 = vpop.f32.mrb[0].mxu0
        %3468 = vmatprep.mubr.f32.mxu0 0.0
        %3469 = vmatmul.mubr.f32.gmra.mrb[0].mxu0 %v3389
        %v3470 = vpop.f32.mrb[0].mxu0
        %v3471 = vadd.f32 %v3380, %v3470
        %v3472 = vpop.f32.mrb[0].mxu0
        %3473 = vmatprep.mubr.f32.mxu0 0.0
        %3474 = vmatmul.mubr.f32.gmra.mrb[0].mxu0 %v3392
        %v3475 = vpop.f32.mrb[0].mxu0
        %v3476 = vadd.f32 %v3380, %v3475
        %v3477 = vpop.f32.mrb[0].mxu0
        %3478 = vdwg.mxu0
        %v3479 = vmax.f32 %v3461, 0.0
        %v3480 = vmax.f32 %v3466, 0.0
        %v3481 = vmax.f32 %v3471, 0.0
        %v3482 = vmax.f32 %v3476, 0.0
        %3483 = vst.msk [vmem:[#allocation4] sm:$0xff] %vm1875, %v3479
        %3484 = vst.msk [vmem:[#allocation4 + $0x8] sm:$0xff] %vm1875, %v3480
        %3485 = vst.msk [vmem:[#allocation4 + $0x10] sm:$0xff] %vm1875, %v3481
        %vm3486 = vcmask 519168
        %3487 = vst.msk [vmem:[#allocation4 + $0x18] sm:$0xf] %vm3486, %v3482
        %v3488 = vld [vmem:[#allocation4] ss:$4 sm:$0x7f]
        %s3489 = scalar_lea.vmem [#allocation4], 1
        %v3490 = vld [vmem:[%s3489] ss:$4 sm:$0x7f]
        %v3491 = vmax.f32 %v3488, %v3490
        %s3492 = scalar_lea.vmem [#allocation4], 2
        %v3493 = vld [vmem:[%s3492] ss:$4 sm:$0x7f]
        %s3494 = scalar_lea.vmem [#allocation4], 3
        %v3495 = vld [vmem:[%s3494] ss:$4 sm:$0x7f]
        %v3496 = vmax.f32 %v3493, %v3495
        %v3497 = vmax.f32 %v3491, %v3496
        %v3499 = vrot.slane %v3497, 1
        %3500 = vrot.lane.b32.xlu0 %v3499, 64
        %v3501 = vpop.permute.xlu0 %3500
        %v3503 = vrot.slane %v3497, 2
        %v3504 = vsel %vm1875, %v3497, %v3501
        %v3505 = vld [vmem:[%s7] sm:$0xff]
        %v3506 = vld [vmem:[%s7 + $0x8] sm:$0xff]
        %v3507 = vld [vmem:[%s7 + $0x10] sm:$0xff]
        %v3508 = vld [vmem:[%s7 + $0x18] sm:$0xff]
        %v3509 = vld [vmem:[%s7 + $0x20] sm:$0xff]
        %v3510 = vld [vmem:[%s7 + $0x28] sm:$0xff]
        %v3511 = vld [vmem:[%s7 + $0x30] sm:$0xff]
        %v3512 = vld [vmem:[%s7 + $0x38] sm:$0xff]
        %v3513 = vld [vmem:[%s7 + $0x40] sm:$0xff]
        %v3514 = vld [vmem:[%s7 + $0x48] sm:$0xff]
        %v3515 = vld [vmem:[%s7 + $0x50] sm:$0xff]
        %v3516 = vld [vmem:[%s7 + $0x58] sm:$0xff]
        %v3517 = vld [vmem:[%s7 + $0x60] sm:$0xff]
        %v3518 = vld [vmem:[%s7 + $0x68] sm:$0xff]
        %v3519 = vld [vmem:[%s7 + $0x70] sm:$0xff]
        %v3520 = vld [vmem:[%s7 + $0x78] sm:$0xff]
        %v3521 = vld [vmem:[%s7 + $0x80] sm:$0xff]
        %v3522 = vld [vmem:[%s7 + $0x88] sm:$0xff]
        %v3523 = vld [vmem:[%s7 + $0x90] sm:$0xff]
        %v3524 = vld [vmem:[%s7 + $0x98] sm:$0xff]
        %v3525 = vld [vmem:[%s7 + $0xa0] sm:$0xff]
        %v3526 = vld [vmem:[%s7 + $0xa8] sm:$0xff]
        %v3527 = vld [vmem:[%s7 + $0xb0] sm:$0xff]
        %v3528 = vld [vmem:[%s7 + $0xb8] sm:$0xff]
        %v3529 = vld [vmem:[%s8] sm:$0x1]
        %v3531 = vlaneseq
        %v3532 = vshrl.u32 %v3531, 7
        %v3533 = vsub.s32 0, %v3532
        %v3534 = vrot.slane %v3529, %v3533
        %v3536 = vsel %vm1875, %v3503, 0
        %3538 = vmatprep.subr.mxu0 0.0
        %3539 = vmatpush1.msra.mxu0 %v3505
        %3540 = vmatprep.subr.mxu0 0.0
        %3541 = vmatpush1.msra.mxu0 %v3506
        %3542 = vmatprep.subr.mxu0 0.0
        %3543 = vmatpush1.msra.mxu0 %v3507
        %3544 = vmatprep.subr.mxu0 0.0
        %3545 = vmatpush1.msra.mxu0 %v3508
        %3546 = vmatprep.subr.mxu0 0.0
        %3547 = vmatpush1.msra.mxu0 %v3509
        %3548 = vmatprep.subr.mxu0 0.0
        %3549 = vmatpush1.msra.mxu0 %v3510
        %3550 = vmatprep.subr.mxu0 0.0
        %3551 = vmatpush1.msra.mxu0 %v3511
        %3552 = vmatprep.subr.mxu0 0.0
        %3553 = vmatpush1.msra.mxu0 %v3512
        %3554 = vmatprep.subr.mxu0 0.0
        %3555 = vmatpush1.msra.mxu0 %v3513
        %3556 = vmatprep.subr.mxu0 0.0
        %3557 = vmatpush1.msra.mxu0 %v3514
        %3558 = vmatprep.subr.mxu0 0.0
        %3559 = vmatpush1.msra.mxu0 %v3515
        %3560 = vmatprep.subr.mxu0 0.0
        %3561 = vmatpush1.msra.mxu0 %v3516
        %3562 = vmatprep.subr.mxu0 0.0
        %3563 = vmatpush1.msra.mxu0 %v3517
        %3564 = vmatprep.subr.mxu0 0.0
        %3565 = vmatpush1.msra.mxu0 %v3518
        %3566 = vmatprep.subr.mxu0 0.0
        %3567 = vmatpush1.msra.mxu0 %v3519
        %3568 = vmatprep.subr.mxu0 0.0
        %3569 = vmatpush1.msra.mxu0 %v3520
        %3570 = vmatprep.subr.mxu0 0.0
        %3571 = vmatpush1.msra.mxu0 %v3521
        %3572 = vmatprep.subr.mxu0 0.0
        %3573 = vmatpush1.msra.mxu0 %v3522
        %3574 = vmatprep.subr.mxu0 0.0
        %3575 = vmatpush1.msra.mxu0 %v3523
        %3576 = vmatprep.subr.mxu0 0.0
        %3577 = vmatpush1.msra.mxu0 %v3524
        %3578 = vmatprep.subr.mxu0 0.0
        %3579 = vmatpush1.msra.mxu0 %v3525
        %3580 = vmatprep.subr.mxu0 0.0
        %3581 = vmatpush1.msra.mxu0 %v3526
        %3582 = vmatprep.subr.mxu0 0.0
        %3583 = vmatpush1.msra.mxu0 %v3527
        %3584 = vmatprep.subr.mxu0 0.0
        %3585 = vmatpush1.msra.mxu0 %v3528
        %3586 = vmatprep.subr.mxu0 0.0
        %3587 = vmatpush1.msra.mxu0 0.0
        %3588 = vmatprep.subr.mxu0 0.0
        %3589 = vmatpush1.msra.mxu0 0.0
        %3590 = vmatprep.subr.mxu0 0.0
        %3591 = vmatpush1.msra.mxu0 0.0
        %3592 = vmatprep.subr.mxu0 0.0
        %3593 = vmatpush1.msra.mxu0 0.0
        %3594 = vmatprep.subr.mxu0 0.0
        %3595 = vmatpush1.msra.mxu0 0.0
        %3596 = vmatprep.subr.mxu0 0.0
        %3597 = vmatpush1.msra.mxu0 0.0
        %3598 = vmatprep.subr.mxu0 0.0
        %3599 = vmatpush1.msra.mxu0 0.0
        %3600 = vmatprep.subr.mxu0 0.0
        %3601 = vmatpush1.msra.mxu0 0.0
        %3602 = vmatprep.mubr.f32.mxu0 %v3536
        %3603 = vmatmul.mubr.f32.gmra.mrb[0].mxu0 %v3504
        %v3604 = vpop.f32.mrb[0].mxu0
        %v3605 = vadd.f32 %v3534, %v3604
        %v3606 = vpop.f32.mrb[0].mxu0
        %3607 = vdwg.mxu0
        %v3608 = vmax.f32 %v3605, 0.0
        %vm3609 = vcmask 520192
        %3610 = vst.msk [vmem:[#allocation5] sm:$0x1f] %vm3609, %v3608
        %v3611 = vld [vmem:[#allocation5] ss:$4 sm:$0x1]
        %s3612 = scalar_lea.vmem [#allocation5], 1
        %v3613 = vld [vmem:[%s3612] ss:$4 sm:$0x1]
        %v3614 = vmax.f32 %v3611, %v3613
        %s3615 = scalar_lea.vmem [#allocation5], 2
        %v3616 = vld [vmem:[%s3615] ss:$4 sm:$0x1]
        %s3617 = scalar_lea.vmem [#allocation5], 3
        %v3618 = vld [vmem:[%s3617] ss:$4 sm:$0x1]
        %v3619 = vmax.f32 %v3616, %v3618
        %v3620 = vmax.f32 %v3614, %v3619
        %v3621 = vadd.f32 %v3620, 0.0
        %v3622 = vld [vmem:[%s9] sm:$0xff]
        %v3623 = vld [vmem:[%s9 + $0x8] sm:$0xff]
        %v3624 = vld [vmem:[%s9 + $0x10] sm:$0xff]
        %v3625 = vld [vmem:[%s9 + $0x18] sm:$0xff]
        %v3626 = vld [vmem:[%s9 + $0x20] sm:$0xff]
        %v3627 = vld [vmem:[%s9 + $0x28] sm:$0xff]
        %v3628 = vld [vmem:[%s9 + $0x30] sm:$0xff]
        %v3629 = vld [vmem:[%s9 + $0x38] sm:$0xff]
        %v3630 = vld [vmem:[%s10] sm:$0x1]
        %v3632 = vsel %vm1875, %v3621, 0
        %3634 = vmatprep.subr.mxu0 0.0
        %3635 = vmatpush1.msra.mxu0 %v3622
        %3636 = vmatprep.subr.mxu0 0.0
        %3637 = vmatpush1.msra.mxu0 %v3623
        %3638 = vmatprep.subr.mxu0 0.0
        %3639 = vmatpush1.msra.mxu0 %v3624
        %3640 = vmatprep.subr.mxu0 0.0
        %3641 = vmatpush1.msra.mxu0 %v3625
        %3642 = vmatprep.subr.mxu0 0.0
        %3643 = vmatpush1.msra.mxu0 %v3626
        %3644 = vmatprep.subr.mxu0 0.0
        %3645 = vmatpush1.msra.mxu0 %v3627
        %3646 = vmatprep.subr.mxu0 0.0
        %3647 = vmatpush1.msra.mxu0 %v3628
        %3648 = vmatprep.subr.mxu0 0.0
        %3649 = vmatpush1.msra.mxu0 %v3629
        %3650 = vmatprep.subr.mxu0 0.0
        %3651 = vmatpush1.msra.mxu0 0.0
        %3652 = vmatprep.subr.mxu0 0.0
        %3653 = vmatpush1.msra.mxu0 0.0
        %3654 = vmatprep.subr.mxu0 0.0
        %3655 = vmatpush1.msra.mxu0 0.0
        %3656 = vmatprep.subr.mxu0 0.0
        %3657 = vmatpush1.msra.mxu0 0.0
        %3658 = vmatprep.subr.mxu0 0.0
        %3659 = vmatpush1.msra.mxu0 0.0
        %3660 = vmatprep.subr.mxu0 0.0
        %3661 = vmatpush1.msra.mxu0 0.0
        %3662 = vmatprep.subr.mxu0 0.0
        %3663 = vmatpush1.msra.mxu0 0.0
        %3664 = vmatprep.subr.mxu0 0.0
        %3665 = vmatpush1.msra.mxu0 0.0
        %3666 = vmatprep.subr.mxu0 0.0
        %3667 = vmatpush1.msra.mxu0 0.0
        %3668 = vmatprep.subr.mxu0 0.0
        %3669 = vmatpush1.msra.mxu0 0.0
        %3670 = vmatprep.subr.mxu0 0.0
        %3671 = vmatpush1.msra.mxu0 0.0
        %3672 = vmatprep.subr.mxu0 0.0
        %3673 = vmatpush1.msra.mxu0 0.0
        %3674 = vmatprep.subr.mxu0 0.0
        %3675 = vmatpush1.msra.mxu0 0.0
        %3676 = vmatprep.subr.mxu0 0.0
        %3677 = vmatpush1.msra.mxu0 0.0
        %3678 = vmatprep.subr.mxu0 0.0
        %3679 = vmatpush1.msra.mxu0 0.0
        %3680 = vmatprep.subr.mxu0 0.0
        %3681 = vmatpush1.msra.mxu0 0.0
        %3682 = vmatprep.subr.mxu0 0.0
        %3683 = vmatpush1.msra.mxu0 0.0
        %3684 = vmatprep.subr.mxu0 0.0
        %3685 = vmatpush1.msra.mxu0 0.0
        %3686 = vmatprep.subr.mxu0 0.0
        %3687 = vmatpush1.msra.mxu0 0.0
        %3688 = vmatprep.subr.mxu0 0.0
        %3689 = vmatpush1.msra.mxu0 0.0
        %3690 = vmatprep.subr.mxu0 0.0
        %3691 = vmatpush1.msra.mxu0 0.0
        %3692 = vmatprep.subr.mxu0 0.0
        %3693 = vmatpush1.msra.mxu0 0.0
        %3694 = vmatprep.subr.mxu0 0.0
        %3695 = vmatpush1.msra.mxu0 0.0
        %3696 = vmatprep.subr.mxu0 0.0
        %3697 = vmatpush1.msra.mxu0 0.0
        %3698 = vmatprep.mubr.f32.mxu0 0.0
        %3699 = vmatmul.mubr.f32.gmra.mrb[0].mxu0 %v3632
        %v3700 = vpop.f32.mrb[0].mxu0
        %v3701 = vadd.f32 %v3630, %v3700
        %v3702 = vpop.f32.mrb[0].mxu0
        %3703 = vdwg.mxu0
        %vm3704 = vcmask 278528
        %v3705 = vsel %vm3704, %v3701, -inf
        %3706 = vmax.xlane.f32.xlu0 %v3705
        %v3707 = vpop.xlane.xlu0 %3706
        %v3708 = vsub.f32 %v3701, %v3707
        %v3709 = vmul.f32 %v3708, 1.442695
        %v3710 = vpow.pop %v3709
        %v3711 = vsel %vm3704, %v3710, 0.0
        %3712 = vadd.xlane.f32.xlu0 %v3711
        %v3713 = vpop.xlane.xlu0 %3712
        %v3714 = vlog2.pop %v3713
        %v3715 = vmul.f32 %v3714, 0.6931472
        %v3716 = vsub.f32 %v3708, %v3715
        %3717 = vst.msk [vmem:[%s378] sm:$0x1] %vm3704, %v3716
        %s3718 = sand.u32 %s269, 1
        %s3719 = scalar_lea.sflag [#allocation7], %s3718
        %s3720 = sand.u32 %s269, 1
        %s3721 = scalar_lea.vmem [#allocation6], %s3720
        // Predicated region
        $region65: #{m5_forward_pallas.1} parent=63 // pred_check
          %p3722 = pneg %p279
        $region66: #{m5_forward_pallas.1} parent=63 // pred_check_branch
          %3724 = sbr.rel (%p3722) target = $region68
        $region67: #{m5_forward_pallas.1} parent=63 // pred_region
          %s3726 = ssub.s32 16, 16
          %3727 = vsyncadd %s3719, %s3726
          %s3728 = smul.addr %s25, 16
          %s3729 = scalar_lea.hbm %s11, %s3728
          %s3731 = sshll.u32 %s3721, 4
          %s3732 = int_to_ptr.vmem [resolvable:$true] %s3731
          %3734 = dma.vmem_to_hbm [thread:$0]  %s3732, 16, %s3729, %s3719
        $region68: #{m5_forward_pallas.1} parent=63 // pred_fallthru
          _
      $region64: #{m5_forward_pallas.1} parent=5 // pred_fallthru
        _
      %p3735 = scmp.le.s32.totalorder 2, %s20
      // Predicated region
      $region69: #{m5_forward_pallas.1} parent=5 // pred_check
        %p3736 = pneg %p3735
      $region70: #{m5_forward_pallas.1} parent=5 // pred_check_branch
        %3738 = sbr.rel (%p3736) target = $region72
      $region71: #{m5_forward_pallas.1} parent=5 // pred_region
        %s3739 = ssub.s32 %s20, 2
        // Predicated region
        $region73: #{m5_forward_pallas.1} parent=71 // pred_check
          %p3740 = pneg %p285
        $region74: #{m5_forward_pallas.1} parent=71 // pred_check_branch
          %3742 = sbr.rel (%p3740) target = $region76
        $region75: #{m5_forward_pallas.1} parent=71 // pred_region
          %s3743 = sand.u32 %s270, 1
          %s3744 = scalar_lea.sflag [#allocation7], %s3743
          %s3745 = sand.u32 %s270, 1
          %s3746 = scalar_lea.vmem [#allocation6], %s3745
          %3747 = dma.done %s3744, 16
        $region76: #{m5_forward_pallas.1} parent=71 // pred_fallthru
          _
      $region72: #{m5_forward_pallas.1} parent=5 // pred_fallthru
        _
    $region6: #{m5_forward_pallas.1} parent=1 // loop_footer
      %s24 = sadd.s32 1, %s20
    $region7: #{m5_forward_pallas.1} parent=1 // loop_footer_branch
      %19 = sbr.rel target = $region3
    $region8: #{m5_forward_pallas.1} parent=1 // loop_exit
      _
    %3748 = vsyncpa [#allocation7], 1
    %s3749 = scalar_lea.sflag [#allocation7], 1
    %3750 = vsyncpa %s3749, 1

</llo_original>
